<compile_context>
chip_gen: v7x
topology: tpu7x:2x2x1
jax: 0.10.0
libtpu: 0.0.40
codegen_flags: <defaults>
</compile_context>

<pallas_src>
import functools

import jax
import jax.numpy as jnp
import numpy as np
from jax.experimental import pallas as pl
from jax.experimental.pallas import tpu as pltpu


# ------------------------------ Pallas kernel ------------------------------ #

def convnet_kernel(x_ref, w1k_ref, b1p_ref, w2k_ref, b2p_ref,
                   w1pk_ref, fb1_ref, fw2_ref, fb2_ref, fw3_ref, fb3_ref,
                   out_ref, *, block_b):
    """Fused LeNet forward for a block of `block_b` images.

    x_ref   : (32, B, 128) bf16  input rows; [h, n, w*3 + c] (lanes 96..127 zero)
    w1k_ref : (640, 256)   bf16  conv1 K-packed block-Toeplitz: row = i*128 + (w*3+c),
                                 col = b*128 + pw*6 + co        (i = conv kernel row)
    b1p_ref : (1, 128)     f32   conv1 bias replicated over the pooled-lane pattern
    w2k_ref : (640, 256)   bf16  conv2 K-packed block-Toeplitz: row = i*128 + (pw*6+c),
                                 col = b2*128 + pw2*16 + co2
    b2p_ref : (1, 128)     f32
    w1pk_ref: (640, 128)   f32   fc1 weight, torch (C,H,W)-flatten folded in,
                                 row = ph2*128 + (pw2*16 + co2), cols padded 120->128
    fb1/fw2/fb2/fw3/fb3    f32   FC biases / weights, zero-padded to 128 lanes
    out_ref : (B, 128)     f32   logits in lanes 0..9, zeros elsewhere (lane-dense)
    """
    f32 = jnp.float32
    B = block_b
    x = x_ref[...]                                                     # (32, B, 128)

    # ---- conv1 + bias + 2x2 maxpool (K packed over the 5 kernel rows) ---- #
    xk = jnp.concatenate([x[i:i + 28] for i in range(5)], axis=-1)     # (28, B, 640)
    acc = jnp.dot(xk.reshape(28 * B, 640), w1k_ref[...],
                  preferred_element_type=f32)                          # (28B, 256)
    acc = acc.reshape(14, 2 * B, 256)                                  # [ph, a*B+n, :]
    rmax = jnp.maximum(acc[:, :B], acc[:, B:])                         # pool over rows
    p1 = (jnp.maximum(rmax[..., :128], rmax[..., 128:])                # pool over cols
          + b1p_ref[...].reshape(1, 1, 128))                           # (14, B, 128)
    # p1[ph, n, pw*6 + co], lanes 84..127 stay zero

    # ---- conv2 + bias + 2x2 maxpool ---- #
    p1b = p1.astype(jnp.bfloat16)
    pk = jnp.concatenate([p1b[i:i + 10] for i in range(5)], axis=-1)   # (10, B, 640)
    acc2 = jnp.dot(pk.reshape(10 * B, 640), w2k_ref[...],
                   preferred_element_type=f32)                         # (10B, 256)
    acc2 = acc2.reshape(5, 2 * B, 256)
    rmax2 = jnp.maximum(acc2[:, :B], acc2[:, B:])
    p2 = (jnp.maximum(rmax2[..., :128], rmax2[..., 128:])
          + b2p_ref[...].reshape(1, 1, 128))                           # (5, B, 128)
    # p2[ph2, n, pw2*16 + co2], lanes 80..127 stay zero

    # ---- fc1 / fc2 / fc3 (tiny MAC count; stays f32) ---- #
    p2k = jnp.concatenate([p2[i] for i in range(5)], axis=-1)          # (B, 640)
    h = jnp.maximum(jnp.dot(p2k, w1pk_ref[...], preferred_element_type=f32)
                    + fb1_ref[...], 0.0)                               # (B, 128)
    h = jnp.maximum(jnp.dot(h, fw2_ref[...], preferred_element_type=f32)
                    + fb2_ref[...], 0.0)                               # (B, 128)
    out_ref[...] = (jnp.dot(h, fw3_ref[...], preferred_element_type=f32)
                    + fb3_ref[...])                                    # (B, 128)


# ------------------------ constant operand builders ------------------------ #

def _conv1_toeplitz_packed(w1):
    """(5,5,3,6) HWIO -> (640,256) bf16; row = i*128 + (w*3+c), col = b*128+pw*6+co."""
    R, C = np.meshgrid(np.arange(128), np.arange(256), indexing="ij")
    w, c = R // 3, R % 3
    b, rem = C // 128, C % 128
    pw, co = rem // 6, rem % 6
    j = w - (2 * pw + b)                                  # conv kernel column
    valid = (R < 96) & (rem < 84) & (j >= 0) & (j < 5)
    vals = w1[:, np.clip(j, 0, 4), c, co]                 # (5, 128, 256); axis 0 = kernel row
    vals = jnp.where(valid[None], vals, 0.0)
    return vals.reshape(640, 256).astype(jnp.bfloat16)


def _conv2_toeplitz_packed(w2):
    """(5,5,6,16) HWIO -> (640,256) bf16; row = i*128 + (pw*6+c), col = b2*128+pw2*16+co2."""
    R, C = np.meshgrid(np.arange(128), np.arange(256), indexing="ij")
    pw, c = R // 6, R % 6
    b2, rem = C // 128, C % 128
    pw2, co2 = rem // 16, rem % 16
    j = pw - (2 * pw2 + b2)
    valid = (R < 84) & (rem < 80) & (j >= 0) & (j < 5)
    vals = w2[:, np.clip(j, 0, 4), c, co2]
    vals = jnp.where(valid[None], vals, 0.0)
    return vals.reshape(640, 256).astype(jnp.bfloat16)


def _bias_pattern(bias, group, used):
    """(Cout,) -> (1,128) f32: lane = k*group + co pattern, zero on padding lanes."""
    lane = np.arange(128)
    vals = bias[lane % group]
    return jnp.where(lane < used, vals, 0.0).reshape(1, 128).astype(jnp.float32)


def _fc1_packed(fc1_w):
    """(400,120) -> (640,128) f32: row ph2*128 + (pw2*16+co2) = fc1_w[co2*25+ph2*5+pw2]."""
    lane = np.arange(128)
    pw2, co2 = lane // 16, lane % 16
    ph2 = np.arange(5)[:, None]
    flat = co2[None, :] * 25 + ph2 * 5 + pw2[None, :]     # (5, 128)
    vals = fc1_w[np.clip(flat, 0, 399), :]                # (5, 128, 120)
    vals = jnp.where((lane < 80)[None, :, None], vals, 0.0)
    return jnp.pad(vals.reshape(640, 120), ((0, 0), (0, 8))).astype(jnp.float32)


def _pad_to(a, rows, cols):
    return jnp.pad(a, ((0, rows - a.shape[0]),
                       (0, cols - a.shape[1]))).astype(jnp.float32)


# --------------------------------- wrapper --------------------------------- #

def _pick_block(n, requested):
    """B: multiple of 16 (bf16 sublane packing), <= requested, <= ceil(N/16)*16, and
    when N allows, <= N/2 so the 'parallel' grid keeps >= 2 steps (v7x has 2 TCs)."""
    b = max(16, (requested // 16) * 16)
    b = min(b, max(16, -(-n // 16) * 16))
    if n >= 32:
        b = min(b, max(16, (n // 2) // 16 * 16))
    return b


def convnet_forward(x_nchw, p, *, block_images=32):
    N = x_nchw.shape[0]
    B = _pick_block(N, block_images)
    n_pad = -(-N // B) * B                      # pad N up (old B=N fallback removed)

    # NCHW -> (32, Npad, 128) bf16 rows: [h, n, w*3 + c], lanes zero-padded 96 -> 128.
    x_rows = jnp.transpose(x_nchw, (0, 2, 3, 1)).reshape(N, 32, 96)
    x_rows = jnp.pad(x_rows, ((0, n_pad - N), (0, 0), (0, 32)))
    x3 = jnp.transpose(x_rows, (1, 0, 2)).astype(jnp.bfloat16)        # (32, Npad, 128)

    w1k = _conv1_toeplitz_packed(p["conv1_w"])
    b1p = _bias_pattern(p["conv1_b"], 6, 84)
    w2k = _conv2_toeplitz_packed(p["conv2_w"])
    b2p = _bias_pattern(p["conv2_b"], 16, 80)
    w1pk = _fc1_packed(p["fc1_w"])
    fb1 = _pad_to(p["fc1_b"].reshape(1, -1), 1, 128)
    fw2 = _pad_to(p["fc2_w"], 128, 128)
    fb2 = _pad_to(p["fc2_b"].reshape(1, -1), 1, 128)
    fw3 = _pad_to(p["fc3_w"], 128, 128)
    fb3 = _pad_to(p["fc3_b"].reshape(1, -1), 1, 128)

    def const(*shape):
        return pl.BlockSpec(shape, lambda g: (0,) * len(shape))

    out = pl.pallas_call(
        functools.partial(convnet_kernel, block_b=B),
        out_shape=jax.ShapeDtypeStruct((n_pad, 128), jnp.float32),
        grid=(n_pad // B,),
        in_specs=[
            pl.BlockSpec((32, B, 128), lambda g: (0, g, 0)),  # input rows, blocked by image
            const(640, 256),                                  # conv1 K-packed Toeplitz (bf16)
            const(1, 128),                                    # conv1 bias pattern
            const(640, 256),                                  # conv2 K-packed Toeplitz (bf16)
            const(1, 128),                                    # conv2 bias pattern
            const(640, 128),                                  # fc1 weight (flatten folded)
            const(1, 128),                                    # fc1 bias (padded)
            const(128, 128),                                  # fc2 weight (padded)
            const(1, 128),                                    # fc2 bias (padded)
            const(128, 128),                                  # fc3 weight (padded)
            const(1, 128),                                    # fc3 bias (padded)
        ],
        out_specs=pl.BlockSpec((B, 128), lambda g: (g, 0)),   # lane-dense logits block
        compiler_params=pltpu.CompilerParams(
            dimension_semantics=("parallel",),
            vmem_limit_bytes=32 * 1024 * 1024),
    )(x3, w1k, b1p, w2k, b2p, w1pk, fb1, fw2, fb2, fw3, fb3)
    return out[:N, :10]


# ------------------------- reference & parameters -------------------------- #

def reference_forward(x_nchw, p):
    x = jnp.transpose(x_nchw, (0, 2, 3, 1))

    def conv_pool(x, w, b):
        y = jax.lax.conv_general_dilated(
            x, w, (1, 1), "VALID",
            dimension_numbers=("NHWC", "HWIO", "NHWC")) + b
        return jax.lax.reduce_window(
            y, -jnp.inf, jax.lax.max, (1, 2, 2, 1), (1, 2, 2, 1), "VALID")

    x = conv_pool(x, p["conv1_w"], p["conv1_b"])
    x = conv_pool(x, p["conv2_w"], p["conv2_b"])
    N = x.shape[0]
    x = jnp.transpose(x, (0, 3, 1, 2)).reshape(N, 16 * 5 * 5)   # torch .view order (C,H,W)
    x = jnp.maximum(x @ p["fc1_w"] + p["fc1_b"], 0.0)
    x = jnp.maximum(x @ p["fc2_w"] + p["fc2_b"], 0.0)
    return x @ p["fc3_w"] + p["fc3_b"]


def init_params(key):
    ks = jax.random.split(key, 10)

    def w(k, shape, fan_in):
        return (jax.random.normal(k, shape, jnp.float32) / jnp.sqrt(fan_in)).astype(jnp.float32)

    return {
        # conv weights stored HWIO (kh, kw, cin, cout)
        "conv1_w": w(ks[0], (5, 5, 3, 6), 5 * 5 * 3),
        "conv1_b": w(ks[1], (6,), 5 * 5 * 3),
        "conv2_w": w(ks[2], (5, 5, 6, 16), 5 * 5 * 6),
        "conv2_b": w(ks[3], (16,), 5 * 5 * 6),
        # fc weights stored (in, out)
        "fc1_w": w(ks[4], (400, 120), 400),
        "fc1_b": w(ks[5], (120,), 400),
        "fc2_w": w(ks[6], (120, 84), 120),
        "fc2_b": w(ks[7], (84,), 120),
        "fc3_w": w(ks[8], (84, 10), 84),
        "fc3_b": w(ks[9], (10,), 84),
    }


if __name__ == "__main__":
    key = jax.random.PRNGKey(0)
    pkey, xkey = jax.random.split(key)
    params = init_params(pkey)

    # fc1's 16*5*5 inputs imply 3x32x32 images.  N=64 -> two "parallel" grid steps
    # of 32 images each (keeps both v7x TensorCores busy; single-TC chips just loop).
    N = 64
    x = jax.random.normal(xkey, (N, 3, 32, 32), jnp.float32)

    out = jax.block_until_ready(jax.jit(convnet_forward)(x, params))
    assert out.shape == (N, 10), out.shape

    ref = jax.block_until_ready(reference_forward(x, params))
    # Conv matmuls use bf16 inputs with f32 accumulation; 2e-2 covers the bf16
    # input-rounding error with a large margin (typical max |err| is ~1e-3).
    assert jnp.allclose(out, ref, rtol=2e-2, atol=2e-2), float(jnp.max(jnp.abs(out - ref)))

    print("KERNEL_OK")
</pallas_src>

<mosaic_0001>
module attributes {stable_mosaic.version = 11 : i64} {
  func.func @convnet_kernel(%arg0: i32, %arg1: memref<32x32x128xbf16, #tpu.memory_space<vmem>>, %arg2: memref<640x256xbf16, #tpu.memory_space<vmem>>, %arg3: memref<1x128xf32, #tpu.memory_space<vmem>>, %arg4: memref<640x256xbf16, #tpu.memory_space<vmem>>, %arg5: memref<1x128xf32, #tpu.memory_space<vmem>>, %arg6: memref<640x128xf32, #tpu.memory_space<vmem>>, %arg7: memref<1x128xf32, #tpu.memory_space<vmem>>, %arg8: memref<128x128xf32, #tpu.memory_space<vmem>>, %arg9: memref<1x128xf32, #tpu.memory_space<vmem>>, %arg10: memref<128x128xf32, #tpu.memory_space<vmem>>, %arg11: memref<1x128xf32, #tpu.memory_space<vmem>>, %arg12: memref<32x128xf32, #tpu.memory_space<vmem>>) attributes {dimension_semantics = [#tpu.dimension_semantics<parallel>], iteration_bounds = array<i64: 2>, scalar_prefetch = 0 : i64, scratch_operands = 0 : i64, tpu.core_type = #tpu.core_type<tc>, window_params = [{transform_indices = @transform_0, window_bounds = array<i64: 32, 32, 128>}, {pipeline_mode = #tpu.pipeline_mode<synchronous>, transform_indices = @transform_1, window_bounds = array<i64: 640, 256>}, {pipeline_mode = #tpu.pipeline_mode<synchronous>, transform_indices = @transform_2, window_bounds = array<i64: 1, 128>}, {pipeline_mode = #tpu.pipeline_mode<synchronous>, transform_indices = @transform_3, window_bounds = array<i64: 640, 256>}, {pipeline_mode = #tpu.pipeline_mode<synchronous>, transform_indices = @transform_4, window_bounds = array<i64: 1, 128>}, {pipeline_mode = #tpu.pipeline_mode<synchronous>, transform_indices = @transform_5, window_bounds = array<i64: 640, 128>}, {pipeline_mode = #tpu.pipeline_mode<synchronous>, transform_indices = @transform_6, window_bounds = array<i64: 1, 128>}, {pipeline_mode = #tpu.pipeline_mode<synchronous>, transform_indices = @transform_7, window_bounds = array<i64: 128, 128>}, {pipeline_mode = #tpu.pipeline_mode<synchronous>, transform_indices = @transform_8, window_bounds = array<i64: 1, 128>}, {pipeline_mode = #tpu.pipeline_mode<synchronous>, transform_indices = @transform_9, window_bounds = array<i64: 128, 128>}, {pipeline_mode = #tpu.pipeline_mode<synchronous>, transform_indices = @transform_10, window_bounds = array<i64: 1, 128>}, {transform_indices = @transform_11, window_bounds = array<i64: 32, 128>}]} {
    %c0 = arith.constant 0 : index
    %c0_0 = arith.constant 0 : index
    %c0_1 = arith.constant 0 : index
    %0 = vector.load %arg1[%c0, %c0_0, %c0_1] : memref<32x32x128xbf16, #tpu.memory_space<vmem>>, vector<32x32x128xbf16>
    %1 = vector.extract_strided_slice %0 {offsets = [0, 0, 0], sizes = [28, 32, 128], strides = [1, 1, 1]} : vector<32x32x128xbf16> to vector<28x32x128xbf16>
    %2 = vector.extract_strided_slice %0 {offsets = [1, 0, 0], sizes = [28, 32, 128], strides = [1, 1, 1]} : vector<32x32x128xbf16> to vector<28x32x128xbf16>
    %3 = vector.extract_strided_slice %0 {offsets = [2, 0, 0], sizes = [28, 32, 128], strides = [1, 1, 1]} : vector<32x32x128xbf16> to vector<28x32x128xbf16>
    %4 = vector.extract_strided_slice %0 {offsets = [3, 0, 0], sizes = [28, 32, 128], strides = [1, 1, 1]} : vector<32x32x128xbf16> to vector<28x32x128xbf16>
    %5 = vector.extract_strided_slice %0 {offsets = [4, 0, 0], sizes = [28, 32, 128], strides = [1, 1, 1]} : vector<32x32x128xbf16> to vector<28x32x128xbf16>
    %6 = tpu.concatenate %1, %2, %3, %4, %5 in 2 : vector<28x32x128xbf16>, vector<28x32x128xbf16>, vector<28x32x128xbf16>, vector<28x32x128xbf16>, vector<28x32x128xbf16> -> vector<28x32x640xbf16>
    %7 = vector.shape_cast %6 : vector<28x32x640xbf16> to vector<896x640xbf16>
    %c0_2 = arith.constant 0 : index
    %c0_3 = arith.constant 0 : index
    %8 = vector.load %arg2[%c0_2, %c0_3] : memref<640x256xbf16, #tpu.memory_space<vmem>>, vector<640x256xbf16>
    %cst = arith.constant dense<0.000000e+00> : vector<896x256xf32>
    %9 = tpu.matmul %7, %8, %cst {dimension_numbers = #tpu.dot_dimension_numbers<[1], [0], [0], [1], [0, 0, 1, 1], [], []>} : vector<896x640xbf16>, vector<640x256xbf16>, vector<896x256xf32> -> vector<896x256xf32>
    %10 = vector.shape_cast %9 : vector<896x256xf32> to vector<14x64x256xf32>
    %11 = vector.extract_strided_slice %10 {offsets = [0, 0, 0], sizes = [14, 32, 256], strides = [1, 1, 1]} : vector<14x64x256xf32> to vector<14x32x256xf32>
    %12 = vector.extract_strided_slice %10 {offsets = [0, 32, 0], sizes = [14, 32, 256], strides = [1, 1, 1]} : vector<14x64x256xf32> to vector<14x32x256xf32>
    %13 = arith.maximumf %11, %12 : vector<14x32x256xf32>
    %14 = vector.extract_strided_slice %13 {offsets = [0, 0, 0], sizes = [14, 32, 128], strides = [1, 1, 1]} : vector<14x32x256xf32> to vector<14x32x128xf32>
    %15 = vector.extract_strided_slice %13 {offsets = [0, 0, 128], sizes = [14, 32, 128], strides = [1, 1, 1]} : vector<14x32x256xf32> to vector<14x32x128xf32>
    %16 = arith.maximumf %14, %15 : vector<14x32x128xf32>
    %c0_4 = arith.constant 0 : index
    %c0_5 = arith.constant 0 : index
    %17 = vector.load %arg3[%c0_4, %c0_5] : memref<1x128xf32, #tpu.memory_space<vmem>>, vector<1x128xf32>
    %18 = vector.shape_cast %17 : vector<1x128xf32> to vector<1x1x128xf32>
    %19 = vector.broadcast %18 : vector<1x1x128xf32> to vector<14x32x128xf32>
    %20 = arith.addf %16, %19 : vector<14x32x128xf32>
    %21 = arith.truncf %20 : vector<14x32x128xf32> to vector<14x32x128xbf16>
    %22 = vector.extract_strided_slice %21 {offsets = [0, 0, 0], sizes = [10, 32, 128], strides = [1, 1, 1]} : vector<14x32x128xbf16> to vector<10x32x128xbf16>
    %23 = vector.extract_strided_slice %21 {offsets = [1, 0, 0], sizes = [10, 32, 128], strides = [1, 1, 1]} : vector<14x32x128xbf16> to vector<10x32x128xbf16>
    %24 = vector.extract_strided_slice %21 {offsets = [2, 0, 0], sizes = [10, 32, 128], strides = [1, 1, 1]} : vector<14x32x128xbf16> to vector<10x32x128xbf16>
    %25 = vector.extract_strided_slice %21 {offsets = [3, 0, 0], sizes = [10, 32, 128], strides = [1, 1, 1]} : vector<14x32x128xbf16> to vector<10x32x128xbf16>
    %26 = vector.extract_strided_slice %21 {offsets = [4, 0, 0], sizes = [10, 32, 128], strides = [1, 1, 1]} : vector<14x32x128xbf16> to vector<10x32x128xbf16>
    %27 = tpu.concatenate %22, %23, %24, %25, %26 in 2 : vector<10x32x128xbf16>, vector<10x32x128xbf16>, vector<10x32x128xbf16>, vector<10x32x128xbf16>, vector<10x32x128xbf16> -> vector<10x32x640xbf16>
    %28 = vector.shape_cast %27 : vector<10x32x640xbf16> to vector<320x640xbf16>
    %c0_6 = arith.constant 0 : index
    %c0_7 = arith.constant 0 : index
    %29 = vector.load %arg4[%c0_6, %c0_7] : memref<640x256xbf16, #tpu.memory_space<vmem>>, vector<640x256xbf16>
    %cst_8 = arith.constant dense<0.000000e+00> : vector<320x256xf32>
    %30 = tpu.matmul %28, %29, %cst_8 {dimension_numbers = #tpu.dot_dimension_numbers<[1], [0], [0], [1], [0, 0, 1, 1], [], []>} : vector<320x640xbf16>, vector<640x256xbf16>, vector<320x256xf32> -> vector<320x256xf32>
    %31 = vector.shape_cast %30 : vector<320x256xf32> to vector<5x64x256xf32>
    %32 = vector.extract_strided_slice %31 {offsets = [0, 0, 0], sizes = [5, 32, 256], strides = [1, 1, 1]} : vector<5x64x256xf32> to vector<5x32x256xf32>
    %33 = vector.extract_strided_slice %31 {offsets = [0, 32, 0], sizes = [5, 32, 256], strides = [1, 1, 1]} : vector<5x64x256xf32> to vector<5x32x256xf32>
    %34 = arith.maximumf %32, %33 : vector<5x32x256xf32>
    %35 = vector.extract_strided_slice %34 {offsets = [0, 0, 0], sizes = [5, 32, 128], strides = [1, 1, 1]} : vector<5x32x256xf32> to vector<5x32x128xf32>
    %36 = vector.extract_strided_slice %34 {offsets = [0, 0, 128], sizes = [5, 32, 128], strides = [1, 1, 1]} : vector<5x32x256xf32> to vector<5x32x128xf32>
    %37 = arith.maximumf %35, %36 : vector<5x32x128xf32>
    %c0_9 = arith.constant 0 : index
    %c0_10 = arith.constant 0 : index
    %38 = vector.load %arg5[%c0_9, %c0_10] : memref<1x128xf32, #tpu.memory_space<vmem>>, vector<1x128xf32>
    %39 = vector.shape_cast %38 : vector<1x128xf32> to vector<1x1x128xf32>
    %40 = vector.broadcast %39 : vector<1x1x128xf32> to vector<5x32x128xf32>
    %41 = arith.addf %37, %40 : vector<5x32x128xf32>
    %42 = vector.extract_strided_slice %41 {offsets = [0, 0, 0], sizes = [1, 32, 128], strides = [1, 1, 1]} : vector<5x32x128xf32> to vector<1x32x128xf32>
    %43 = vector.shape_cast %42 : vector<1x32x128xf32> to vector<32x128xf32>
    %44 = vector.extract_strided_slice %41 {offsets = [1, 0, 0], sizes = [1, 32, 128], strides = [1, 1, 1]} : vector<5x32x128xf32> to vector<1x32x128xf32>
    %45 = vector.shape_cast %44 : vector<1x32x128xf32> to vector<32x128xf32>
    %46 = vector.extract_strided_slice %41 {offsets = [2, 0, 0], sizes = [1, 32, 128], strides = [1, 1, 1]} : vector<5x32x128xf32> to vector<1x32x128xf32>
    %47 = vector.shape_cast %46 : vector<1x32x128xf32> to vector<32x128xf32>
    %48 = vector.extract_strided_slice %41 {offsets = [3, 0, 0], sizes = [1, 32, 128], strides = [1, 1, 1]} : vector<5x32x128xf32> to vector<1x32x128xf32>
    %49 = vector.shape_cast %48 : vector<1x32x128xf32> to vector<32x128xf32>
    %50 = vector.extract_strided_slice %41 {offsets = [4, 0, 0], sizes = [1, 32, 128], strides = [1, 1, 1]} : vector<5x32x128xf32> to vector<1x32x128xf32>
    %51 = vector.shape_cast %50 : vector<1x32x128xf32> to vector<32x128xf32>
    %52 = tpu.concatenate %43, %45, %47, %49, %51 in 1 : vector<32x128xf32>, vector<32x128xf32>, vector<32x128xf32>, vector<32x128xf32>, vector<32x128xf32> -> vector<32x640xf32>
    %c0_11 = arith.constant 0 : index
    %c0_12 = arith.constant 0 : index
    %53 = vector.load %arg6[%c0_11, %c0_12] : memref<640x128xf32, #tpu.memory_space<vmem>>, vector<640x128xf32>
    %cst_13 = arith.constant dense<0.000000e+00> : vector<32x128xf32>
    %54 = tpu.matmul %52, %53, %cst_13 {dimension_numbers = #tpu.dot_dimension_numbers<[1], [0], [0], [1], [0, 0, 1, 1], [], []>} : vector<32x640xf32>, vector<640x128xf32>, vector<32x128xf32> -> vector<32x128xf32>
    %c0_14 = arith.constant 0 : index
    %c0_15 = arith.constant 0 : index
    %55 = vector.load %arg7[%c0_14, %c0_15] : memref<1x128xf32, #tpu.memory_space<vmem>>, vector<1x128xf32>
    %56 = vector.broadcast %55 : vector<1x128xf32> to vector<32x128xf32>
    %57 = arith.addf %54, %56 : vector<32x128xf32>
    %cst_16 = arith.constant 0.000000e+00 : f32
    %58 = vector.broadcast %cst_16 : f32 to vector<32x128xf32>
    %59 = arith.maximumf %57, %58 : vector<32x128xf32>
    %c0_17 = arith.constant 0 : index
    %c0_18 = arith.constant 0 : index
    %60 = vector.load %arg8[%c0_17, %c0_18] : memref<128x128xf32, #tpu.memory_space<vmem>>, vector<128x128xf32>
    %cst_19 = arith.constant dense<0.000000e+00> : vector<32x128xf32>
    %61 = tpu.matmul %59, %60, %cst_19 {dimension_numbers = #tpu.dot_dimension_numbers<[1], [0], [0], [1], [0, 0, 1, 1], [], []>} : vector<32x128xf32>, vector<128x128xf32>, vector<32x128xf32> -> vector<32x128xf32>
    %c0_20 = arith.constant 0 : index
    %c0_21 = arith.constant 0 : index
    %62 = vector.load %arg9[%c0_20, %c0_21] : memref<1x128xf32, #tpu.memory_space<vmem>>, vector<1x128xf32>
    %63 = vector.broadcast %62 : vector<1x128xf32> to vector<32x128xf32>
    %64 = arith.addf %61, %63 : vector<32x128xf32>
    %cst_22 = arith.constant 0.000000e+00 : f32
    %65 = vector.broadcast %cst_22 : f32 to vector<32x128xf32>
    %66 = arith.maximumf %64, %65 : vector<32x128xf32>
    %c0_23 = arith.constant 0 : index
    %c0_24 = arith.constant 0 : index
    %67 = vector.load %arg10[%c0_23, %c0_24] : memref<128x128xf32, #tpu.memory_space<vmem>>, vector<128x128xf32>
    %cst_25 = arith.constant dense<0.000000e+00> : vector<32x128xf32>
    %68 = tpu.matmul %66, %67, %cst_25 {dimension_numbers = #tpu.dot_dimension_numbers<[1], [0], [0], [1], [0, 0, 1, 1], [], []>} : vector<32x128xf32>, vector<128x128xf32>, vector<32x128xf32> -> vector<32x128xf32>
    %c0_26 = arith.constant 0 : index
    %c0_27 = arith.constant 0 : index
    %69 = vector.load %arg11[%c0_26, %c0_27] : memref<1x128xf32, #tpu.memory_space<vmem>>, vector<1x128xf32>
    %70 = vector.broadcast %69 : vector<1x128xf32> to vector<32x128xf32>
    %71 = arith.addf %68, %70 : vector<32x128xf32>
    %c0_28 = arith.constant 0 : index
    %c0_29 = arith.constant 0 : index
    %72 = vector.load %arg12[%c0_28, %c0_29] : memref<32x128xf32, #tpu.memory_space<vmem>>, vector<32x128xf32>
    tpu.vector_store %arg12[%c0_28, %c0_29], %71 {strides = array<i32>} : memref<32x128xf32, #tpu.memory_space<vmem>>, vector<32x128xf32>,
    return
  }
  func.func @transform_0(%arg0: i32) -> (i32, i32, i32) {
    %c0_i32 = arith.constant 0 : i32
    %c0_i32_0 = arith.constant 0 : i32
    %c0_i32_1 = arith.constant 0 : i32
    return %c0_i32, %arg0, %c0_i32_0 : i32, i32, i32
  }
  func.func @transform_1(%arg0: i32) -> (i32, i32) {
    %c0_i32 = arith.constant 0 : i32
    %c0_i32_0 = arith.constant 0 : i32
    %c0_i32_1 = arith.constant 0 : i32
    return %c0_i32, %c0_i32_0 : i32, i32
  }
  func.func @transform_2(%arg0: i32) -> (i32, i32) {
    %c0_i32 = arith.constant 0 : i32
    %c0_i32_0 = arith.constant 0 : i32
    %c0_i32_1 = arith.constant 0 : i32
    return %c0_i32, %c0_i32_0 : i32, i32
  }
  func.func @transform_3(%arg0: i32) -> (i32, i32) {
    %c0_i32 = arith.constant 0 : i32
    %c0_i32_0 = arith.constant 0 : i32
    %c0_i32_1 = arith.constant 0 : i32
    return %c0_i32, %c0_i32_0 : i32, i32
  }
  func.func @transform_4(%arg0: i32) -> (i32, i32) {
    %c0_i32 = arith.constant 0 : i32
    %c0_i32_0 = arith.constant 0 : i32
    %c0_i32_1 = arith.constant 0 : i32
    return %c0_i32, %c0_i32_0 : i32, i32
  }
  func.func @transform_5(%arg0: i32) -> (i32, i32) {
    %c0_i32 = arith.constant 0 : i32
    %c0_i32_0 = arith.constant 0 : i32
    %c0_i32_1 = arith.constant 0 : i32
    return %c0_i32, %c0_i32_0 : i32, i32
  }
  func.func @transform_6(%arg0: i32) -> (i32, i32) {
    %c0_i32 = arith.constant 0 : i32
    %c0_i32_0 = arith.constant 0 : i32
    %c0_i32_1 = arith.constant 0 : i32
    return %c0_i32, %c0_i32_0 : i32, i32
  }
  func.func @transform_7(%arg0: i32) -> (i32, i32) {
    %c0_i32 = arith.constant 0 : i32
    %c0_i32_0 = arith.constant 0 : i32
    %c0_i32_1 = arith.constant 0 : i32
    return %c0_i32, %c0_i32_0 : i32, i32
  }
  func.func @transform_8(%arg0: i32) -> (i32, i32) {
    %c0_i32 = arith.constant 0 : i32
    %c0_i32_0 = arith.constant 0 : i32
    %c0_i32_1 = arith.constant 0 : i32
    return %c0_i32, %c0_i32_0 : i32, i32
  }
  func.func @transform_9(%arg0: i32) -> (i32, i32) {
    %c0_i32 = arith.constant 0 : i32
    %c0_i32_0 = arith.constant 0 : i32
    %c0_i32_1 = arith.constant 0 : i32
    return %c0_i32, %c0_i32_0 : i32, i32
  }
  func.func @transform_10(%arg0: i32) -> (i32, i32) {
    %c0_i32 = arith.constant 0 : i32
    %c0_i32_0 = arith.constant 0 : i32
    %c0_i32_1 = arith.constant 0 : i32
    return %c0_i32, %c0_i32_0 : i32, i32
  }
  func.func @transform_11(%arg0: i32) -> (i32, i32) {
    %c0_i32 = arith.constant 0 : i32
    %c0_i32_0 = arith.constant 0 : i32
    return %arg0, %c0_i32 : i32, i32
  }
}

</mosaic_0001>

<llo_original>
// kernel: convnet_forward.1
$region0: #{convnet_forward.1}
  #allocation0 [shape = 'u32[]', space=smem, size = 0x4, offset = 0x4, fixed_abs, tag = 'smem constant byte address 0x4 - core index']
  #allocation1 [shape = 'u32[144,128]{1,0:T(1,128)}', space=vmem, size = 0x12000, scoped, tag = 'internal scratch']
  %s0 = inlined_call_operand.vmem [shape: bf16[32,64,128], index: 0, kind: input, shape index: {}]
  %s1 = inlined_call_operand.vmem [shape: bf16[640,256], index: 1, kind: input, shape index: {}]
  %s2 = inlined_call_operand.vmem [shape: f32[1,128], index: 2, kind: input, shape index: {}]
  %s3 = inlined_call_operand.vmem [shape: bf16[640,256], index: 3, kind: input, shape index: {}]
  %s4 = inlined_call_operand.vmem [shape: f32[1,128], index: 4, kind: input, shape index: {}]
  %s5 = inlined_call_operand.vmem [shape: f32[640,128], index: 5, kind: input, shape index: {}]
  %s6 = inlined_call_operand.vmem [shape: f32[1,128], index: 6, kind: input, shape index: {}]
  %s7 = inlined_call_operand.vmem [shape: f32[128,128], index: 7, kind: input, shape index: {}]
  %s8 = inlined_call_operand.vmem [shape: f32[1,128], index: 8, kind: input, shape index: {}]
  %s9 = inlined_call_operand.vmem [shape: f32[128,128], index: 9, kind: input, shape index: {}]
  %s10 = inlined_call_operand.vmem [shape: f32[1,128], index: 10, kind: input, shape index: {}]
  %s11 = inlined_call_operand.vmem [shape: f32[64,128], index: 11, kind: output, shape index: {}]
  %s12 = sld [smem:[#allocation0]]
  $region118: #{convnet_forward.1} parent=0
    _
  %s14 = ssub.s32 1, %s12
  %s15 = scalar_select 0, %s14, %s12
  $region1: #{convnet_forward.1} parent=0
    #allocation2 [shape = 'u8[524288]{0}', space=vmem, size = 0x80000, scoped, tag = 'input window, operand 0']
    loop: start=0, step=1, limit=4
    $region2: #{convnet_forward.1} parent=1 // loop_pre_header
      _
    $region3: #{convnet_forward.1} parent=1 // loop_header
      %s17 = sphi 0, %s21
      %p18 = scmp.ge.s32.totalorder %s17, 4
      %s27 = sphi 0, %s29
      %s30 = sphi 0, %s27
      %s31 = sphi 0, %s30
      %s47 = sphi 0, %s31
      %s51 = sphi 0, %s51
      %s53 = sphi 0, %s51
      %s54 = sphi 0, %s53
      %s68 = sphi 0, %s54
      %s72 = sphi 0, %s72
      %s74 = sphi 0, %s72
      %s75 = sphi 0, %s74
      %s89 = sphi 0, %s75
      %s93 = sphi 0, %s93
      %s95 = sphi 0, %s93
      %s96 = sphi 0, %s95
      %s110 = sphi 0, %s96
      %s114 = sphi 0, %s114
      %s116 = sphi 0, %s114
      %s117 = sphi 0, %s116
      %s131 = sphi 0, %s117
      %s135 = sphi 0, %s135
      %s137 = sphi 0, %s135
      %s138 = sphi 0, %s137
      %s152 = sphi 0, %s138
      %s156 = sphi 0, %s156
      %s158 = sphi 0, %s156
      %s159 = sphi 0, %s158
      %s173 = sphi 0, %s159
      %s177 = sphi 0, %s177
      %s179 = sphi 0, %s177
      %s180 = sphi 0, %s179
      %s194 = sphi 0, %s180
      %s198 = sphi 0, %s198
      %s200 = sphi 0, %s198
      %s201 = sphi 0, %s200
      %s215 = sphi 0, %s201
      %s219 = sphi 0, %s219
      %s221 = sphi 0, %s219
      %s222 = sphi 0, %s221
      %s236 = sphi 0, %s222
      %s240 = sphi 0, %s240
      %s242 = sphi 0, %s240
      %s243 = sphi 0, %s242
      %s257 = sphi 0, %s243
      %s263 = sphi 0, %s265
      %s266 = sphi 0, %s263
      %s267 = sphi 0, %s266
      %s283 = sphi 0, %s267
    $region4: #{convnet_forward.1} parent=1 // loop_header_branch
      %20 = sbr.rel (%p18) target = $region8
    $region5: #{convnet_forward.1} parent=1 // loop_body
      %s22 = ssub.s32 %s17, 1
      %s23 = ssub.s32 %s17, 2
      %s24 = sadd.s32 %s17, 1
      %s25 = ssub.s32 %s17, %s24
      %p26 = scmp.eq.s32.totalorder %s25, 0
      %s28 = sadd.s32 %s27, 1
      %s29 = scalar_select %p26, %s27, %s28
      %p32 = pneg %p26
      %p33 = scmp.eq.s32.totalorder %s17, 1
      %p34 = por %p32, %p33
      %p35 = scmp.ne.s32.totalorder %s27, %s30
      %p36 = scmp.eq.s32.totalorder %s17, 0
      %p37 = por %p35, %p36
      %p38 = scmp.ne.s32.totalorder %s27, %s30
      %p39 = scmp.eq.s32.totalorder %s22, 1
      %p40 = por %p38, %p39
      %p41 = scmp.ne.s32.totalorder %s30, %s31
      %p42 = scmp.eq.s32.totalorder %s22, 0
      %p43 = por %p41, %p42
      %p44 = scmp.ne.s32.totalorder %s30, %s31
      %p45 = scmp.eq.s32.totalorder %s23, 1
      %p46 = por %p44, %p45
      %p48 = scmp.ne.s32.totalorder %s31, %s47
      %p49 = scmp.eq.s32.totalorder %s23, 0
      %p50 = por %p48, %p49
      %s52 = sadd.s32 %s51, 1
      %p55 = scmp.eq.s32.totalorder %s17, 1
      %p56 = scmp.ne.s32.totalorder %s51, %s53
      %p57 = scmp.eq.s32.totalorder %s17, 0
      %p58 = por %p56, %p57
      %p59 = scmp.ne.s32.totalorder %s51, %s53
      %p60 = scmp.eq.s32.totalorder %s22, 1
      %p61 = por %p59, %p60
      %p62 = scmp.ne.s32.totalorder %s53, %s54
      %p63 = scmp.eq.s32.totalorder %s22, 0
      %p64 = por %p62, %p63
      %p65 = scmp.ne.s32.totalorder %s53, %s54
      %p66 = scmp.eq.s32.totalorder %s23, 1
      %p67 = por %p65, %p66
      %p69 = scmp.ne.s32.totalorder %s54, %s68
      %p70 = scmp.eq.s32.totalorder %s23, 0
      %p71 = por %p69, %p70
      %s73 = sadd.s32 %s72, 1
      %p76 = scmp.eq.s32.totalorder %s17, 1
      %p77 = scmp.ne.s32.totalorder %s72, %s74
      %p78 = scmp.eq.s32.totalorder %s17, 0
      %p79 = por %p77, %p78
      %p80 = scmp.ne.s32.totalorder %s72, %s74
      %p81 = scmp.eq.s32.totalorder %s22, 1
      %p82 = por %p80, %p81
      %p83 = scmp.ne.s32.totalorder %s74, %s75
      %p84 = scmp.eq.s32.totalorder %s22, 0
      %p85 = por %p83, %p84
      %p86 = scmp.ne.s32.totalorder %s74, %s75
      %p87 = scmp.eq.s32.totalorder %s23, 1
      %p88 = por %p86, %p87
      %p90 = scmp.ne.s32.totalorder %s75, %s89
      %p91 = scmp.eq.s32.totalorder %s23, 0
      %p92 = por %p90, %p91
      %s94 = sadd.s32 %s93, 1
      %p97 = scmp.eq.s32.totalorder %s17, 1
      %p98 = scmp.ne.s32.totalorder %s93, %s95
      %p99 = scmp.eq.s32.totalorder %s17, 0
      %p100 = por %p98, %p99
      %p101 = scmp.ne.s32.totalorder %s93, %s95
      %p102 = scmp.eq.s32.totalorder %s22, 1
      %p103 = por %p101, %p102
      %p104 = scmp.ne.s32.totalorder %s95, %s96
      %p105 = scmp.eq.s32.totalorder %s22, 0
      %p106 = por %p104, %p105
      %p107 = scmp.ne.s32.totalorder %s95, %s96
      %p108 = scmp.eq.s32.totalorder %s23, 1
      %p109 = por %p107, %p108
      %p111 = scmp.ne.s32.totalorder %s96, %s110
      %p112 = scmp.eq.s32.totalorder %s23, 0
      %p113 = por %p111, %p112
      %s115 = sadd.s32 %s114, 1
      %p118 = scmp.eq.s32.totalorder %s17, 1
      %p119 = scmp.ne.s32.totalorder %s114, %s116
      %p120 = scmp.eq.s32.totalorder %s17, 0
      %p121 = por %p119, %p120
      %p122 = scmp.ne.s32.totalorder %s114, %s116
      %p123 = scmp.eq.s32.totalorder %s22, 1
      %p124 = por %p122, %p123
      %p125 = scmp.ne.s32.totalorder %s116, %s117
      %p126 = scmp.eq.s32.totalorder %s22, 0
      %p127 = por %p125, %p126
      %p128 = scmp.ne.s32.totalorder %s116, %s117
      %p129 = scmp.eq.s32.totalorder %s23, 1
      %p130 = por %p128, %p129
      %p132 = scmp.ne.s32.totalorder %s117, %s131
      %p133 = scmp.eq.s32.totalorder %s23, 0
      %p134 = por %p132, %p133
      %s136 = sadd.s32 %s135, 1
      %p139 = scmp.eq.s32.totalorder %s17, 1
      %p140 = scmp.ne.s32.totalorder %s135, %s137
      %p141 = scmp.eq.s32.totalorder %s17, 0
      %p142 = por %p140, %p141
      %p143 = scmp.ne.s32.totalorder %s135, %s137
      %p144 = scmp.eq.s32.totalorder %s22, 1
      %p145 = por %p143, %p144
      %p146 = scmp.ne.s32.totalorder %s137, %s138
      %p147 = scmp.eq.s32.totalorder %s22, 0
      %p148 = por %p146, %p147
      %p149 = scmp.ne.s32.totalorder %s137, %s138
      %p150 = scmp.eq.s32.totalorder %s23, 1
      %p151 = por %p149, %p150
      %p153 = scmp.ne.s32.totalorder %s138, %s152
      %p154 = scmp.eq.s32.totalorder %s23, 0
      %p155 = por %p153, %p154
      %s157 = sadd.s32 %s156, 1
      %p160 = scmp.eq.s32.totalorder %s17, 1
      %p161 = scmp.ne.s32.totalorder %s156, %s158
      %p162 = scmp.eq.s32.totalorder %s17, 0
      %p163 = por %p161, %p162
      %p164 = scmp.ne.s32.totalorder %s156, %s158
      %p165 = scmp.eq.s32.totalorder %s22, 1
      %p166 = por %p164, %p165
      %p167 = scmp.ne.s32.totalorder %s158, %s159
      %p168 = scmp.eq.s32.totalorder %s22, 0
      %p169 = por %p167, %p168
      %p170 = scmp.ne.s32.totalorder %s158, %s159
      %p171 = scmp.eq.s32.totalorder %s23, 1
      %p172 = por %p170, %p171
      %p174 = scmp.ne.s32.totalorder %s159, %s173
      %p175 = scmp.eq.s32.totalorder %s23, 0
      %p176 = por %p174, %p175
      %s178 = sadd.s32 %s177, 1
      %p181 = scmp.eq.s32.totalorder %s17, 1
      %p182 = scmp.ne.s32.totalorder %s177, %s179
      %p183 = scmp.eq.s32.totalorder %s17, 0
      %p184 = por %p182, %p183
      %p185 = scmp.ne.s32.totalorder %s177, %s179
      %p186 = scmp.eq.s32.totalorder %s22, 1
      %p187 = por %p185, %p186
      %p188 = scmp.ne.s32.totalorder %s179, %s180
      %p189 = scmp.eq.s32.totalorder %s22, 0
      %p190 = por %p188, %p189
      %p191 = scmp.ne.s32.totalorder %s179, %s180
      %p192 = scmp.eq.s32.totalorder %s23, 1
      %p193 = por %p191, %p192
      %p195 = scmp.ne.s32.totalorder %s180, %s194
      %p196 = scmp.eq.s32.totalorder %s23, 0
      %p197 = por %p195, %p196
      %s199 = sadd.s32 %s198, 1
      %p202 = scmp.eq.s32.totalorder %s17, 1
      %p203 = scmp.ne.s32.totalorder %s198, %s200
      %p204 = scmp.eq.s32.totalorder %s17, 0
      %p205 = por %p203, %p204
      %p206 = scmp.ne.s32.totalorder %s198, %s200
      %p207 = scmp.eq.s32.totalorder %s22, 1
      %p208 = por %p206, %p207
      %p209 = scmp.ne.s32.totalorder %s200, %s201
      %p210 = scmp.eq.s32.totalorder %s22, 0
      %p211 = por %p209, %p210
      %p212 = scmp.ne.s32.totalorder %s200, %s201
      %p213 = scmp.eq.s32.totalorder %s23, 1
      %p214 = por %p212, %p213
      %p216 = scmp.ne.s32.totalorder %s201, %s215
      %p217 = scmp.eq.s32.totalorder %s23, 0
      %p218 = por %p216, %p217
      %s220 = sadd.s32 %s219, 1
      %p223 = scmp.eq.s32.totalorder %s17, 1
      %p224 = scmp.ne.s32.totalorder %s219, %s221
      %p225 = scmp.eq.s32.totalorder %s17, 0
      %p226 = por %p224, %p225
      %p227 = scmp.ne.s32.totalorder %s219, %s221
      %p228 = scmp.eq.s32.totalorder %s22, 1
      %p229 = por %p227, %p228
      %p230 = scmp.ne.s32.totalorder %s221, %s222
      %p231 = scmp.eq.s32.totalorder %s22, 0
      %p232 = por %p230, %p231
      %p233 = scmp.ne.s32.totalorder %s221, %s222
      %p234 = scmp.eq.s32.totalorder %s23, 1
      %p235 = por %p233, %p234
      %p237 = scmp.ne.s32.totalorder %s222, %s236
      %p238 = scmp.eq.s32.totalorder %s23, 0
      %p239 = por %p237, %p238
      %s241 = sadd.s32 %s240, 1
      %p244 = scmp.eq.s32.totalorder %s17, 1
      %p245 = scmp.ne.s32.totalorder %s240, %s242
      %p246 = scmp.eq.s32.totalorder %s17, 0
      %p247 = por %p245, %p246
      %p248 = scmp.ne.s32.totalorder %s240, %s242
      %p249 = scmp.eq.s32.totalorder %s22, 1
      %p250 = por %p248, %p249
      %p251 = scmp.ne.s32.totalorder %s242, %s243
      %p252 = scmp.eq.s32.totalorder %s22, 0
      %p253 = por %p251, %p252
      %p254 = scmp.ne.s32.totalorder %s242, %s243
      %p255 = scmp.eq.s32.totalorder %s23, 1
      %p256 = por %p254, %p255
      %p258 = scmp.ne.s32.totalorder %s243, %s257
      %p259 = scmp.eq.s32.totalorder %s23, 0
      %p260 = por %p258, %p259
      %s261 = ssub.s32 %s17, %s24
      %p262 = scmp.eq.s32.totalorder %s261, 0
      %s264 = sadd.s32 %s263, 1
      %s265 = scalar_select %p262, %s263, %s264
      %p268 = pneg %p262
      %p269 = scmp.eq.s32.totalorder %s17, 1
      %p270 = por %p268, %p269
      %p271 = scmp.ne.s32.totalorder %s263, %s266
      %p272 = scmp.eq.s32.totalorder %s17, 0
      %p273 = por %p271, %p272
      %p274 = scmp.ne.s32.totalorder %s263, %s266
      %p275 = scmp.eq.s32.totalorder %s22, 1
      %p276 = por %p274, %p275
      %p277 = scmp.ne.s32.totalorder %s266, %s267
      %p278 = scmp.eq.s32.totalorder %s22, 0
      %p279 = por %p277, %p278
      %p280 = scmp.ne.s32.totalorder %s266, %s267
      %p281 = scmp.eq.s32.totalorder %s23, 1
      %p282 = por %p280, %p281
      %p284 = scmp.ne.s32.totalorder %s267, %s283
      %p285 = scmp.eq.s32.totalorder %s23, 0
      %p286 = por %p284, %p285
      %p287 = scmp.le.s32.totalorder 1, %s17
      %p288 = scmp.lt.s32.totalorder %s17, 3
      %p289 = pnand %p287, %p288
      %p290 = pneg %p289
      // Predicated region
      $region9: #{convnet_forward.1} parent=5 // pred_check
        _
      $region10: #{convnet_forward.1} parent=5 // pred_check_branch
        %292 = sbr.rel (%p289) target = $region12
      $region11: #{convnet_forward.1} parent=5 // pred_region
        %s293 = ssub.s32 %s17, 1
        // Predicated region
        $region13: #{convnet_forward.1} parent=11 // pred_check
          %p294 = pneg %p64
        $region14: #{convnet_forward.1} parent=11 // pred_check_branch
          %296 = sbr.rel (%p294) target = $region16
        $region15: #{convnet_forward.1} parent=11 // pred_region
          _
        $region16: #{convnet_forward.1} parent=11 // pred_fallthru
          _
        // Predicated region
        $region17: #{convnet_forward.1} parent=11 // pred_check
          %p297 = pneg %p85
        $region18: #{convnet_forward.1} parent=11 // pred_check_branch
          %299 = sbr.rel (%p297) target = $region20
        $region19: #{convnet_forward.1} parent=11 // pred_region
          _
        $region20: #{convnet_forward.1} parent=11 // pred_fallthru
          _
        // Predicated region
        $region21: #{convnet_forward.1} parent=11 // pred_check
          %p300 = pneg %p106
        $region22: #{convnet_forward.1} parent=11 // pred_check_branch
          %302 = sbr.rel (%p300) target = $region24
        $region23: #{convnet_forward.1} parent=11 // pred_region
          _
        $region24: #{convnet_forward.1} parent=11 // pred_fallthru
          _
        // Predicated region
        $region25: #{convnet_forward.1} parent=11 // pred_check
          %p303 = pneg %p127
        $region26: #{convnet_forward.1} parent=11 // pred_check_branch
          %305 = sbr.rel (%p303) target = $region28
        $region27: #{convnet_forward.1} parent=11 // pred_region
          _
        $region28: #{convnet_forward.1} parent=11 // pred_fallthru
          _
        // Predicated region
        $region29: #{convnet_forward.1} parent=11 // pred_check
          %p306 = pneg %p148
        $region30: #{convnet_forward.1} parent=11 // pred_check_branch
          %308 = sbr.rel (%p306) target = $region32
        $region31: #{convnet_forward.1} parent=11 // pred_region
          _
        $region32: #{convnet_forward.1} parent=11 // pred_fallthru
          _
        // Predicated region
        $region33: #{convnet_forward.1} parent=11 // pred_check
          %p309 = pneg %p169
        $region34: #{convnet_forward.1} parent=11 // pred_check_branch
          %311 = sbr.rel (%p309) target = $region36
        $region35: #{convnet_forward.1} parent=11 // pred_region
          _
        $region36: #{convnet_forward.1} parent=11 // pred_fallthru
          _
        // Predicated region
        $region37: #{convnet_forward.1} parent=11 // pred_check
          %p312 = pneg %p190
        $region38: #{convnet_forward.1} parent=11 // pred_check_branch
          %314 = sbr.rel (%p312) target = $region40
        $region39: #{convnet_forward.1} parent=11 // pred_region
          _
        $region40: #{convnet_forward.1} parent=11 // pred_fallthru
          _
        // Predicated region
        $region41: #{convnet_forward.1} parent=11 // pred_check
          %p315 = pneg %p211
        $region42: #{convnet_forward.1} parent=11 // pred_check_branch
          %317 = sbr.rel (%p315) target = $region44
        $region43: #{convnet_forward.1} parent=11 // pred_region
          _
        $region44: #{convnet_forward.1} parent=11 // pred_fallthru
          _
        // Predicated region
        $region45: #{convnet_forward.1} parent=11 // pred_check
          %p318 = pneg %p232
        $region46: #{convnet_forward.1} parent=11 // pred_check_branch
          %320 = sbr.rel (%p318) target = $region48
        $region47: #{convnet_forward.1} parent=11 // pred_region
          _
        $region48: #{convnet_forward.1} parent=11 // pred_fallthru
          _
        // Predicated region
        $region49: #{convnet_forward.1} parent=11 // pred_check
          %p321 = pneg %p253
        $region50: #{convnet_forward.1} parent=11 // pred_check_branch
          %323 = sbr.rel (%p321) target = $region52
        $region51: #{convnet_forward.1} parent=11 // pred_region
          _
        $region52: #{convnet_forward.1} parent=11 // pred_fallthru
          _
      $region12: #{convnet_forward.1} parent=5 // pred_fallthru
        _
      %p324 = scmp.lt.s32.totalorder %s17, 2
      // Predicated region
      $region53: #{convnet_forward.1} parent=5 // pred_check
        %p325 = pneg %p324
      $region54: #{convnet_forward.1} parent=5 // pred_check_branch
        %327 = sbr.rel (%p325) target = $region56
      $region55: #{convnet_forward.1} parent=5 // pred_region
        // Predicated region
        $region57: #{convnet_forward.1} parent=55 // pred_check
          %p328 = pneg %p37
        $region58: #{convnet_forward.1} parent=55 // pred_check_branch
          %330 = sbr.rel (%p328) target = $region60
        $region59: #{convnet_forward.1} parent=55 // pred_region
          %s331 = sand.u32 %s27, 1
          %s332 = sand.u32 %s27, 1
          %s333 = smul.addr %s332, 512
          %s334 = scalar_lea.vmem [#allocation2], %s333
          %s335 = smul.u32 4, %s17
          %s336 = smul.addr %s335, 4
          %s337 = scalar_lea.vmem %s0, %s336
          // Predicated region
          $region61: #{convnet_forward.1} parent=59 // pred_check
            _
          $region62: #{convnet_forward.1} parent=59 // pred_check_branch
            %339 = sbr.rel (0) target = $region64
          $region63: #{convnet_forward.1} parent=59 // pred_region
            // Predicated region
            $region65: #{convnet_forward.1} parent=63 // pred_check
              _
            $region66: #{convnet_forward.1} parent=63 // pred_check_branch
              %341 = sbr.rel target = $region68
            $region67: #{convnet_forward.1} parent=63 // pred_region
              // Predicated region
              $region80: #{convnet_forward.1} parent=67 // pred_check
                _
              $region81: #{convnet_forward.1} parent=67 // pred_check_branch
                %610 = sbr.rel (0) target = $region83
              $region82: #{convnet_forward.1} parent=67 // pred_region
                loop: start=0, step=1, limit=1
                $region84: #{convnet_forward.1} parent=82 // loop_pre_header
                  _
                $region85: #{convnet_forward.1} parent=82 // loop_header
                  %s612 = sphi 0, %s616
                  %p613 = scmp.ge.s32.totalorder %s612, 1
                  %s617 = sphi %s337, %s337
                  %s618 = sphi %s334, %s334
                $region86: #{convnet_forward.1} parent=82 // loop_header_branch
                  %615 = sbr.rel (%p613) target = $region90
                $region87: #{convnet_forward.1} parent=82 // loop_body
                  _
                $region88: #{convnet_forward.1} parent=82 // loop_footer
                  %s616 = sadd.s32 1, %s612
                $region89: #{convnet_forward.1} parent=82 // loop_footer_branch
                  %611 = sbr.rel target = $region85
                $region90: #{convnet_forward.1} parent=82 // loop_exit
                  _
                loop: start=0, step=1, limit=1
                $region91: #{convnet_forward.1} parent=82 // loop_pre_header
                  _
                $region92: #{convnet_forward.1} parent=82 // loop_header
                  %s621 = sphi 0, %s625
                  %p622 = scmp.ge.s32.totalorder %s621, 1
                  %s626 = sphi %s337, %s337
                  %s627 = sphi %s334, %s334
                $region93: #{convnet_forward.1} parent=82 // loop_header_branch
                  %624 = sbr.rel (%p622) target = $region97
                $region94: #{convnet_forward.1} parent=82 // loop_body
                  %v628 = vld [vmem:[%s626] sm:$0xf]
                  %629 = vst [vmem:[%s627] sm:$0xf] %v628
                  %v630 = vld [vmem:[%s626 + $0x4] sm:$0xf]
                  %631 = vst [vmem:[%s627 + $0x4] sm:$0xf] %v630
                  %v632 = vld [vmem:[%s626 + $0x8] sm:$0xf]
                  %633 = vst [vmem:[%s627 + $0x8] sm:$0xf] %v632
                  %v634 = vld [vmem:[%s626 + $0xc] sm:$0xf]
                  %635 = vst [vmem:[%s627 + $0xc] sm:$0xf] %v634
                  %v636 = vld [vmem:[%s626 + $0x20] sm:$0xf]
                  %637 = vst [vmem:[%s627 + $0x10] sm:$0xf] %v636
                  %v638 = vld [vmem:[%s626 + $0x24] sm:$0xf]
                  %639 = vst [vmem:[%s627 + $0x14] sm:$0xf] %v638
                  %v640 = vld [vmem:[%s626 + $0x28] sm:$0xf]
                  %641 = vst [vmem:[%s627 + $0x18] sm:$0xf] %v640
                  %v642 = vld [vmem:[%s626 + $0x2c] sm:$0xf]
                  %643 = vst [vmem:[%s627 + $0x1c] sm:$0xf] %v642
                  %v644 = vld [vmem:[%s626 + $0x40] sm:$0xf]
                  %645 = vst [vmem:[%s627 + $0x20] sm:$0xf] %v644
                  %v646 = vld [vmem:[%s626 + $0x44] sm:$0xf]
                  %647 = vst [vmem:[%s627 + $0x24] sm:$0xf] %v646
                  %v648 = vld [vmem:[%s626 + $0x48] sm:$0xf]
                  %649 = vst [vmem:[%s627 + $0x28] sm:$0xf] %v648
                  %v650 = vld [vmem:[%s626 + $0x4c] sm:$0xf]
                  %651 = vst [vmem:[%s627 + $0x2c] sm:$0xf] %v650
                  %v652 = vld [vmem:[%s626 + $0x60] sm:$0xf]
                  %653 = vst [vmem:[%s627 + $0x30] sm:$0xf] %v652
                  %v654 = vld [vmem:[%s626 + $0x64] sm:$0xf]
                  %655 = vst [vmem:[%s627 + $0x34] sm:$0xf] %v654
                  %v656 = vld [vmem:[%s626 + $0x68] sm:$0xf]
                  %657 = vst [vmem:[%s627 + $0x38] sm:$0xf] %v656
                  %v658 = vld [vmem:[%s626 + $0x6c] sm:$0xf]
                  %659 = vst [vmem:[%s627 + $0x3c] sm:$0xf] %v658
                  %v660 = vld [vmem:[%s626 + $0x80] sm:$0xf]
                  %661 = vst [vmem:[%s627 + $0x40] sm:$0xf] %v660
                  %v662 = vld [vmem:[%s626 + $0x84] sm:$0xf]
                  %663 = vst [vmem:[%s627 + $0x44] sm:$0xf] %v662
                  %v664 = vld [vmem:[%s626 + $0x88] sm:$0xf]
                  %665 = vst [vmem:[%s627 + $0x48] sm:$0xf] %v664
                  %v666 = vld [vmem:[%s626 + $0x8c] sm:$0xf]
                  %667 = vst [vmem:[%s627 + $0x4c] sm:$0xf] %v666
                  %v668 = vld [vmem:[%s626 + $0xa0] sm:$0xf]
                  %669 = vst [vmem:[%s627 + $0x50] sm:$0xf] %v668
                  %v670 = vld [vmem:[%s626 + $0xa4] sm:$0xf]
                  %671 = vst [vmem:[%s627 + $0x54] sm:$0xf] %v670
                  %v672 = vld [vmem:[%s626 + $0xa8] sm:$0xf]
                  %673 = vst [vmem:[%s627 + $0x58] sm:$0xf] %v672
                  %v674 = vld [vmem:[%s626 + $0xac] sm:$0xf]
                  %675 = vst [vmem:[%s627 + $0x5c] sm:$0xf] %v674
                  %v676 = vld [vmem:[%s626 + $0xc0] sm:$0xf]
                  %677 = vst [vmem:[%s627 + $0x60] sm:$0xf] %v676
                  %v678 = vld [vmem:[%s626 + $0xc4] sm:$0xf]
                  %679 = vst [vmem:[%s627 + $0x64] sm:$0xf] %v678
                  %v680 = vld [vmem:[%s626 + $0xc8] sm:$0xf]
                  %681 = vst [vmem:[%s627 + $0x68] sm:$0xf] %v680
                  %v682 = vld [vmem:[%s626 + $0xcc] sm:$0xf]
                  %683 = vst [vmem:[%s627 + $0x6c] sm:$0xf] %v682
                  %v684 = vld [vmem:[%s626 + $0xe0] sm:$0xf]
                  %685 = vst [vmem:[%s627 + $0x70] sm:$0xf] %v684
                  %v686 = vld [vmem:[%s626 + $0xe4] sm:$0xf]
                  %687 = vst [vmem:[%s627 + $0x74] sm:$0xf] %v686
                  %v688 = vld [vmem:[%s626 + $0xe8] sm:$0xf]
                  %689 = vst [vmem:[%s627 + $0x78] sm:$0xf] %v688
                  %v690 = vld [vmem:[%s626 + $0xec] sm:$0xf]
                  %691 = vst [vmem:[%s627 + $0x7c] sm:$0xf] %v690
                  %v692 = vld [vmem:[%s626 + $0x100] sm:$0xf]
                  %693 = vst [vmem:[%s627 + $0x80] sm:$0xf] %v692
                  %v694 = vld [vmem:[%s626 + $0x104] sm:$0xf]
                  %695 = vst [vmem:[%s627 + $0x84] sm:$0xf] %v694
                  %v696 = vld [vmem:[%s626 + $0x108] sm:$0xf]
                  %697 = vst [vmem:[%s627 + $0x88] sm:$0xf] %v696
                  %v698 = vld [vmem:[%s626 + $0x10c] sm:$0xf]
                  %699 = vst [vmem:[%s627 + $0x8c] sm:$0xf] %v698
                  %v700 = vld [vmem:[%s626 + $0x120] sm:$0xf]
                  %701 = vst [vmem:[%s627 + $0x90] sm:$0xf] %v700
                  %v702 = vld [vmem:[%s626 + $0x124] sm:$0xf]
                  %703 = vst [vmem:[%s627 + $0x94] sm:$0xf] %v702
                  %v704 = vld [vmem:[%s626 + $0x128] sm:$0xf]
                  %705 = vst [vmem:[%s627 + $0x98] sm:$0xf] %v704
                  %v706 = vld [vmem:[%s626 + $0x12c] sm:$0xf]
                  %707 = vst [vmem:[%s627 + $0x9c] sm:$0xf] %v706
                  %v708 = vld [vmem:[%s626 + $0x140] sm:$0xf]
                  %709 = vst [vmem:[%s627 + $0xa0] sm:$0xf] %v708
                  %v710 = vld [vmem:[%s626 + $0x144] sm:$0xf]
                  %711 = vst [vmem:[%s627 + $0xa4] sm:$0xf] %v710
                  %v712 = vld [vmem:[%s626 + $0x148] sm:$0xf]
                  %713 = vst [vmem:[%s627 + $0xa8] sm:$0xf] %v712
                  %v714 = vld [vmem:[%s626 + $0x14c] sm:$0xf]
                  %715 = vst [vmem:[%s627 + $0xac] sm:$0xf] %v714
                  %v716 = vld [vmem:[%s626 + $0x160] sm:$0xf]
                  %717 = vst [vmem:[%s627 + $0xb0] sm:$0xf] %v716
                  %v718 = vld [vmem:[%s626 + $0x164] sm:$0xf]
                  %719 = vst [vmem:[%s627 + $0xb4] sm:$0xf] %v718
                  %v720 = vld [vmem:[%s626 + $0x168] sm:$0xf]
                  %721 = vst [vmem:[%s627 + $0xb8] sm:$0xf] %v720
                  %v722 = vld [vmem:[%s626 + $0x16c] sm:$0xf]
                  %723 = vst [vmem:[%s627 + $0xbc] sm:$0xf] %v722
                  %v724 = vld [vmem:[%s626 + $0x180] sm:$0xf]
                  %725 = vst [vmem:[%s627 + $0xc0] sm:$0xf] %v724
                  %v726 = vld [vmem:[%s626 + $0x184] sm:$0xf]
                  %727 = vst [vmem:[%s627 + $0xc4] sm:$0xf] %v726
                  %v728 = vld [vmem:[%s626 + $0x188] sm:$0xf]
                  %729 = vst [vmem:[%s627 + $0xc8] sm:$0xf] %v728
                  %v730 = vld [vmem:[%s626 + $0x18c] sm:$0xf]
                  %731 = vst [vmem:[%s627 + $0xcc] sm:$0xf] %v730
                  %v732 = vld [vmem:[%s626 + $0x1a0] sm:$0xf]
                  %733 = vst [vmem:[%s627 + $0xd0] sm:$0xf] %v732
                  %v734 = vld [vmem:[%s626 + $0x1a4] sm:$0xf]
                  %735 = vst [vmem:[%s627 + $0xd4] sm:$0xf] %v734
                  %v736 = vld [vmem:[%s626 + $0x1a8] sm:$0xf]
                  %737 = vst [vmem:[%s627 + $0xd8] sm:$0xf] %v736
                  %v738 = vld [vmem:[%s626 + $0x1ac] sm:$0xf]
                  %739 = vst [vmem:[%s627 + $0xdc] sm:$0xf] %v738
                  %v740 = vld [vmem:[%s626 + $0x1c0] sm:$0xf]
                  %741 = vst [vmem:[%s627 + $0xe0] sm:$0xf] %v740
                  %v742 = vld [vmem:[%s626 + $0x1c4] sm:$0xf]
                  %743 = vst [vmem:[%s627 + $0xe4] sm:$0xf] %v742
                  %v744 = vld [vmem:[%s626 + $0x1c8] sm:$0xf]
                  %745 = vst [vmem:[%s627 + $0xe8] sm:$0xf] %v744
                  %v746 = vld [vmem:[%s626 + $0x1cc] sm:$0xf]
                  %747 = vst [vmem:[%s627 + $0xec] sm:$0xf] %v746
                  %v748 = vld [vmem:[%s626 + $0x1e0] sm:$0xf]
                  %749 = vst [vmem:[%s627 + $0xf0] sm:$0xf] %v748
                  %v750 = vld [vmem:[%s626 + $0x1e4] sm:$0xf]
                  %751 = vst [vmem:[%s627 + $0xf4] sm:$0xf] %v750
                  %v752 = vld [vmem:[%s626 + $0x1e8] sm:$0xf]
                  %753 = vst [vmem:[%s627 + $0xf8] sm:$0xf] %v752
                  %v754 = vld [vmem:[%s626 + $0x1ec] sm:$0xf]
                  %755 = vst [vmem:[%s627 + $0xfc] sm:$0xf] %v754
                  %v756 = vld [vmem:[%s626 + $0x200] sm:$0xf]
                  %757 = vst [vmem:[%s627 + $0x100] sm:$0xf] %v756
                  %v758 = vld [vmem:[%s626 + $0x204] sm:$0xf]
                  %759 = vst [vmem:[%s627 + $0x104] sm:$0xf] %v758
                  %v760 = vld [vmem:[%s626 + $0x208] sm:$0xf]
                  %761 = vst [vmem:[%s627 + $0x108] sm:$0xf] %v760
                  %v762 = vld [vmem:[%s626 + $0x20c] sm:$0xf]
                  %763 = vst [vmem:[%s627 + $0x10c] sm:$0xf] %v762
                  %v764 = vld [vmem:[%s626 + $0x220] sm:$0xf]
                  %765 = vst [vmem:[%s627 + $0x110] sm:$0xf] %v764
                  %v766 = vld [vmem:[%s626 + $0x224] sm:$0xf]
                  %767 = vst [vmem:[%s627 + $0x114] sm:$0xf] %v766
                  %v768 = vld [vmem:[%s626 + $0x228] sm:$0xf]
                  %769 = vst [vmem:[%s627 + $0x118] sm:$0xf] %v768
                  %v770 = vld [vmem:[%s626 + $0x22c] sm:$0xf]
                  %771 = vst [vmem:[%s627 + $0x11c] sm:$0xf] %v770
                  %v772 = vld [vmem:[%s626 + $0x240] sm:$0xf]
                  %773 = vst [vmem:[%s627 + $0x120] sm:$0xf] %v772
                  %v774 = vld [vmem:[%s626 + $0x244] sm:$0xf]
                  %775 = vst [vmem:[%s627 + $0x124] sm:$0xf] %v774
                  %v776 = vld [vmem:[%s626 + $0x248] sm:$0xf]
                  %777 = vst [vmem:[%s627 + $0x128] sm:$0xf] %v776
                  %v778 = vld [vmem:[%s626 + $0x24c] sm:$0xf]
                  %779 = vst [vmem:[%s627 + $0x12c] sm:$0xf] %v778
                  %v780 = vld [vmem:[%s626 + $0x260] sm:$0xf]
                  %781 = vst [vmem:[%s627 + $0x130] sm:$0xf] %v780
                  %v782 = vld [vmem:[%s626 + $0x264] sm:$0xf]
                  %783 = vst [vmem:[%s627 + $0x134] sm:$0xf] %v782
                  %v784 = vld [vmem:[%s626 + $0x268] sm:$0xf]
                  %785 = vst [vmem:[%s627 + $0x138] sm:$0xf] %v784
                  %v786 = vld [vmem:[%s626 + $0x26c] sm:$0xf]
                  %787 = vst [vmem:[%s627 + $0x13c] sm:$0xf] %v786
                  %v788 = vld [vmem:[%s626 + $0x280] sm:$0xf]
                  %789 = vst [vmem:[%s627 + $0x140] sm:$0xf] %v788
                  %v790 = vld [vmem:[%s626 + $0x284] sm:$0xf]
                  %791 = vst [vmem:[%s627 + $0x144] sm:$0xf] %v790
                  %v792 = vld [vmem:[%s626 + $0x288] sm:$0xf]
                  %793 = vst [vmem:[%s627 + $0x148] sm:$0xf] %v792
                  %v794 = vld [vmem:[%s626 + $0x28c] sm:$0xf]
                  %795 = vst [vmem:[%s627 + $0x14c] sm:$0xf] %v794
                  %v796 = vld [vmem:[%s626 + $0x2a0] sm:$0xf]
                  %797 = vst [vmem:[%s627 + $0x150] sm:$0xf] %v796
                  %v798 = vld [vmem:[%s626 + $0x2a4] sm:$0xf]
                  %799 = vst [vmem:[%s627 + $0x154] sm:$0xf] %v798
                  %v800 = vld [vmem:[%s626 + $0x2a8] sm:$0xf]
                  %801 = vst [vmem:[%s627 + $0x158] sm:$0xf] %v800
                  %v802 = vld [vmem:[%s626 + $0x2ac] sm:$0xf]
                  %803 = vst [vmem:[%s627 + $0x15c] sm:$0xf] %v802
                  %v804 = vld [vmem:[%s626 + $0x2c0] sm:$0xf]
                  %805 = vst [vmem:[%s627 + $0x160] sm:$0xf] %v804
                  %v806 = vld [vmem:[%s626 + $0x2c4] sm:$0xf]
                  %807 = vst [vmem:[%s627 + $0x164] sm:$0xf] %v806
                  %v808 = vld [vmem:[%s626 + $0x2c8] sm:$0xf]
                  %809 = vst [vmem:[%s627 + $0x168] sm:$0xf] %v808
                  %v810 = vld [vmem:[%s626 + $0x2cc] sm:$0xf]
                  %811 = vst [vmem:[%s627 + $0x16c] sm:$0xf] %v810
                  %v812 = vld [vmem:[%s626 + $0x2e0] sm:$0xf]
                  %813 = vst [vmem:[%s627 + $0x170] sm:$0xf] %v812
                  %v814 = vld [vmem:[%s626 + $0x2e4] sm:$0xf]
                  %815 = vst [vmem:[%s627 + $0x174] sm:$0xf] %v814
                  %v816 = vld [vmem:[%s626 + $0x2e8] sm:$0xf]
                  %817 = vst [vmem:[%s627 + $0x178] sm:$0xf] %v816
                  %v818 = vld [vmem:[%s626 + $0x2ec] sm:$0xf]
                  %819 = vst [vmem:[%s627 + $0x17c] sm:$0xf] %v818
                  %v820 = vld [vmem:[%s626 + $0x300] sm:$0xf]
                  %821 = vst [vmem:[%s627 + $0x180] sm:$0xf] %v820
                  %v822 = vld [vmem:[%s626 + $0x304] sm:$0xf]
                  %823 = vst [vmem:[%s627 + $0x184] sm:$0xf] %v822
                  %v824 = vld [vmem:[%s626 + $0x308] sm:$0xf]
                  %825 = vst [vmem:[%s627 + $0x188] sm:$0xf] %v824
                  %v826 = vld [vmem:[%s626 + $0x30c] sm:$0xf]
                  %827 = vst [vmem:[%s627 + $0x18c] sm:$0xf] %v826
                  %v828 = vld [vmem:[%s626 + $0x320] sm:$0xf]
                  %829 = vst [vmem:[%s627 + $0x190] sm:$0xf] %v828
                  %v830 = vld [vmem:[%s626 + $0x324] sm:$0xf]
                  %831 = vst [vmem:[%s627 + $0x194] sm:$0xf] %v830
                  %v832 = vld [vmem:[%s626 + $0x328] sm:$0xf]
                  %833 = vst [vmem:[%s627 + $0x198] sm:$0xf] %v832
                  %v834 = vld [vmem:[%s626 + $0x32c] sm:$0xf]
                  %835 = vst [vmem:[%s627 + $0x19c] sm:$0xf] %v834
                  %v836 = vld [vmem:[%s626 + $0x340] sm:$0xf]
                  %837 = vst [vmem:[%s627 + $0x1a0] sm:$0xf] %v836
                  %v838 = vld [vmem:[%s626 + $0x344] sm:$0xf]
                  %839 = vst [vmem:[%s627 + $0x1a4] sm:$0xf] %v838
                  %v840 = vld [vmem:[%s626 + $0x348] sm:$0xf]
                  %841 = vst [vmem:[%s627 + $0x1a8] sm:$0xf] %v840
                  %v842 = vld [vmem:[%s626 + $0x34c] sm:$0xf]
                  %843 = vst [vmem:[%s627 + $0x1ac] sm:$0xf] %v842
                  %v844 = vld [vmem:[%s626 + $0x360] sm:$0xf]
                  %845 = vst [vmem:[%s627 + $0x1b0] sm:$0xf] %v844
                  %v846 = vld [vmem:[%s626 + $0x364] sm:$0xf]
                  %847 = vst [vmem:[%s627 + $0x1b4] sm:$0xf] %v846
                  %v848 = vld [vmem:[%s626 + $0x368] sm:$0xf]
                  %849 = vst [vmem:[%s627 + $0x1b8] sm:$0xf] %v848
                  %v850 = vld [vmem:[%s626 + $0x36c] sm:$0xf]
                  %851 = vst [vmem:[%s627 + $0x1bc] sm:$0xf] %v850
                  %v852 = vld [vmem:[%s626 + $0x380] sm:$0xf]
                  %853 = vst [vmem:[%s627 + $0x1c0] sm:$0xf] %v852
                  %v854 = vld [vmem:[%s626 + $0x384] sm:$0xf]
                  %855 = vst [vmem:[%s627 + $0x1c4] sm:$0xf] %v854
                  %v856 = vld [vmem:[%s626 + $0x388] sm:$0xf]
                  %857 = vst [vmem:[%s627 + $0x1c8] sm:$0xf] %v856
                  %v858 = vld [vmem:[%s626 + $0x38c] sm:$0xf]
                  %859 = vst [vmem:[%s627 + $0x1cc] sm:$0xf] %v858
                  %v860 = vld [vmem:[%s626 + $0x3a0] sm:$0xf]
                  %861 = vst [vmem:[%s627 + $0x1d0] sm:$0xf] %v860
                  %v862 = vld [vmem:[%s626 + $0x3a4] sm:$0xf]
                  %863 = vst [vmem:[%s627 + $0x1d4] sm:$0xf] %v862
                  %v864 = vld [vmem:[%s626 + $0x3a8] sm:$0xf]
                  %865 = vst [vmem:[%s627 + $0x1d8] sm:$0xf] %v864
                  %v866 = vld [vmem:[%s626 + $0x3ac] sm:$0xf]
                  %867 = vst [vmem:[%s627 + $0x1dc] sm:$0xf] %v866
                  %v868 = vld [vmem:[%s626 + $0x3c0] sm:$0xf]
                  %869 = vst [vmem:[%s627 + $0x1e0] sm:$0xf] %v868
                  %v870 = vld [vmem:[%s626 + $0x3c4] sm:$0xf]
                  %871 = vst [vmem:[%s627 + $0x1e4] sm:$0xf] %v870
                  %v872 = vld [vmem:[%s626 + $0x3c8] sm:$0xf]
                  %873 = vst [vmem:[%s627 + $0x1e8] sm:$0xf] %v872
                  %v874 = vld [vmem:[%s626 + $0x3cc] sm:$0xf]
                  %875 = vst [vmem:[%s627 + $0x1ec] sm:$0xf] %v874
                  %v876 = vld [vmem:[%s626 + $0x3e0] sm:$0xf]
                  %877 = vst [vmem:[%s627 + $0x1f0] sm:$0xf] %v876
                  %v878 = vld [vmem:[%s626 + $0x3e4] sm:$0xf]
                  %879 = vst [vmem:[%s627 + $0x1f4] sm:$0xf] %v878
                  %v880 = vld [vmem:[%s626 + $0x3e8] sm:$0xf]
                  %881 = vst [vmem:[%s627 + $0x1f8] sm:$0xf] %v880
                  %v882 = vld [vmem:[%s626 + $0x3ec] sm:$0xf]
                  %883 = vst [vmem:[%s627 + $0x1fc] sm:$0xf] %v882
                $region95: #{convnet_forward.1} parent=82 // loop_footer
                  %s625 = sadd.s32 1, %s621
                $region96: #{convnet_forward.1} parent=82 // loop_footer_branch
                  %620 = sbr.rel target = $region92
                $region97: #{convnet_forward.1} parent=82 // loop_exit
                  _
              $region83: #{convnet_forward.1} parent=67 // pred_fallthru
                _
            $region68: #{convnet_forward.1} parent=63 // pred_fallthru
              _
            // Predicated region
            $region69: #{convnet_forward.1} parent=63 // pred_check
              _
            $region70: #{convnet_forward.1} parent=63 // pred_check_branch
              %343 = sbr.rel (0) target = $region72
            $region71: #{convnet_forward.1} parent=63 // pred_region
              loop: start=0, step=1, limit=1
              $region73: #{convnet_forward.1} parent=71 // loop_pre_header
                _
              $region74: #{convnet_forward.1} parent=71 // loop_header
                %s346 = sphi 0, %s350
                %p347 = scmp.ge.s32.totalorder %s346, 1
                %s351 = sphi %s337, %s337
                %s352 = sphi %s334, %s334
              $region75: #{convnet_forward.1} parent=71 // loop_header_branch
                %349 = sbr.rel (%p347) target = $region79
              $region76: #{convnet_forward.1} parent=71 // loop_body
                %v353 = vld [vmem:[%s351] sm:$0xf]
                %354 = vst [vmem:[%s352] sm:$0xf] %v353
                %v355 = vld [vmem:[%s351 + $0x4] sm:$0xf]
                %356 = vst [vmem:[%s352 + $0x4] sm:$0xf] %v355
                %v357 = vld [vmem:[%s351 + $0x8] sm:$0xf]
                %358 = vst [vmem:[%s352 + $0x8] sm:$0xf] %v357
                %v359 = vld [vmem:[%s351 + $0xc] sm:$0xf]
                %360 = vst [vmem:[%s352 + $0xc] sm:$0xf] %v359
                %v361 = vld [vmem:[%s351 + $0x20] sm:$0xf]
                %362 = vst [vmem:[%s352 + $0x10] sm:$0xf] %v361
                %v363 = vld [vmem:[%s351 + $0x24] sm:$0xf]
                %364 = vst [vmem:[%s352 + $0x14] sm:$0xf] %v363
                %v365 = vld [vmem:[%s351 + $0x28] sm:$0xf]
                %366 = vst [vmem:[%s352 + $0x18] sm:$0xf] %v365
                %v367 = vld [vmem:[%s351 + $0x2c] sm:$0xf]
                %368 = vst [vmem:[%s352 + $0x1c] sm:$0xf] %v367
                %v369 = vld [vmem:[%s351 + $0x40] sm:$0xf]
                %370 = vst [vmem:[%s352 + $0x20] sm:$0xf] %v369
                %v371 = vld [vmem:[%s351 + $0x44] sm:$0xf]
                %372 = vst [vmem:[%s352 + $0x24] sm:$0xf] %v371
                %v373 = vld [vmem:[%s351 + $0x48] sm:$0xf]
                %374 = vst [vmem:[%s352 + $0x28] sm:$0xf] %v373
                %v375 = vld [vmem:[%s351 + $0x4c] sm:$0xf]
                %376 = vst [vmem:[%s352 + $0x2c] sm:$0xf] %v375
                %v377 = vld [vmem:[%s351 + $0x60] sm:$0xf]
                %378 = vst [vmem:[%s352 + $0x30] sm:$0xf] %v377
                %v379 = vld [vmem:[%s351 + $0x64] sm:$0xf]
                %380 = vst [vmem:[%s352 + $0x34] sm:$0xf] %v379
                %v381 = vld [vmem:[%s351 + $0x68] sm:$0xf]
                %382 = vst [vmem:[%s352 + $0x38] sm:$0xf] %v381
                %v383 = vld [vmem:[%s351 + $0x6c] sm:$0xf]
                %384 = vst [vmem:[%s352 + $0x3c] sm:$0xf] %v383
                %v385 = vld [vmem:[%s351 + $0x80] sm:$0xf]
                %386 = vst [vmem:[%s352 + $0x40] sm:$0xf] %v385
                %v387 = vld [vmem:[%s351 + $0x84] sm:$0xf]
                %388 = vst [vmem:[%s352 + $0x44] sm:$0xf] %v387
                %v389 = vld [vmem:[%s351 + $0x88] sm:$0xf]
                %390 = vst [vmem:[%s352 + $0x48] sm:$0xf] %v389
                %v391 = vld [vmem:[%s351 + $0x8c] sm:$0xf]
                %392 = vst [vmem:[%s352 + $0x4c] sm:$0xf] %v391
                %v393 = vld [vmem:[%s351 + $0xa0] sm:$0xf]
                %394 = vst [vmem:[%s352 + $0x50] sm:$0xf] %v393
                %v395 = vld [vmem:[%s351 + $0xa4] sm:$0xf]
                %396 = vst [vmem:[%s352 + $0x54] sm:$0xf] %v395
                %v397 = vld [vmem:[%s351 + $0xa8] sm:$0xf]
                %398 = vst [vmem:[%s352 + $0x58] sm:$0xf] %v397
                %v399 = vld [vmem:[%s351 + $0xac] sm:$0xf]
                %400 = vst [vmem:[%s352 + $0x5c] sm:$0xf] %v399
                %v401 = vld [vmem:[%s351 + $0xc0] sm:$0xf]
                %402 = vst [vmem:[%s352 + $0x60] sm:$0xf] %v401
                %v403 = vld [vmem:[%s351 + $0xc4] sm:$0xf]
                %404 = vst [vmem:[%s352 + $0x64] sm:$0xf] %v403
                %v405 = vld [vmem:[%s351 + $0xc8] sm:$0xf]
                %406 = vst [vmem:[%s352 + $0x68] sm:$0xf] %v405
                %v407 = vld [vmem:[%s351 + $0xcc] sm:$0xf]
                %408 = vst [vmem:[%s352 + $0x6c] sm:$0xf] %v407
                %v409 = vld [vmem:[%s351 + $0xe0] sm:$0xf]
                %410 = vst [vmem:[%s352 + $0x70] sm:$0xf] %v409
                %v411 = vld [vmem:[%s351 + $0xe4] sm:$0xf]
                %412 = vst [vmem:[%s352 + $0x74] sm:$0xf] %v411
                %v413 = vld [vmem:[%s351 + $0xe8] sm:$0xf]
                %414 = vst [vmem:[%s352 + $0x78] sm:$0xf] %v413
                %v415 = vld [vmem:[%s351 + $0xec] sm:$0xf]
                %416 = vst [vmem:[%s352 + $0x7c] sm:$0xf] %v415
                %v417 = vld [vmem:[%s351 + $0x100] sm:$0xf]
                %418 = vst [vmem:[%s352 + $0x80] sm:$0xf] %v417
                %v419 = vld [vmem:[%s351 + $0x104] sm:$0xf]
                %420 = vst [vmem:[%s352 + $0x84] sm:$0xf] %v419
                %v421 = vld [vmem:[%s351 + $0x108] sm:$0xf]
                %422 = vst [vmem:[%s352 + $0x88] sm:$0xf] %v421
                %v423 = vld [vmem:[%s351 + $0x10c] sm:$0xf]
                %424 = vst [vmem:[%s352 + $0x8c] sm:$0xf] %v423
                %v425 = vld [vmem:[%s351 + $0x120] sm:$0xf]
                %426 = vst [vmem:[%s352 + $0x90] sm:$0xf] %v425
                %v427 = vld [vmem:[%s351 + $0x124] sm:$0xf]
                %428 = vst [vmem:[%s352 + $0x94] sm:$0xf] %v427
                %v429 = vld [vmem:[%s351 + $0x128] sm:$0xf]
                %430 = vst [vmem:[%s352 + $0x98] sm:$0xf] %v429
                %v431 = vld [vmem:[%s351 + $0x12c] sm:$0xf]
                %432 = vst [vmem:[%s352 + $0x9c] sm:$0xf] %v431
                %v433 = vld [vmem:[%s351 + $0x140] sm:$0xf]
                %434 = vst [vmem:[%s352 + $0xa0] sm:$0xf] %v433
                %v435 = vld [vmem:[%s351 + $0x144] sm:$0xf]
                %436 = vst [vmem:[%s352 + $0xa4] sm:$0xf] %v435
                %v437 = vld [vmem:[%s351 + $0x148] sm:$0xf]
                %438 = vst [vmem:[%s352 + $0xa8] sm:$0xf] %v437
                %v439 = vld [vmem:[%s351 + $0x14c] sm:$0xf]
                %440 = vst [vmem:[%s352 + $0xac] sm:$0xf] %v439
                %v441 = vld [vmem:[%s351 + $0x160] sm:$0xf]
                %442 = vst [vmem:[%s352 + $0xb0] sm:$0xf] %v441
                %v443 = vld [vmem:[%s351 + $0x164] sm:$0xf]
                %444 = vst [vmem:[%s352 + $0xb4] sm:$0xf] %v443
                %v445 = vld [vmem:[%s351 + $0x168] sm:$0xf]
                %446 = vst [vmem:[%s352 + $0xb8] sm:$0xf] %v445
                %v447 = vld [vmem:[%s351 + $0x16c] sm:$0xf]
                %448 = vst [vmem:[%s352 + $0xbc] sm:$0xf] %v447
                %v449 = vld [vmem:[%s351 + $0x180] sm:$0xf]
                %450 = vst [vmem:[%s352 + $0xc0] sm:$0xf] %v449
                %v451 = vld [vmem:[%s351 + $0x184] sm:$0xf]
                %452 = vst [vmem:[%s352 + $0xc4] sm:$0xf] %v451
                %v453 = vld [vmem:[%s351 + $0x188] sm:$0xf]
                %454 = vst [vmem:[%s352 + $0xc8] sm:$0xf] %v453
                %v455 = vld [vmem:[%s351 + $0x18c] sm:$0xf]
                %456 = vst [vmem:[%s352 + $0xcc] sm:$0xf] %v455
                %v457 = vld [vmem:[%s351 + $0x1a0] sm:$0xf]
                %458 = vst [vmem:[%s352 + $0xd0] sm:$0xf] %v457
                %v459 = vld [vmem:[%s351 + $0x1a4] sm:$0xf]
                %460 = vst [vmem:[%s352 + $0xd4] sm:$0xf] %v459
                %v461 = vld [vmem:[%s351 + $0x1a8] sm:$0xf]
                %462 = vst [vmem:[%s352 + $0xd8] sm:$0xf] %v461
                %v463 = vld [vmem:[%s351 + $0x1ac] sm:$0xf]
                %464 = vst [vmem:[%s352 + $0xdc] sm:$0xf] %v463
                %v465 = vld [vmem:[%s351 + $0x1c0] sm:$0xf]
                %466 = vst [vmem:[%s352 + $0xe0] sm:$0xf] %v465
                %v467 = vld [vmem:[%s351 + $0x1c4] sm:$0xf]
                %468 = vst [vmem:[%s352 + $0xe4] sm:$0xf] %v467
                %v469 = vld [vmem:[%s351 + $0x1c8] sm:$0xf]
                %470 = vst [vmem:[%s352 + $0xe8] sm:$0xf] %v469
                %v471 = vld [vmem:[%s351 + $0x1cc] sm:$0xf]
                %472 = vst [vmem:[%s352 + $0xec] sm:$0xf] %v471
                %v473 = vld [vmem:[%s351 + $0x1e0] sm:$0xf]
                %474 = vst [vmem:[%s352 + $0xf0] sm:$0xf] %v473
                %v475 = vld [vmem:[%s351 + $0x1e4] sm:$0xf]
                %476 = vst [vmem:[%s352 + $0xf4] sm:$0xf] %v475
                %v477 = vld [vmem:[%s351 + $0x1e8] sm:$0xf]
                %478 = vst [vmem:[%s352 + $0xf8] sm:$0xf] %v477
                %v479 = vld [vmem:[%s351 + $0x1ec] sm:$0xf]
                %480 = vst [vmem:[%s352 + $0xfc] sm:$0xf] %v479
                %v481 = vld [vmem:[%s351 + $0x200] sm:$0xf]
                %482 = vst [vmem:[%s352 + $0x100] sm:$0xf] %v481
                %v483 = vld [vmem:[%s351 + $0x204] sm:$0xf]
                %484 = vst [vmem:[%s352 + $0x104] sm:$0xf] %v483
                %v485 = vld [vmem:[%s351 + $0x208] sm:$0xf]
                %486 = vst [vmem:[%s352 + $0x108] sm:$0xf] %v485
                %v487 = vld [vmem:[%s351 + $0x20c] sm:$0xf]
                %488 = vst [vmem:[%s352 + $0x10c] sm:$0xf] %v487
                %v489 = vld [vmem:[%s351 + $0x220] sm:$0xf]
                %490 = vst [vmem:[%s352 + $0x110] sm:$0xf] %v489
                %v491 = vld [vmem:[%s351 + $0x224] sm:$0xf]
                %492 = vst [vmem:[%s352 + $0x114] sm:$0xf] %v491
                %v493 = vld [vmem:[%s351 + $0x228] sm:$0xf]
                %494 = vst [vmem:[%s352 + $0x118] sm:$0xf] %v493
                %v495 = vld [vmem:[%s351 + $0x22c] sm:$0xf]
                %496 = vst [vmem:[%s352 + $0x11c] sm:$0xf] %v495
                %v497 = vld [vmem:[%s351 + $0x240] sm:$0xf]
                %498 = vst [vmem:[%s352 + $0x120] sm:$0xf] %v497
                %v499 = vld [vmem:[%s351 + $0x244] sm:$0xf]
                %500 = vst [vmem:[%s352 + $0x124] sm:$0xf] %v499
                %v501 = vld [vmem:[%s351 + $0x248] sm:$0xf]
                %502 = vst [vmem:[%s352 + $0x128] sm:$0xf] %v501
                %v503 = vld [vmem:[%s351 + $0x24c] sm:$0xf]
                %504 = vst [vmem:[%s352 + $0x12c] sm:$0xf] %v503
                %v505 = vld [vmem:[%s351 + $0x260] sm:$0xf]
                %506 = vst [vmem:[%s352 + $0x130] sm:$0xf] %v505
                %v507 = vld [vmem:[%s351 + $0x264] sm:$0xf]
                %508 = vst [vmem:[%s352 + $0x134] sm:$0xf] %v507
                %v509 = vld [vmem:[%s351 + $0x268] sm:$0xf]
                %510 = vst [vmem:[%s352 + $0x138] sm:$0xf] %v509
                %v511 = vld [vmem:[%s351 + $0x26c] sm:$0xf]
                %512 = vst [vmem:[%s352 + $0x13c] sm:$0xf] %v511
                %v513 = vld [vmem:[%s351 + $0x280] sm:$0xf]
                %514 = vst [vmem:[%s352 + $0x140] sm:$0xf] %v513
                %v515 = vld [vmem:[%s351 + $0x284] sm:$0xf]
                %516 = vst [vmem:[%s352 + $0x144] sm:$0xf] %v515
                %v517 = vld [vmem:[%s351 + $0x288] sm:$0xf]
                %518 = vst [vmem:[%s352 + $0x148] sm:$0xf] %v517
                %v519 = vld [vmem:[%s351 + $0x28c] sm:$0xf]
                %520 = vst [vmem:[%s352 + $0x14c] sm:$0xf] %v519
                %v521 = vld [vmem:[%s351 + $0x2a0] sm:$0xf]
                %522 = vst [vmem:[%s352 + $0x150] sm:$0xf] %v521
                %v523 = vld [vmem:[%s351 + $0x2a4] sm:$0xf]
                %524 = vst [vmem:[%s352 + $0x154] sm:$0xf] %v523
                %v525 = vld [vmem:[%s351 + $0x2a8] sm:$0xf]
                %526 = vst [vmem:[%s352 + $0x158] sm:$0xf] %v525
                %v527 = vld [vmem:[%s351 + $0x2ac] sm:$0xf]
                %528 = vst [vmem:[%s352 + $0x15c] sm:$0xf] %v527
                %v529 = vld [vmem:[%s351 + $0x2c0] sm:$0xf]
                %530 = vst [vmem:[%s352 + $0x160] sm:$0xf] %v529
                %v531 = vld [vmem:[%s351 + $0x2c4] sm:$0xf]
                %532 = vst [vmem:[%s352 + $0x164] sm:$0xf] %v531
                %v533 = vld [vmem:[%s351 + $0x2c8] sm:$0xf]
                %534 = vst [vmem:[%s352 + $0x168] sm:$0xf] %v533
                %v535 = vld [vmem:[%s351 + $0x2cc] sm:$0xf]
                %536 = vst [vmem:[%s352 + $0x16c] sm:$0xf] %v535
                %v537 = vld [vmem:[%s351 + $0x2e0] sm:$0xf]
                %538 = vst [vmem:[%s352 + $0x170] sm:$0xf] %v537
                %v539 = vld [vmem:[%s351 + $0x2e4] sm:$0xf]
                %540 = vst [vmem:[%s352 + $0x174] sm:$0xf] %v539
                %v541 = vld [vmem:[%s351 + $0x2e8] sm:$0xf]
                %542 = vst [vmem:[%s352 + $0x178] sm:$0xf] %v541
                %v543 = vld [vmem:[%s351 + $0x2ec] sm:$0xf]
                %544 = vst [vmem:[%s352 + $0x17c] sm:$0xf] %v543
                %v545 = vld [vmem:[%s351 + $0x300] sm:$0xf]
                %546 = vst [vmem:[%s352 + $0x180] sm:$0xf] %v545
                %v547 = vld [vmem:[%s351 + $0x304] sm:$0xf]
                %548 = vst [vmem:[%s352 + $0x184] sm:$0xf] %v547
                %v549 = vld [vmem:[%s351 + $0x308] sm:$0xf]
                %550 = vst [vmem:[%s352 + $0x188] sm:$0xf] %v549
                %v551 = vld [vmem:[%s351 + $0x30c] sm:$0xf]
                %552 = vst [vmem:[%s352 + $0x18c] sm:$0xf] %v551
                %v553 = vld [vmem:[%s351 + $0x320] sm:$0xf]
                %554 = vst [vmem:[%s352 + $0x190] sm:$0xf] %v553
                %v555 = vld [vmem:[%s351 + $0x324] sm:$0xf]
                %556 = vst [vmem:[%s352 + $0x194] sm:$0xf] %v555
                %v557 = vld [vmem:[%s351 + $0x328] sm:$0xf]
                %558 = vst [vmem:[%s352 + $0x198] sm:$0xf] %v557
                %v559 = vld [vmem:[%s351 + $0x32c] sm:$0xf]
                %560 = vst [vmem:[%s352 + $0x19c] sm:$0xf] %v559
                %v561 = vld [vmem:[%s351 + $0x340] sm:$0xf]
                %562 = vst [vmem:[%s352 + $0x1a0] sm:$0xf] %v561
                %v563 = vld [vmem:[%s351 + $0x344] sm:$0xf]
                %564 = vst [vmem:[%s352 + $0x1a4] sm:$0xf] %v563
                %v565 = vld [vmem:[%s351 + $0x348] sm:$0xf]
                %566 = vst [vmem:[%s352 + $0x1a8] sm:$0xf] %v565
                %v567 = vld [vmem:[%s351 + $0x34c] sm:$0xf]
                %568 = vst [vmem:[%s352 + $0x1ac] sm:$0xf] %v567
                %v569 = vld [vmem:[%s351 + $0x360] sm:$0xf]
                %570 = vst [vmem:[%s352 + $0x1b0] sm:$0xf] %v569
                %v571 = vld [vmem:[%s351 + $0x364] sm:$0xf]
                %572 = vst [vmem:[%s352 + $0x1b4] sm:$0xf] %v571
                %v573 = vld [vmem:[%s351 + $0x368] sm:$0xf]
                %574 = vst [vmem:[%s352 + $0x1b8] sm:$0xf] %v573
                %v575 = vld [vmem:[%s351 + $0x36c] sm:$0xf]
                %576 = vst [vmem:[%s352 + $0x1bc] sm:$0xf] %v575
                %v577 = vld [vmem:[%s351 + $0x380] sm:$0xf]
                %578 = vst [vmem:[%s352 + $0x1c0] sm:$0xf] %v577
                %v579 = vld [vmem:[%s351 + $0x384] sm:$0xf]
                %580 = vst [vmem:[%s352 + $0x1c4] sm:$0xf] %v579
                %v581 = vld [vmem:[%s351 + $0x388] sm:$0xf]
                %582 = vst [vmem:[%s352 + $0x1c8] sm:$0xf] %v581
                %v583 = vld [vmem:[%s351 + $0x38c] sm:$0xf]
                %584 = vst [vmem:[%s352 + $0x1cc] sm:$0xf] %v583
                %v585 = vld [vmem:[%s351 + $0x3a0] sm:$0xf]
                %586 = vst [vmem:[%s352 + $0x1d0] sm:$0xf] %v585
                %v587 = vld [vmem:[%s351 + $0x3a4] sm:$0xf]
                %588 = vst [vmem:[%s352 + $0x1d4] sm:$0xf] %v587
                %v589 = vld [vmem:[%s351 + $0x3a8] sm:$0xf]
                %590 = vst [vmem:[%s352 + $0x1d8] sm:$0xf] %v589
                %v591 = vld [vmem:[%s351 + $0x3ac] sm:$0xf]
                %592 = vst [vmem:[%s352 + $0x1dc] sm:$0xf] %v591
                %v593 = vld [vmem:[%s351 + $0x3c0] sm:$0xf]
                %594 = vst [vmem:[%s352 + $0x1e0] sm:$0xf] %v593
                %v595 = vld [vmem:[%s351 + $0x3c4] sm:$0xf]
                %596 = vst [vmem:[%s352 + $0x1e4] sm:$0xf] %v595
                %v597 = vld [vmem:[%s351 + $0x3c8] sm:$0xf]
                %598 = vst [vmem:[%s352 + $0x1e8] sm:$0xf] %v597
                %v599 = vld [vmem:[%s351 + $0x3cc] sm:$0xf]
                %600 = vst [vmem:[%s352 + $0x1ec] sm:$0xf] %v599
                %v601 = vld [vmem:[%s351 + $0x3e0] sm:$0xf]
                %602 = vst [vmem:[%s352 + $0x1f0] sm:$0xf] %v601
                %v603 = vld [vmem:[%s351 + $0x3e4] sm:$0xf]
                %604 = vst [vmem:[%s352 + $0x1f4] sm:$0xf] %v603
                %v605 = vld [vmem:[%s351 + $0x3e8] sm:$0xf]
                %606 = vst [vmem:[%s352 + $0x1f8] sm:$0xf] %v605
                %v607 = vld [vmem:[%s351 + $0x3ec] sm:$0xf]
                %608 = vst [vmem:[%s352 + $0x1fc] sm:$0xf] %v607
              $region77: #{convnet_forward.1} parent=71 // loop_footer
                %s350 = sadd.s32 1, %s346
              $region78: #{convnet_forward.1} parent=71 // loop_footer_branch
                %345 = sbr.rel target = $region74
              $region79: #{convnet_forward.1} parent=71 // loop_exit
                _
            $region72: #{convnet_forward.1} parent=63 // pred_fallthru
              _
          $region64: #{convnet_forward.1} parent=59 // pred_fallthru
            _
          %884 = vnop
        $region60: #{convnet_forward.1} parent=55 // pred_fallthru
          _
      $region56: #{convnet_forward.1} parent=5 // pred_fallthru
        _
      %p885 = scmp.le.s32.totalorder 1, %s17
      %p886 = scmp.lt.s32.totalorder %s17, 3
      %p887 = pnand %p885, %p886
      %p888 = pneg %p887
      // Predicated region
      $region98: #{convnet_forward.1} parent=5 // pred_check
        _
      $region99: #{convnet_forward.1} parent=5 // pred_check_branch
        %890 = sbr.rel (%p887) target = $region101
      $region100: #{convnet_forward.1} parent=5 // pred_region
        %s891 = ssub.s32 %s17, 1
        %s892 = sand.u32 %s30, 1
        %s893 = sand.u32 %s30, 1
        %s894 = smul.addr %s893, 512
        %s895 = scalar_lea.vmem [#allocation2], %s894
        // Predicated region
        $region102: #{convnet_forward.1} parent=100 // pred_check
          %p896 = pneg %p43
        $region103: #{convnet_forward.1} parent=100 // pred_check_branch
          %898 = sbr.rel (%p896) target = $region105
        $region104: #{convnet_forward.1} parent=100 // pred_region
          _
        $region105: #{convnet_forward.1} parent=100 // pred_fallthru
          _
        %s899 = sand.u32 %s30, 1
        %s900 = sand.u32 %s30, 1
        %s901 = smul.addr %s900, 512
        %s902 = scalar_lea.vmem [#allocation2], %s901
        %p903 = pneg %p43
        %p904 = pneg %p40
        %p905 = pneg %p64
        %p906 = pneg %p61
        %p907 = pneg %p85
        %p908 = pneg %p82
        %p909 = pneg %p106
        %p910 = pneg %p103
        %p911 = pneg %p127
        %p912 = pneg %p124
        %p913 = pneg %p148
        %p914 = pneg %p145
        %p915 = pneg %p169
        %p916 = pneg %p166
        %p917 = pneg %p190
        %p918 = pneg %p187
        %p919 = pneg %p211
        %p920 = pneg %p208
        %p921 = pneg %p232
        %p922 = pneg %p229
        %p923 = pneg %p253
        %p924 = pneg %p250
        %p925 = pneg %p279
        %p926 = pneg %p276
        %s927 = smul.u32 4, %s22
        %p928 = scmp.lt.s32.totalorder %s927, 7
        %s929 = scalar_select %p928, %s927, 7
        %s930 = smul.addr %s929, 8
        %s931 = scalar_lea.vmem %s11, %s930
        %s932 = smul.u32 4, %s22
        %s933 = smul.u32 4, %s22
        %p934 = scmp.lt.s32.totalorder %s933, 7
        %s935 = scalar_select %p934, %s933, 7
        %s936 = smul.addr %s935, 8
        %s937 = scalar_lea.vmem %s11, %s936
        %s938 = smul.u32 4, %s22
        %v940 = vld [vmem:[%s895] sm:$0xf]
        %v941 = vld [vmem:[%s895 + $0x4] sm:$0xf]
        %v942 = vld [vmem:[%s895 + $0x8] sm:$0xf]
        %v943 = vld [vmem:[%s895 + $0xc] sm:$0xf]
        %v944 = vld [vmem:[%s895 + $0x10] sm:$0xf]
        %v945 = vld [vmem:[%s895 + $0x14] sm:$0xf]
        %v946 = vld [vmem:[%s895 + $0x18] sm:$0xf]
        %v947 = vld [vmem:[%s895 + $0x1c] sm:$0xf]
        %v948 = vld [vmem:[%s895 + $0x20] sm:$0xf]
        %v949 = vld [vmem:[%s895 + $0x24] sm:$0xf]
        %v950 = vld [vmem:[%s895 + $0x28] sm:$0xf]
        %v951 = vld [vmem:[%s895 + $0x2c] sm:$0xf]
        %v952 = vld [vmem:[%s895 + $0x30] sm:$0xf]
        %v953 = vld [vmem:[%s895 + $0x34] sm:$0xf]
        %v954 = vld [vmem:[%s895 + $0x38] sm:$0xf]
        %v955 = vld [vmem:[%s895 + $0x3c] sm:$0xf]
        %v956 = vld [vmem:[%s895 + $0x40] sm:$0xf]
        %v957 = vld [vmem:[%s895 + $0x44] sm:$0xf]
        %v958 = vld [vmem:[%s895 + $0x48] sm:$0xf]
        %v959 = vld [vmem:[%s895 + $0x4c] sm:$0xf]
        %v960 = vld [vmem:[%s895 + $0x50] sm:$0xf]
        %v961 = vld [vmem:[%s895 + $0x54] sm:$0xf]
        %v962 = vld [vmem:[%s895 + $0x58] sm:$0xf]
        %v963 = vld [vmem:[%s895 + $0x5c] sm:$0xf]
        %v964 = vld [vmem:[%s895 + $0x60] sm:$0xf]
        %v965 = vld [vmem:[%s895 + $0x64] sm:$0xf]
        %v966 = vld [vmem:[%s895 + $0x68] sm:$0xf]
        %v967 = vld [vmem:[%s895 + $0x6c] sm:$0xf]
        %v968 = vld [vmem:[%s895 + $0x70] sm:$0xf]
        %v969 = vld [vmem:[%s895 + $0x74] sm:$0xf]
        %v970 = vld [vmem:[%s895 + $0x78] sm:$0xf]
        %v971 = vld [vmem:[%s895 + $0x7c] sm:$0xf]
        %v972 = vld [vmem:[%s895 + $0x80] sm:$0xf]
        %v973 = vld [vmem:[%s895 + $0x84] sm:$0xf]
        %v974 = vld [vmem:[%s895 + $0x88] sm:$0xf]
        %v975 = vld [vmem:[%s895 + $0x8c] sm:$0xf]
        %v976 = vld [vmem:[%s895 + $0x90] sm:$0xf]
        %v977 = vld [vmem:[%s895 + $0x94] sm:$0xf]
        %v978 = vld [vmem:[%s895 + $0x98] sm:$0xf]
        %v979 = vld [vmem:[%s895 + $0x9c] sm:$0xf]
        %v980 = vld [vmem:[%s895 + $0xa0] sm:$0xf]
        %v981 = vld [vmem:[%s895 + $0xa4] sm:$0xf]
        %v982 = vld [vmem:[%s895 + $0xa8] sm:$0xf]
        %v983 = vld [vmem:[%s895 + $0xac] sm:$0xf]
        %v984 = vld [vmem:[%s895 + $0xb0] sm:$0xf]
        %v985 = vld [vmem:[%s895 + $0xb4] sm:$0xf]
        %v986 = vld [vmem:[%s895 + $0xb8] sm:$0xf]
        %v987 = vld [vmem:[%s895 + $0xbc] sm:$0xf]
        %v988 = vld [vmem:[%s895 + $0xc0] sm:$0xf]
        %v989 = vld [vmem:[%s895 + $0xc4] sm:$0xf]
        %v990 = vld [vmem:[%s895 + $0xc8] sm:$0xf]
        %v991 = vld [vmem:[%s895 + $0xcc] sm:$0xf]
        %v992 = vld [vmem:[%s895 + $0xd0] sm:$0xf]
        %v993 = vld [vmem:[%s895 + $0xd4] sm:$0xf]
        %v994 = vld [vmem:[%s895 + $0xd8] sm:$0xf]
        %v995 = vld [vmem:[%s895 + $0xdc] sm:$0xf]
        %v996 = vld [vmem:[%s895 + $0xe0] sm:$0xf]
        %v997 = vld [vmem:[%s895 + $0xe4] sm:$0xf]
        %v998 = vld [vmem:[%s895 + $0xe8] sm:$0xf]
        %v999 = vld [vmem:[%s895 + $0xec] sm:$0xf]
        %v1000 = vld [vmem:[%s895 + $0xf0] sm:$0xf]
        %v1001 = vld [vmem:[%s895 + $0xf4] sm:$0xf]
        %v1002 = vld [vmem:[%s895 + $0xf8] sm:$0xf]
        %v1003 = vld [vmem:[%s895 + $0xfc] sm:$0xf]
        %v1004 = vld [vmem:[%s895 + $0x100] sm:$0xf]
        %v1005 = vld [vmem:[%s895 + $0x104] sm:$0xf]
        %v1006 = vld [vmem:[%s895 + $0x108] sm:$0xf]
        %v1007 = vld [vmem:[%s895 + $0x10c] sm:$0xf]
        %v1008 = vld [vmem:[%s895 + $0x110] sm:$0xf]
        %v1009 = vld [vmem:[%s895 + $0x114] sm:$0xf]
        %v1010 = vld [vmem:[%s895 + $0x118] sm:$0xf]
        %v1011 = vld [vmem:[%s895 + $0x11c] sm:$0xf]
        %v1012 = vld [vmem:[%s895 + $0x120] sm:$0xf]
        %v1013 = vld [vmem:[%s895 + $0x124] sm:$0xf]
        %v1014 = vld [vmem:[%s895 + $0x128] sm:$0xf]
        %v1015 = vld [vmem:[%s895 + $0x12c] sm:$0xf]
        %v1016 = vld [vmem:[%s895 + $0x130] sm:$0xf]
        %v1017 = vld [vmem:[%s895 + $0x134] sm:$0xf]
        %v1018 = vld [vmem:[%s895 + $0x138] sm:$0xf]
        %v1019 = vld [vmem:[%s895 + $0x13c] sm:$0xf]
        %v1020 = vld [vmem:[%s895 + $0x140] sm:$0xf]
        %v1021 = vld [vmem:[%s895 + $0x144] sm:$0xf]
        %v1022 = vld [vmem:[%s895 + $0x148] sm:$0xf]
        %v1023 = vld [vmem:[%s895 + $0x14c] sm:$0xf]
        %v1024 = vld [vmem:[%s895 + $0x150] sm:$0xf]
        %v1025 = vld [vmem:[%s895 + $0x154] sm:$0xf]
        %v1026 = vld [vmem:[%s895 + $0x158] sm:$0xf]
        %v1027 = vld [vmem:[%s895 + $0x15c] sm:$0xf]
        %v1028 = vld [vmem:[%s895 + $0x160] sm:$0xf]
        %v1029 = vld [vmem:[%s895 + $0x164] sm:$0xf]
        %v1030 = vld [vmem:[%s895 + $0x168] sm:$0xf]
        %v1031 = vld [vmem:[%s895 + $0x16c] sm:$0xf]
        %v1032 = vld [vmem:[%s895 + $0x170] sm:$0xf]
        %v1033 = vld [vmem:[%s895 + $0x174] sm:$0xf]
        %v1034 = vld [vmem:[%s895 + $0x178] sm:$0xf]
        %v1035 = vld [vmem:[%s895 + $0x17c] sm:$0xf]
        %v1036 = vld [vmem:[%s895 + $0x180] sm:$0xf]
        %v1037 = vld [vmem:[%s895 + $0x184] sm:$0xf]
        %v1038 = vld [vmem:[%s895 + $0x188] sm:$0xf]
        %v1039 = vld [vmem:[%s895 + $0x18c] sm:$0xf]
        %v1040 = vld [vmem:[%s895 + $0x190] sm:$0xf]
        %v1041 = vld [vmem:[%s895 + $0x194] sm:$0xf]
        %v1042 = vld [vmem:[%s895 + $0x198] sm:$0xf]
        %v1043 = vld [vmem:[%s895 + $0x19c] sm:$0xf]
        %v1044 = vld [vmem:[%s895 + $0x1a0] sm:$0xf]
        %v1045 = vld [vmem:[%s895 + $0x1a4] sm:$0xf]
        %v1046 = vld [vmem:[%s895 + $0x1a8] sm:$0xf]
        %v1047 = vld [vmem:[%s895 + $0x1ac] sm:$0xf]
        %v1048 = vld [vmem:[%s895 + $0x1b0] sm:$0xf]
        %v1049 = vld [vmem:[%s895 + $0x1b4] sm:$0xf]
        %v1050 = vld [vmem:[%s895 + $0x1b8] sm:$0xf]
        %v1051 = vld [vmem:[%s895 + $0x1bc] sm:$0xf]
        %v1052 = vld [vmem:[%s895 + $0x1c0] sm:$0xf]
        %v1053 = vld [vmem:[%s895 + $0x1c4] sm:$0xf]
        %v1054 = vld [vmem:[%s895 + $0x1c8] sm:$0xf]
        %v1055 = vld [vmem:[%s895 + $0x1cc] sm:$0xf]
        %v1056 = vld [vmem:[%s895 + $0x1d0] sm:$0xf]
        %v1057 = vld [vmem:[%s895 + $0x1d4] sm:$0xf]
        %v1058 = vld [vmem:[%s895 + $0x1d8] sm:$0xf]
        %v1059 = vld [vmem:[%s895 + $0x1dc] sm:$0xf]
        %v1060 = vld [vmem:[%s895 + $0x1e0] sm:$0xf]
        %v1061 = vld [vmem:[%s895 + $0x1e4] sm:$0xf]
        %v1062 = vld [vmem:[%s895 + $0x1e8] sm:$0xf]
        %v1063 = vld [vmem:[%s895 + $0x1ec] sm:$0xf]
        %v1064 = vld [vmem:[%s895 + $0x1f0] sm:$0xf]
        %v1065 = vld [vmem:[%s895 + $0x1f4] sm:$0xf]
        %v1066 = vld [vmem:[%s895 + $0x1f8] sm:$0xf]
        %v1067 = vld [vmem:[%s895 + $0x1fc] sm:$0xf]
        %v1180 = vunpack.c.l.b16 %v940
        %v1181 = vunpack.c.l.b16 %v941
        %v1182 = vunpack.c.l.b16 %v942
        %v1183 = vunpack.c.l.b16 %v943
        %v1184 = vunpack.c.l.b16 %v944
        %v1185 = vunpack.c.l.b16 %v945
        %v1186 = vunpack.c.l.b16 %v946
        %v1187 = vunpack.c.l.b16 %v947
        %v1188 = vunpack.c.l.b16 %v948
        %v1189 = vunpack.c.l.b16 %v949
        %v1190 = vunpack.c.l.b16 %v950
        %v1191 = vunpack.c.l.b16 %v951
        %v1192 = vunpack.c.l.b16 %v952
        %v1193 = vunpack.c.l.b16 %v953
        %v1194 = vunpack.c.l.b16 %v954
        %v1195 = vunpack.c.l.b16 %v955
        %v1196 = vunpack.c.l.b16 %v956
        %v1197 = vunpack.c.l.b16 %v957
        %v1198 = vunpack.c.l.b16 %v958
        %v1199 = vunpack.c.l.b16 %v959
        %v1200 = vunpack.c.l.b16 %v960
        %v1201 = vunpack.c.l.b16 %v961
        %v1202 = vunpack.c.l.b16 %v962
        %v1203 = vunpack.c.l.b16 %v963
        %v1204 = vunpack.c.l.b16 %v964
        %v1205 = vunpack.c.l.b16 %v965
        %v1206 = vunpack.c.l.b16 %v966
        %v1207 = vunpack.c.l.b16 %v967
        %v1208 = vunpack.c.l.b16 %v968
        %v1209 = vunpack.c.l.b16 %v969
        %v1210 = vunpack.c.l.b16 %v970
        %v1211 = vunpack.c.l.b16 %v971
        %v1212 = vunpack.c.l.b16 %v972
        %v1213 = vunpack.c.l.b16 %v973
        %v1214 = vunpack.c.l.b16 %v974
        %v1215 = vunpack.c.l.b16 %v975
        %v1216 = vunpack.c.l.b16 %v976
        %v1217 = vunpack.c.l.b16 %v977
        %v1218 = vunpack.c.l.b16 %v978
        %v1219 = vunpack.c.l.b16 %v979
        %v1220 = vunpack.c.l.b16 %v980
        %v1221 = vunpack.c.l.b16 %v981
        %v1222 = vunpack.c.l.b16 %v982
        %v1223 = vunpack.c.l.b16 %v983
        %v1224 = vunpack.c.l.b16 %v984
        %v1225 = vunpack.c.l.b16 %v985
        %v1226 = vunpack.c.l.b16 %v986
        %v1227 = vunpack.c.l.b16 %v987
        %v1228 = vunpack.c.l.b16 %v988
        %v1229 = vunpack.c.l.b16 %v989
        %v1230 = vunpack.c.l.b16 %v990
        %v1231 = vunpack.c.l.b16 %v991
        %v1232 = vunpack.c.l.b16 %v992
        %v1233 = vunpack.c.l.b16 %v993
        %v1234 = vunpack.c.l.b16 %v994
        %v1235 = vunpack.c.l.b16 %v995
        %v1236 = vunpack.c.l.b16 %v996
        %v1237 = vunpack.c.l.b16 %v997
        %v1238 = vunpack.c.l.b16 %v998
        %v1239 = vunpack.c.l.b16 %v999
        %v1240 = vunpack.c.l.b16 %v1000
        %v1241 = vunpack.c.l.b16 %v1001
        %v1242 = vunpack.c.l.b16 %v1002
        %v1243 = vunpack.c.l.b16 %v1003
        %v1244 = vunpack.c.l.b16 %v1004
        %v1245 = vunpack.c.l.b16 %v1005
        %v1246 = vunpack.c.l.b16 %v1006
        %v1247 = vunpack.c.l.b16 %v1007
        %v1248 = vunpack.c.l.b16 %v1008
        %v1249 = vunpack.c.l.b16 %v1009
        %v1250 = vunpack.c.l.b16 %v1010
        %v1251 = vunpack.c.l.b16 %v1011
        %v1252 = vunpack.c.l.b16 %v1012
        %v1253 = vunpack.c.l.b16 %v1013
        %v1254 = vunpack.c.l.b16 %v1014
        %v1255 = vunpack.c.l.b16 %v1015
        %v1256 = vunpack.c.l.b16 %v1016
        %v1257 = vunpack.c.l.b16 %v1017
        %v1258 = vunpack.c.l.b16 %v1018
        %v1259 = vunpack.c.l.b16 %v1019
        %v1260 = vunpack.c.l.b16 %v1020
        %v1261 = vunpack.c.l.b16 %v1021
        %v1262 = vunpack.c.l.b16 %v1022
        %v1263 = vunpack.c.l.b16 %v1023
        %v1264 = vunpack.c.l.b16 %v1024
        %v1265 = vunpack.c.l.b16 %v1025
        %v1266 = vunpack.c.l.b16 %v1026
        %v1267 = vunpack.c.l.b16 %v1027
        %v1268 = vunpack.c.l.b16 %v1028
        %v1269 = vunpack.c.l.b16 %v1029
        %v1270 = vunpack.c.l.b16 %v1030
        %v1271 = vunpack.c.l.b16 %v1031
        %v1272 = vunpack.c.l.b16 %v1032
        %v1273 = vunpack.c.l.b16 %v1033
        %v1274 = vunpack.c.l.b16 %v1034
        %v1275 = vunpack.c.l.b16 %v1035
        %v1276 = vunpack.c.l.b16 %v1036
        %v1277 = vunpack.c.l.b16 %v1037
        %v1278 = vunpack.c.l.b16 %v1038
        %v1279 = vunpack.c.l.b16 %v1039
        %v1280 = vunpack.c.l.b16 %v1040
        %v1281 = vunpack.c.l.b16 %v1041
        %v1282 = vunpack.c.l.b16 %v1042
        %v1283 = vunpack.c.l.b16 %v1043
        %v1284 = vunpack.c.l.b16 %v1044
        %v1285 = vunpack.c.l.b16 %v1045
        %v1286 = vunpack.c.l.b16 %v1046
        %v1287 = vunpack.c.l.b16 %v1047
        %v1288 = vunpack.c.l.b16 %v1048
        %v1289 = vunpack.c.l.b16 %v1049
        %v1290 = vunpack.c.l.b16 %v1050
        %v1291 = vunpack.c.l.b16 %v1051
        %v1292 = vpack.c.b16 %v1181, %v1180
        %v1293 = vpack.c.b16 %v1183, %v1182
        %v1294 = vpack.c.b16 %v1185, %v1184
        %v1295 = vpack.c.b16 %v1187, %v1186
        %v1296 = vpack.c.b16 %v1189, %v1188
        %v1297 = vpack.c.b16 %v1191, %v1190
        %v1298 = vpack.c.b16 %v1193, %v1192
        %v1299 = vpack.c.b16 %v1195, %v1194
        %v1300 = vpack.c.b16 %v1197, %v1196
        %v1301 = vpack.c.b16 %v1199, %v1198
        %v1302 = vpack.c.b16 %v1201, %v1200
        %v1303 = vpack.c.b16 %v1203, %v1202
        %v1304 = vpack.c.b16 %v1205, %v1204
        %v1305 = vpack.c.b16 %v1207, %v1206
        %v1306 = vpack.c.b16 %v1209, %v1208
        %v1307 = vpack.c.b16 %v1211, %v1210
        %v1308 = vpack.c.b16 %v1213, %v1212
        %v1309 = vpack.c.b16 %v1215, %v1214
        %v1310 = vpack.c.b16 %v1217, %v1216
        %v1311 = vpack.c.b16 %v1219, %v1218
        %v1312 = vpack.c.b16 %v1221, %v1220
        %v1313 = vpack.c.b16 %v1223, %v1222
        %v1314 = vpack.c.b16 %v1225, %v1224
        %v1315 = vpack.c.b16 %v1227, %v1226
        %v1316 = vpack.c.b16 %v1229, %v1228
        %v1317 = vpack.c.b16 %v1231, %v1230
        %v1318 = vpack.c.b16 %v1233, %v1232
        %v1319 = vpack.c.b16 %v1235, %v1234
        %v1320 = vpack.c.b16 %v1237, %v1236
        %v1321 = vpack.c.b16 %v1239, %v1238
        %v1322 = vpack.c.b16 %v1241, %v1240
        %v1323 = vpack.c.b16 %v1243, %v1242
        %v1324 = vpack.c.b16 %v1245, %v1244
        %v1325 = vpack.c.b16 %v1247, %v1246
        %v1326 = vpack.c.b16 %v1249, %v1248
        %v1327 = vpack.c.b16 %v1251, %v1250
        %v1328 = vpack.c.b16 %v1253, %v1252
        %v1329 = vpack.c.b16 %v1255, %v1254
        %v1330 = vpack.c.b16 %v1257, %v1256
        %v1331 = vpack.c.b16 %v1259, %v1258
        %v1332 = vpack.c.b16 %v1261, %v1260
        %v1333 = vpack.c.b16 %v1263, %v1262
        %v1334 = vpack.c.b16 %v1265, %v1264
        %v1335 = vpack.c.b16 %v1267, %v1266
        %v1336 = vpack.c.b16 %v1269, %v1268
        %v1337 = vpack.c.b16 %v1271, %v1270
        %v1338 = vpack.c.b16 %v1273, %v1272
        %v1339 = vpack.c.b16 %v1275, %v1274
        %v1340 = vpack.c.b16 %v1277, %v1276
        %v1341 = vpack.c.b16 %v1279, %v1278
        %v1342 = vpack.c.b16 %v1281, %v1280
        %v1343 = vpack.c.b16 %v1283, %v1282
        %v1344 = vpack.c.b16 %v1285, %v1284
        %v1345 = vpack.c.b16 %v1287, %v1286
        %v1346 = vpack.c.b16 %v1289, %v1288
        %v1347 = vpack.c.b16 %v1291, %v1290
        %v1408 = vunpack.c.l.b16 %v1052
        %v1409 = vunpack.c.l.b16 %v1053
        %v1410 = vunpack.c.l.b16 %v1054
        %v1411 = vunpack.c.l.b16 %v1055
        %v1412 = vpack.c.b16 %v1409, %v1408
        %v1413 = vpack.c.b16 %v1411, %v1410
        %v1420 = vunpack.c.l.b16 %v1056
        %v1421 = vunpack.c.l.b16 %v1057
        %v1422 = vunpack.c.l.b16 %v1058
        %v1423 = vunpack.c.l.b16 %v1059
        %v1424 = vpack.c.b16 %v1421, %v1420
        %v1425 = vpack.c.b16 %v1423, %v1422
        %v1432 = vunpack.c.l.b16 %v1060
        %v1433 = vunpack.c.l.b16 %v1061
        %v1434 = vunpack.c.l.b16 %v1062
        %v1435 = vunpack.c.l.b16 %v1063
        %v1436 = vpack.c.b16 %v1433, %v1432
        %v1437 = vpack.c.b16 %v1435, %v1434
        %v1444 = vunpack.c.l.b16 %v1064
        %v1445 = vunpack.c.l.b16 %v1065
        %v1446 = vunpack.c.l.b16 %v1066
        %v1447 = vunpack.c.l.b16 %v1067
        %v1448 = vpack.c.b16 %v1445, %v1444
        %v1449 = vpack.c.b16 %v1447, %v1446
        %v1452 = vld [vmem:[%s1] sm:$0xff]
        %v1453 = vld [vmem:[%s1 + $0x8] sm:$0xff]
        %v1454 = vld [vmem:[%s1 + $0x10] sm:$0xff]
        %v1455 = vld [vmem:[%s1 + $0x18] sm:$0xff]
        %v1456 = vld [vmem:[%s1 + $0x20] sm:$0xff]
        %v1457 = vld [vmem:[%s1 + $0x28] sm:$0xff]
        %v1458 = vld [vmem:[%s1 + $0x30] sm:$0xff]
        %v1459 = vld [vmem:[%s1 + $0x38] sm:$0xff]
        %v1460 = vld [vmem:[%s1 + $0x40] sm:$0xff]
        %v1461 = vld [vmem:[%s1 + $0x48] sm:$0xff]
        %v1462 = vld [vmem:[%s1 + $0x50] sm:$0xff]
        %v1463 = vld [vmem:[%s1 + $0x58] sm:$0xff]
        %v1464 = vld [vmem:[%s1 + $0x60] sm:$0xff]
        %v1465 = vld [vmem:[%s1 + $0x68] sm:$0xff]
        %v1466 = vld [vmem:[%s1 + $0x70] sm:$0xff]
        %v1467 = vld [vmem:[%s1 + $0x78] sm:$0xff]
        %v1468 = vld [vmem:[%s1 + $0x80] sm:$0xff]
        %v1469 = vld [vmem:[%s1 + $0x88] sm:$0xff]
        %v1470 = vld [vmem:[%s1 + $0x90] sm:$0xff]
        %v1471 = vld [vmem:[%s1 + $0x98] sm:$0xff]
        %v1472 = vld [vmem:[%s1 + $0xa0] sm:$0xff]
        %v1473 = vld [vmem:[%s1 + $0xa8] sm:$0xff]
        %v1474 = vld [vmem:[%s1 + $0xb0] sm:$0xff]
        %v1475 = vld [vmem:[%s1 + $0xb8] sm:$0xff]
        %v1476 = vld [vmem:[%s1 + $0xc0] sm:$0xff]
        %v1477 = vld [vmem:[%s1 + $0xc8] sm:$0xff]
        %v1478 = vld [vmem:[%s1 + $0xd0] sm:$0xff]
        %v1479 = vld [vmem:[%s1 + $0xd8] sm:$0xff]
        %v1480 = vld [vmem:[%s1 + $0xe0] sm:$0xff]
        %v1481 = vld [vmem:[%s1 + $0xe8] sm:$0xff]
        %v1482 = vld [vmem:[%s1 + $0xf0] sm:$0xff]
        %v1483 = vld [vmem:[%s1 + $0xf8] sm:$0xff]
        %v1484 = vld [vmem:[%s1 + $0x100] sm:$0xff]
        %v1485 = vld [vmem:[%s1 + $0x108] sm:$0xff]
        %v1486 = vld [vmem:[%s1 + $0x110] sm:$0xff]
        %v1487 = vld [vmem:[%s1 + $0x118] sm:$0xff]
        %v1488 = vld [vmem:[%s1 + $0x120] sm:$0xff]
        %v1489 = vld [vmem:[%s1 + $0x128] sm:$0xff]
        %v1490 = vld [vmem:[%s1 + $0x130] sm:$0xff]
        %v1491 = vld [vmem:[%s1 + $0x138] sm:$0xff]
        %v1492 = vld [vmem:[%s1 + $0x140] sm:$0xff]
        %v1493 = vld [vmem:[%s1 + $0x148] sm:$0xff]
        %v1494 = vld [vmem:[%s1 + $0x150] sm:$0xff]
        %v1495 = vld [vmem:[%s1 + $0x158] sm:$0xff]
        %v1496 = vld [vmem:[%s1 + $0x160] sm:$0xff]
        %v1497 = vld [vmem:[%s1 + $0x168] sm:$0xff]
        %v1498 = vld [vmem:[%s1 + $0x170] sm:$0xff]
        %v1499 = vld [vmem:[%s1 + $0x178] sm:$0xff]
        %v1500 = vld [vmem:[%s1 + $0x180] sm:$0xff]
        %v1501 = vld [vmem:[%s1 + $0x188] sm:$0xff]
        %v1502 = vld [vmem:[%s1 + $0x190] sm:$0xff]
        %v1503 = vld [vmem:[%s1 + $0x198] sm:$0xff]
        %v1504 = vld [vmem:[%s1 + $0x1a0] sm:$0xff]
        %v1505 = vld [vmem:[%s1 + $0x1a8] sm:$0xff]
        %v1506 = vld [vmem:[%s1 + $0x1b0] sm:$0xff]
        %v1507 = vld [vmem:[%s1 + $0x1b8] sm:$0xff]
        %v1508 = vld [vmem:[%s1 + $0x1c0] sm:$0xff]
        %v1509 = vld [vmem:[%s1 + $0x1c8] sm:$0xff]
        %v1510 = vld [vmem:[%s1 + $0x1d0] sm:$0xff]
        %v1511 = vld [vmem:[%s1 + $0x1d8] sm:$0xff]
        %v1512 = vld [vmem:[%s1 + $0x1e0] sm:$0xff]
        %v1513 = vld [vmem:[%s1 + $0x1e8] sm:$0xff]
        %v1514 = vld [vmem:[%s1 + $0x1f0] sm:$0xff]
        %v1515 = vld [vmem:[%s1 + $0x1f8] sm:$0xff]
        %v1516 = vld [vmem:[%s1 + $0x200] sm:$0xff]
        %v1517 = vld [vmem:[%s1 + $0x208] sm:$0xff]
        %v1518 = vld [vmem:[%s1 + $0x210] sm:$0xff]
        %v1519 = vld [vmem:[%s1 + $0x218] sm:$0xff]
        %v1520 = vld [vmem:[%s1 + $0x220] sm:$0xff]
        %v1521 = vld [vmem:[%s1 + $0x228] sm:$0xff]
        %v1522 = vld [vmem:[%s1 + $0x230] sm:$0xff]
        %v1523 = vld [vmem:[%s1 + $0x238] sm:$0xff]
        %v1524 = vld [vmem:[%s1 + $0x240] sm:$0xff]
        %v1525 = vld [vmem:[%s1 + $0x248] sm:$0xff]
        %v1526 = vld [vmem:[%s1 + $0x250] sm:$0xff]
        %v1527 = vld [vmem:[%s1 + $0x258] sm:$0xff]
        %v1528 = vld [vmem:[%s1 + $0x260] sm:$0xff]
        %v1529 = vld [vmem:[%s1 + $0x268] sm:$0xff]
        %v1530 = vld [vmem:[%s1 + $0x270] sm:$0xff]
        %v1531 = vld [vmem:[%s1 + $0x278] sm:$0xff]
        %v1612 = vunpack.c.l.b16 %v1452
        %v1613 = vunpack.c.h.b16 %v1452
        %v1614 = vunpack.c.l.b16 %v1453
        %v1615 = vunpack.c.h.b16 %v1453
        %v1616 = vunpack.c.l.b16 %v1454
        %v1617 = vunpack.c.h.b16 %v1454
        %v1618 = vunpack.c.l.b16 %v1455
        %v1619 = vunpack.c.h.b16 %v1455
        %v1620 = vunpack.c.l.b16 %v1456
        %v1621 = vunpack.c.h.b16 %v1456
        %v1622 = vunpack.c.l.b16 %v1457
        %v1623 = vunpack.c.h.b16 %v1457
        %v1624 = vunpack.c.l.b16 %v1458
        %v1625 = vunpack.c.h.b16 %v1458
        %v1626 = vunpack.c.l.b16 %v1459
        %v1627 = vunpack.c.h.b16 %v1459
        %v1628 = vunpack.c.l.b16 %v1460
        %v1629 = vunpack.c.h.b16 %v1460
        %v1630 = vunpack.c.l.b16 %v1461
        %v1631 = vunpack.c.h.b16 %v1461
        %v1632 = vunpack.c.l.b16 %v1462
        %v1633 = vunpack.c.h.b16 %v1462
        %v1634 = vunpack.c.l.b16 %v1463
        %v1635 = vunpack.c.h.b16 %v1463
        %v1636 = vunpack.c.l.b16 %v1464
        %v1637 = vunpack.c.h.b16 %v1464
        %v1638 = vunpack.c.l.b16 %v1465
        %v1639 = vunpack.c.h.b16 %v1465
        %v1640 = vunpack.c.l.b16 %v1466
        %v1641 = vunpack.c.h.b16 %v1466
        %v1642 = vunpack.c.l.b16 %v1467
        %v1643 = vunpack.c.h.b16 %v1467
        %v1644 = vunpack.c.l.b16 %v1468
        %v1645 = vunpack.c.h.b16 %v1468
        %v1646 = vunpack.c.l.b16 %v1469
        %v1647 = vunpack.c.h.b16 %v1469
        %v1648 = vunpack.c.l.b16 %v1470
        %v1649 = vunpack.c.h.b16 %v1470
        %v1650 = vunpack.c.l.b16 %v1471
        %v1651 = vunpack.c.h.b16 %v1471
        %v1652 = vunpack.c.l.b16 %v1472
        %v1653 = vunpack.c.h.b16 %v1472
        %v1654 = vunpack.c.l.b16 %v1473
        %v1655 = vunpack.c.h.b16 %v1473
        %v1656 = vunpack.c.l.b16 %v1474
        %v1657 = vunpack.c.h.b16 %v1474
        %v1658 = vunpack.c.l.b16 %v1475
        %v1659 = vunpack.c.h.b16 %v1475
        %v1660 = vunpack.c.l.b16 %v1476
        %v1661 = vunpack.c.h.b16 %v1476
        %v1662 = vunpack.c.l.b16 %v1477
        %v1663 = vunpack.c.h.b16 %v1477
        %v1664 = vunpack.c.l.b16 %v1478
        %v1665 = vunpack.c.h.b16 %v1478
        %v1666 = vunpack.c.l.b16 %v1479
        %v1667 = vunpack.c.h.b16 %v1479
        %v1668 = vunpack.c.l.b16 %v1480
        %v1669 = vunpack.c.h.b16 %v1480
        %v1670 = vunpack.c.l.b16 %v1481
        %v1671 = vunpack.c.h.b16 %v1481
        %v1672 = vunpack.c.l.b16 %v1482
        %v1673 = vunpack.c.h.b16 %v1482
        %v1674 = vunpack.c.l.b16 %v1483
        %v1675 = vunpack.c.h.b16 %v1483
        %v1676 = vunpack.c.l.b16 %v1484
        %v1677 = vunpack.c.h.b16 %v1484
        %v1678 = vunpack.c.l.b16 %v1485
        %v1679 = vunpack.c.h.b16 %v1485
        %v1680 = vunpack.c.l.b16 %v1486
        %v1681 = vunpack.c.h.b16 %v1486
        %v1682 = vunpack.c.l.b16 %v1487
        %v1683 = vunpack.c.h.b16 %v1487
        %v1684 = vunpack.c.l.b16 %v1488
        %v1685 = vunpack.c.h.b16 %v1488
        %v1686 = vunpack.c.l.b16 %v1489
        %v1687 = vunpack.c.h.b16 %v1489
        %v1688 = vunpack.c.l.b16 %v1490
        %v1689 = vunpack.c.h.b16 %v1490
        %v1690 = vunpack.c.l.b16 %v1491
        %v1691 = vunpack.c.h.b16 %v1491
        %v1692 = vunpack.c.l.b16 %v1492
        %v1693 = vunpack.c.h.b16 %v1492
        %v1694 = vunpack.c.l.b16 %v1493
        %v1695 = vunpack.c.h.b16 %v1493
        %v1696 = vunpack.c.l.b16 %v1494
        %v1697 = vunpack.c.h.b16 %v1494
        %v1698 = vunpack.c.l.b16 %v1495
        %v1699 = vunpack.c.h.b16 %v1495
        %v1700 = vunpack.c.l.b16 %v1496
        %v1701 = vunpack.c.h.b16 %v1496
        %v1702 = vunpack.c.l.b16 %v1497
        %v1703 = vunpack.c.h.b16 %v1497
        %v1704 = vunpack.c.l.b16 %v1498
        %v1705 = vunpack.c.h.b16 %v1498
        %v1706 = vunpack.c.l.b16 %v1499
        %v1707 = vunpack.c.h.b16 %v1499
        %v1708 = vunpack.c.l.b16 %v1500
        %v1709 = vunpack.c.h.b16 %v1500
        %v1710 = vunpack.c.l.b16 %v1501
        %v1711 = vunpack.c.h.b16 %v1501
        %v1712 = vunpack.c.l.b16 %v1502
        %v1713 = vunpack.c.h.b16 %v1502
        %v1714 = vunpack.c.l.b16 %v1503
        %v1715 = vunpack.c.h.b16 %v1503
        %v1716 = vunpack.c.l.b16 %v1504
        %v1717 = vunpack.c.h.b16 %v1504
        %v1718 = vunpack.c.l.b16 %v1505
        %v1719 = vunpack.c.h.b16 %v1505
        %v1720 = vunpack.c.l.b16 %v1506
        %v1721 = vunpack.c.h.b16 %v1506
        %v1722 = vunpack.c.l.b16 %v1507
        %v1723 = vunpack.c.h.b16 %v1507
        %v1724 = vunpack.c.l.b16 %v1508
        %v1725 = vunpack.c.h.b16 %v1508
        %v1726 = vunpack.c.l.b16 %v1509
        %v1727 = vunpack.c.h.b16 %v1509
        %v1728 = vunpack.c.l.b16 %v1510
        %v1729 = vunpack.c.h.b16 %v1510
        %v1730 = vunpack.c.l.b16 %v1511
        %v1731 = vunpack.c.h.b16 %v1511
        %v1732 = vunpack.c.l.b16 %v1512
        %v1733 = vunpack.c.h.b16 %v1512
        %v1734 = vunpack.c.l.b16 %v1513
        %v1735 = vunpack.c.h.b16 %v1513
        %v1736 = vunpack.c.l.b16 %v1514
        %v1737 = vunpack.c.h.b16 %v1514
        %v1738 = vunpack.c.l.b16 %v1515
        %v1739 = vunpack.c.h.b16 %v1515
        %v1740 = vunpack.c.l.b16 %v1516
        %v1741 = vunpack.c.h.b16 %v1516
        %v1742 = vunpack.c.l.b16 %v1517
        %v1743 = vunpack.c.h.b16 %v1517
        %v1744 = vunpack.c.l.b16 %v1518
        %v1745 = vunpack.c.h.b16 %v1518
        %v1746 = vunpack.c.l.b16 %v1519
        %v1747 = vunpack.c.h.b16 %v1519
        %v1748 = vunpack.c.l.b16 %v1520
        %v1749 = vunpack.c.h.b16 %v1520
        %v1750 = vunpack.c.l.b16 %v1521
        %v1751 = vunpack.c.h.b16 %v1521
        %v1752 = vunpack.c.l.b16 %v1522
        %v1753 = vunpack.c.h.b16 %v1522
        %v1754 = vunpack.c.l.b16 %v1523
        %v1755 = vunpack.c.h.b16 %v1523
        %v1756 = vunpack.c.l.b16 %v1524
        %v1757 = vunpack.c.h.b16 %v1524
        %v1758 = vunpack.c.l.b16 %v1525
        %v1759 = vunpack.c.h.b16 %v1525
        %v1760 = vunpack.c.l.b16 %v1526
        %v1761 = vunpack.c.h.b16 %v1526
        %v1762 = vunpack.c.l.b16 %v1527
        %v1763 = vunpack.c.h.b16 %v1527
        %v1764 = vunpack.c.l.b16 %v1528
        %v1765 = vunpack.c.h.b16 %v1528
        %v1766 = vunpack.c.l.b16 %v1529
        %v1767 = vunpack.c.h.b16 %v1529
        %v1768 = vunpack.c.l.b16 %v1530
        %v1769 = vunpack.c.h.b16 %v1530
        %v1770 = vunpack.c.l.b16 %v1531
        %v1771 = vunpack.c.h.b16 %v1531
        %v1772 = vpack.c.b16 %v1614, %v1612
        %v1773 = vpack.c.b16 %v1615, %v1613
        %v1774 = vpack.c.b16 %v1618, %v1616
        %v1775 = vpack.c.b16 %v1619, %v1617
        %v1776 = vpack.c.b16 %v1622, %v1620
        %v1777 = vpack.c.b16 %v1623, %v1621
        %v1778 = vpack.c.b16 %v1626, %v1624
        %v1779 = vpack.c.b16 %v1627, %v1625
        %v1780 = vpack.c.b16 %v1630, %v1628
        %v1781 = vpack.c.b16 %v1631, %v1629
        %v1782 = vpack.c.b16 %v1634, %v1632
        %v1783 = vpack.c.b16 %v1635, %v1633
        %v1784 = vpack.c.b16 %v1638, %v1636
        %v1785 = vpack.c.b16 %v1639, %v1637
        %v1786 = vpack.c.b16 %v1642, %v1640
        %v1787 = vpack.c.b16 %v1643, %v1641
        %v1788 = vpack.c.b16 %v1646, %v1644
        %v1789 = vpack.c.b16 %v1647, %v1645
        %v1790 = vpack.c.b16 %v1650, %v1648
        %v1791 = vpack.c.b16 %v1651, %v1649
        %v1792 = vpack.c.b16 %v1654, %v1652
        %v1793 = vpack.c.b16 %v1655, %v1653
        %v1794 = vpack.c.b16 %v1658, %v1656
        %v1795 = vpack.c.b16 %v1659, %v1657
        %v1796 = vpack.c.b16 %v1662, %v1660
        %v1797 = vpack.c.b16 %v1663, %v1661
        %v1798 = vpack.c.b16 %v1666, %v1664
        %v1799 = vpack.c.b16 %v1667, %v1665
        %v1800 = vpack.c.b16 %v1670, %v1668
        %v1801 = vpack.c.b16 %v1671, %v1669
        %v1802 = vpack.c.b16 %v1674, %v1672
        %v1803 = vpack.c.b16 %v1675, %v1673
        %v1804 = vpack.c.b16 %v1678, %v1676
        %v1805 = vpack.c.b16 %v1679, %v1677
        %v1806 = vpack.c.b16 %v1682, %v1680
        %v1807 = vpack.c.b16 %v1683, %v1681
        %v1808 = vpack.c.b16 %v1686, %v1684
        %v1809 = vpack.c.b16 %v1687, %v1685
        %v1810 = vpack.c.b16 %v1690, %v1688
        %v1811 = vpack.c.b16 %v1691, %v1689
        %v1812 = vpack.c.b16 %v1694, %v1692
        %v1813 = vpack.c.b16 %v1695, %v1693
        %v1814 = vpack.c.b16 %v1698, %v1696
        %v1815 = vpack.c.b16 %v1699, %v1697
        %v1816 = vpack.c.b16 %v1702, %v1700
        %v1817 = vpack.c.b16 %v1703, %v1701
        %v1818 = vpack.c.b16 %v1706, %v1704
        %v1819 = vpack.c.b16 %v1707, %v1705
        %v1820 = vpack.c.b16 %v1710, %v1708
        %v1821 = vpack.c.b16 %v1711, %v1709
        %v1822 = vpack.c.b16 %v1714, %v1712
        %v1823 = vpack.c.b16 %v1715, %v1713
        %v1824 = vpack.c.b16 %v1718, %v1716
        %v1825 = vpack.c.b16 %v1719, %v1717
        %v1826 = vpack.c.b16 %v1722, %v1720
        %v1827 = vpack.c.b16 %v1723, %v1721
        %v1828 = vpack.c.b16 %v1726, %v1724
        %v1829 = vpack.c.b16 %v1727, %v1725
        %v1830 = vpack.c.b16 %v1730, %v1728
        %v1831 = vpack.c.b16 %v1731, %v1729
        %v1832 = vpack.c.b16 %v1734, %v1732
        %v1833 = vpack.c.b16 %v1735, %v1733
        %v1834 = vpack.c.b16 %v1738, %v1736
        %v1835 = vpack.c.b16 %v1739, %v1737
        %v1836 = vpack.c.b16 %v1742, %v1740
        %v1837 = vpack.c.b16 %v1743, %v1741
        %v1838 = vpack.c.b16 %v1746, %v1744
        %v1839 = vpack.c.b16 %v1747, %v1745
        %v1840 = vpack.c.b16 %v1750, %v1748
        %v1841 = vpack.c.b16 %v1751, %v1749
        %v1842 = vpack.c.b16 %v1754, %v1752
        %v1843 = vpack.c.b16 %v1755, %v1753
        %v1844 = vpack.c.b16 %v1758, %v1756
        %v1845 = vpack.c.b16 %v1759, %v1757
        %v1846 = vpack.c.b16 %v1762, %v1760
        %v1847 = vpack.c.b16 %v1763, %v1761
        %v1848 = vpack.c.b16 %v1766, %v1764
        %v1849 = vpack.c.b16 %v1767, %v1765
        %v1850 = vpack.c.b16 %v1770, %v1768
        %v1851 = vpack.c.b16 %v1771, %v1769
        %1932 = vmatprep.subr.bf16.mxu0 %v1773
        %1933 = vmatpush1.bf16.msra.mxu0 %v1772
        %1934 = vmatprep.subr.bf16.mxu0 %v1775
        %1935 = vmatpush1.bf16.msra.mxu0 %v1774
        %1936 = vmatprep.subr.bf16.mxu0 %v1777
        %1937 = vmatpush1.bf16.msra.mxu0 %v1776
        %1938 = vmatprep.subr.bf16.mxu0 %v1779
        %1939 = vmatpush1.bf16.msra.mxu0 %v1778
        %1940 = vmatprep.subr.bf16.mxu0 %v1781
        %1941 = vmatpush1.bf16.msra.mxu0 %v1780
        %1942 = vmatprep.subr.bf16.mxu0 %v1783
        %1943 = vmatpush1.bf16.msra.mxu0 %v1782
        %1944 = vmatprep.subr.bf16.mxu0 %v1785
        %1945 = vmatpush1.bf16.msra.mxu0 %v1784
        %1946 = vmatprep.subr.bf16.mxu0 %v1787
        %1947 = vmatpush1.bf16.msra.mxu0 %v1786
        %1948 = vmatprep.subr.bf16.mxu0 %v1789
        %1949 = vmatpush1.bf16.msra.mxu0 %v1788
        %1950 = vmatprep.subr.bf16.mxu0 %v1791
        %1951 = vmatpush1.bf16.msra.mxu0 %v1790
        %1952 = vmatprep.subr.bf16.mxu0 %v1793
        %1953 = vmatpush1.bf16.msra.mxu0 %v1792
        %1954 = vmatprep.subr.bf16.mxu0 %v1795
        %1955 = vmatpush1.bf16.msra.mxu0 %v1794
        %1956 = vmatprep.subr.bf16.mxu0 %v1797
        %1957 = vmatpush1.bf16.msra.mxu0 %v1796
        %1958 = vmatprep.subr.bf16.mxu0 %v1799
        %1959 = vmatpush1.bf16.msra.mxu0 %v1798
        %1960 = vmatprep.subr.bf16.mxu0 %v1801
        %1961 = vmatpush1.bf16.msra.mxu0 %v1800
        %1962 = vmatprep.subr.bf16.mxu0 %v1803
        %1963 = vmatpush1.bf16.msra.mxu0 %v1802
        %1964 = vmatprep.mubr.bf16.mxu0 %v1294
        %1965 = vmatmul.mubr.bf16.gmra.mrb[0].mxu0 %v1292
        %v1966 = vpop.f32.mrb[0].mxu0
        %v1967 = vadd.f32 0.0, %v1966
        %v1968 = vpop.f32.mrb[0].mxu0
        %v1969 = vadd.f32 0.0, %v1968
        %v1970 = vpop.f32.mrb[0].mxu0
        %v1971 = vadd.f32 0.0, %v1970
        %v1972 = vpop.f32.mrb[0].mxu0
        %v1973 = vadd.f32 0.0, %v1972
        %1974 = vmatprep.mubr.bf16.mxu0 %v1295
        %1975 = vmatmul.mubr.bf16.gmra.mrb[0].mxu0 %v1293
        %v1976 = vpop.f32.mrb[0].mxu0
        %v1977 = vadd.f32 0.0, %v1976
        %v1978 = vpop.f32.mrb[0].mxu0
        %v1979 = vadd.f32 0.0, %v1978
        %v1980 = vpop.f32.mrb[0].mxu0
        %v1981 = vadd.f32 0.0, %v1980
        %v1982 = vpop.f32.mrb[0].mxu0
        %v1983 = vadd.f32 0.0, %v1982
        %1984 = vmatprep.mubr.bf16.mxu0 %v1296
        %1985 = vmatmul.mubr.bf16.gmra.mrb[0].mxu0 %v1294
        %v1986 = vpop.f32.mrb[0].mxu0
        %v1987 = vadd.f32 0.0, %v1986
        %v1988 = vpop.f32.mrb[0].mxu0
        %v1989 = vadd.f32 0.0, %v1988
        %v1990 = vpop.f32.mrb[0].mxu0
        %v1991 = vadd.f32 0.0, %v1990
        %v1992 = vpop.f32.mrb[0].mxu0
        %v1993 = vadd.f32 0.0, %v1992
        %1994 = vmatprep.mubr.bf16.mxu0 %v1297
        %1995 = vmatmul.mubr.bf16.gmra.mrb[0].mxu0 %v1295
        %v1996 = vpop.f32.mrb[0].mxu0
        %v1997 = vadd.f32 0.0, %v1996
        %v1998 = vpop.f32.mrb[0].mxu0
        %v1999 = vadd.f32 0.0, %v1998
        %v2000 = vpop.f32.mrb[0].mxu0
        %v2001 = vadd.f32 0.0, %v2000
        %v2002 = vpop.f32.mrb[0].mxu0
        %v2003 = vadd.f32 0.0, %v2002
        %2004 = vmatprep.mubr.bf16.mxu0 %v1298
        %2005 = vmatmul.mubr.bf16.gmra.mrb[0].mxu0 %v1296
        %v2006 = vpop.f32.mrb[0].mxu0
        %v2007 = vadd.f32 0.0, %v2006
        %v2008 = vpop.f32.mrb[0].mxu0
        %v2009 = vadd.f32 0.0, %v2008
        %v2010 = vpop.f32.mrb[0].mxu0
        %v2011 = vadd.f32 0.0, %v2010
        %v2012 = vpop.f32.mrb[0].mxu0
        %v2013 = vadd.f32 0.0, %v2012
        %2014 = vmatprep.mubr.bf16.mxu0 %v1299
        %2015 = vmatmul.mubr.bf16.gmra.mrb[0].mxu0 %v1297
        %v2016 = vpop.f32.mrb[0].mxu0
        %v2017 = vadd.f32 0.0, %v2016
        %v2018 = vpop.f32.mrb[0].mxu0
        %v2019 = vadd.f32 0.0, %v2018
        %v2020 = vpop.f32.mrb[0].mxu0
        %v2021 = vadd.f32 0.0, %v2020
        %v2022 = vpop.f32.mrb[0].mxu0
        %v2023 = vadd.f32 0.0, %v2022
        %2024 = vmatprep.mubr.bf16.mxu0 %v1300
        %2025 = vmatmul.mubr.bf16.gmra.mrb[0].mxu0 %v1298
        %v2026 = vpop.f32.mrb[0].mxu0
        %v2027 = vadd.f32 0.0, %v2026
        %v2028 = vpop.f32.mrb[0].mxu0
        %v2029 = vadd.f32 0.0, %v2028
        %v2030 = vpop.f32.mrb[0].mxu0
        %v2031 = vadd.f32 0.0, %v2030
        %v2032 = vpop.f32.mrb[0].mxu0
        %v2033 = vadd.f32 0.0, %v2032
        %2034 = vmatprep.mubr.bf16.mxu0 %v1301
        %2035 = vmatmul.mubr.bf16.gmra.mrb[0].mxu0 %v1299
        %v2036 = vpop.f32.mrb[0].mxu0
        %v2037 = vadd.f32 0.0, %v2036
        %v2038 = vpop.f32.mrb[0].mxu0
        %v2039 = vadd.f32 0.0, %v2038
        %v2040 = vpop.f32.mrb[0].mxu0
        %v2041 = vadd.f32 0.0, %v2040
        %v2042 = vpop.f32.mrb[0].mxu0
        %v2043 = vadd.f32 0.0, %v2042
        %2044 = vmatprep.mubr.bf16.mxu0 %v1302
        %2045 = vmatmul.mubr.bf16.gmra.mrb[0].mxu0 %v1300
        %v2046 = vpop.f32.mrb[0].mxu0
        %v2047 = vadd.f32 0.0, %v2046
        %v2048 = vpop.f32.mrb[0].mxu0
        %v2049 = vadd.f32 0.0, %v2048
        %v2050 = vpop.f32.mrb[0].mxu0
        %v2051 = vadd.f32 0.0, %v2050
        %v2052 = vpop.f32.mrb[0].mxu0
        %v2053 = vadd.f32 0.0, %v2052
        %2054 = vmatprep.mubr.bf16.mxu0 %v1303
        %2055 = vmatmul.mubr.bf16.gmra.mrb[0].mxu0 %v1301
        %v2056 = vpop.f32.mrb[0].mxu0
        %v2057 = vadd.f32 0.0, %v2056
        %v2058 = vpop.f32.mrb[0].mxu0
        %v2059 = vadd.f32 0.0, %v2058
        %v2060 = vpop.f32.mrb[0].mxu0
        %v2061 = vadd.f32 0.0, %v2060
        %v2062 = vpop.f32.mrb[0].mxu0
        %v2063 = vadd.f32 0.0, %v2062
        %2064 = vmatprep.mubr.bf16.mxu0 %v1304
        %2065 = vmatmul.mubr.bf16.gmra.mrb[0].mxu0 %v1302
        %v2066 = vpop.f32.mrb[0].mxu0
        %v2067 = vadd.f32 0.0, %v2066
        %v2068 = vpop.f32.mrb[0].mxu0
        %v2069 = vadd.f32 0.0, %v2068
        %v2070 = vpop.f32.mrb[0].mxu0
        %v2071 = vadd.f32 0.0, %v2070
        %v2072 = vpop.f32.mrb[0].mxu0
        %v2073 = vadd.f32 0.0, %v2072
        %2074 = vmatprep.mubr.bf16.mxu0 %v1305
        %2075 = vmatmul.mubr.bf16.gmra.mrb[0].mxu0 %v1303
        %v2076 = vpop.f32.mrb[0].mxu0
        %v2077 = vadd.f32 0.0, %v2076
        %v2078 = vpop.f32.mrb[0].mxu0
        %v2079 = vadd.f32 0.0, %v2078
        %v2080 = vpop.f32.mrb[0].mxu0
        %v2081 = vadd.f32 0.0, %v2080
        %v2082 = vpop.f32.mrb[0].mxu0
        %v2083 = vadd.f32 0.0, %v2082
        %2084 = vmatprep.mubr.bf16.mxu0 %v1306
        %2085 = vmatmul.mubr.bf16.gmra.mrb[0].mxu0 %v1304
        %v2086 = vpop.f32.mrb[0].mxu0
        %v2087 = vadd.f32 0.0, %v2086
        %v2088 = vpop.f32.mrb[0].mxu0
        %v2089 = vadd.f32 0.0, %v2088
        %v2090 = vpop.f32.mrb[0].mxu0
        %v2091 = vadd.f32 0.0, %v2090
        %v2092 = vpop.f32.mrb[0].mxu0
        %v2093 = vadd.f32 0.0, %v2092
        %2094 = vmatprep.mubr.bf16.mxu0 %v1307
        %2095 = vmatmul.mubr.bf16.gmra.mrb[0].mxu0 %v1305
        %v2096 = vpop.f32.mrb[0].mxu0
        %v2097 = vadd.f32 0.0, %v2096
        %v2098 = vpop.f32.mrb[0].mxu0
        %v2099 = vadd.f32 0.0, %v2098
        %v2100 = vpop.f32.mrb[0].mxu0
        %v2101 = vadd.f32 0.0, %v2100
        %v2102 = vpop.f32.mrb[0].mxu0
        %v2103 = vadd.f32 0.0, %v2102
        %2104 = vmatprep.mubr.bf16.mxu0 %v1308
        %2105 = vmatmul.mubr.bf16.gmra.mrb[0].mxu0 %v1306
        %v2106 = vpop.f32.mrb[0].mxu0
        %v2107 = vadd.f32 0.0, %v2106
        %v2108 = vpop.f32.mrb[0].mxu0
        %v2109 = vadd.f32 0.0, %v2108
        %v2110 = vpop.f32.mrb[0].mxu0
        %v2111 = vadd.f32 0.0, %v2110
        %v2112 = vpop.f32.mrb[0].mxu0
        %v2113 = vadd.f32 0.0, %v2112
        %2114 = vmatprep.mubr.bf16.mxu0 %v1309
        %2115 = vmatmul.mubr.bf16.gmra.mrb[0].mxu0 %v1307
        %v2116 = vpop.f32.mrb[0].mxu0
        %v2117 = vadd.f32 0.0, %v2116
        %v2118 = vpop.f32.mrb[0].mxu0
        %v2119 = vadd.f32 0.0, %v2118
        %v2120 = vpop.f32.mrb[0].mxu0
        %v2121 = vadd.f32 0.0, %v2120
        %v2122 = vpop.f32.mrb[0].mxu0
        %v2123 = vadd.f32 0.0, %v2122
        %2124 = vmatprep.mubr.bf16.mxu0 %v1310
        %2125 = vmatmul.mubr.bf16.gmra.mrb[0].mxu0 %v1308
        %v2126 = vpop.f32.mrb[0].mxu0
        %v2127 = vadd.f32 0.0, %v2126
        %v2128 = vpop.f32.mrb[0].mxu0
        %v2129 = vadd.f32 0.0, %v2128
        %v2130 = vpop.f32.mrb[0].mxu0
        %v2131 = vadd.f32 0.0, %v2130
        %v2132 = vpop.f32.mrb[0].mxu0
        %v2133 = vadd.f32 0.0, %v2132
        %2134 = vmatprep.mubr.bf16.mxu0 %v1311
        %2135 = vmatmul.mubr.bf16.gmra.mrb[0].mxu0 %v1309
        %v2136 = vpop.f32.mrb[0].mxu0
        %v2137 = vadd.f32 0.0, %v2136
        %v2138 = vpop.f32.mrb[0].mxu0
        %v2139 = vadd.f32 0.0, %v2138
        %v2140 = vpop.f32.mrb[0].mxu0
        %v2141 = vadd.f32 0.0, %v2140
        %v2142 = vpop.f32.mrb[0].mxu0
        %v2143 = vadd.f32 0.0, %v2142
        %2144 = vmatprep.mubr.bf16.mxu0 %v1312
        %2145 = vmatmul.mubr.bf16.gmra.mrb[0].mxu0 %v1310
        %v2146 = vpop.f32.mrb[0].mxu0
        %v2147 = vadd.f32 0.0, %v2146
        %v2148 = vpop.f32.mrb[0].mxu0
        %v2149 = vadd.f32 0.0, %v2148
        %v2150 = vpop.f32.mrb[0].mxu0
        %v2151 = vadd.f32 0.0, %v2150
        %v2152 = vpop.f32.mrb[0].mxu0
        %v2153 = vadd.f32 0.0, %v2152
        %2154 = vmatprep.mubr.bf16.mxu0 %v1313
        %2155 = vmatmul.mubr.bf16.gmra.mrb[0].mxu0 %v1311
        %v2156 = vpop.f32.mrb[0].mxu0
        %v2157 = vadd.f32 0.0, %v2156
        %v2158 = vpop.f32.mrb[0].mxu0
        %v2159 = vadd.f32 0.0, %v2158
        %v2160 = vpop.f32.mrb[0].mxu0
        %v2161 = vadd.f32 0.0, %v2160
        %v2162 = vpop.f32.mrb[0].mxu0
        %v2163 = vadd.f32 0.0, %v2162
        %2164 = vmatprep.mubr.bf16.mxu0 %v1314
        %2165 = vmatmul.mubr.bf16.gmra.mrb[0].mxu0 %v1312
        %v2166 = vpop.f32.mrb[0].mxu0
        %v2167 = vadd.f32 0.0, %v2166
        %v2168 = vpop.f32.mrb[0].mxu0
        %v2169 = vadd.f32 0.0, %v2168
        %v2170 = vpop.f32.mrb[0].mxu0
        %v2171 = vadd.f32 0.0, %v2170
        %v2172 = vpop.f32.mrb[0].mxu0
        %v2173 = vadd.f32 0.0, %v2172
        %2174 = vmatprep.mubr.bf16.mxu0 %v1315
        %2175 = vmatmul.mubr.bf16.gmra.mrb[0].mxu0 %v1313
        %v2176 = vpop.f32.mrb[0].mxu0
        %v2177 = vadd.f32 0.0, %v2176
        %v2178 = vpop.f32.mrb[0].mxu0
        %v2179 = vadd.f32 0.0, %v2178
        %v2180 = vpop.f32.mrb[0].mxu0
        %v2181 = vadd.f32 0.0, %v2180
        %v2182 = vpop.f32.mrb[0].mxu0
        %v2183 = vadd.f32 0.0, %v2182
        %2184 = vmatprep.mubr.bf16.mxu0 %v1316
        %2185 = vmatmul.mubr.bf16.gmra.mrb[0].mxu0 %v1314
        %v2186 = vpop.f32.mrb[0].mxu0
        %v2187 = vadd.f32 0.0, %v2186
        %v2188 = vpop.f32.mrb[0].mxu0
        %v2189 = vadd.f32 0.0, %v2188
        %v2190 = vpop.f32.mrb[0].mxu0
        %v2191 = vadd.f32 0.0, %v2190
        %v2192 = vpop.f32.mrb[0].mxu0
        %v2193 = vadd.f32 0.0, %v2192
        %2194 = vmatprep.mubr.bf16.mxu0 %v1317
        %2195 = vmatmul.mubr.bf16.gmra.mrb[0].mxu0 %v1315
        %v2196 = vpop.f32.mrb[0].mxu0
        %v2197 = vadd.f32 0.0, %v2196
        %v2198 = vpop.f32.mrb[0].mxu0
        %v2199 = vadd.f32 0.0, %v2198
        %v2200 = vpop.f32.mrb[0].mxu0
        %v2201 = vadd.f32 0.0, %v2200
        %v2202 = vpop.f32.mrb[0].mxu0
        %v2203 = vadd.f32 0.0, %v2202
        %2204 = vmatprep.mubr.bf16.mxu0 %v1318
        %2205 = vmatmul.mubr.bf16.gmra.mrb[0].mxu0 %v1316
        %v2206 = vpop.f32.mrb[0].mxu0
        %v2207 = vadd.f32 0.0, %v2206
        %v2208 = vpop.f32.mrb[0].mxu0
        %v2209 = vadd.f32 0.0, %v2208
        %v2210 = vpop.f32.mrb[0].mxu0
        %v2211 = vadd.f32 0.0, %v2210
        %v2212 = vpop.f32.mrb[0].mxu0
        %v2213 = vadd.f32 0.0, %v2212
        %2214 = vmatprep.mubr.bf16.mxu0 %v1319
        %2215 = vmatmul.mubr.bf16.gmra.mrb[0].mxu0 %v1317
        %v2216 = vpop.f32.mrb[0].mxu0
        %v2217 = vadd.f32 0.0, %v2216
        %v2218 = vpop.f32.mrb[0].mxu0
        %v2219 = vadd.f32 0.0, %v2218
        %v2220 = vpop.f32.mrb[0].mxu0
        %v2221 = vadd.f32 0.0, %v2220
        %v2222 = vpop.f32.mrb[0].mxu0
        %v2223 = vadd.f32 0.0, %v2222
        %2224 = vmatprep.mubr.bf16.mxu0 %v1320
        %2225 = vmatmul.mubr.bf16.gmra.mrb[0].mxu0 %v1318
        %v2226 = vpop.f32.mrb[0].mxu0
        %v2227 = vadd.f32 0.0, %v2226
        %v2228 = vpop.f32.mrb[0].mxu0
        %v2229 = vadd.f32 0.0, %v2228
        %v2230 = vpop.f32.mrb[0].mxu0
        %v2231 = vadd.f32 0.0, %v2230
        %v2232 = vpop.f32.mrb[0].mxu0
        %v2233 = vadd.f32 0.0, %v2232
        %2234 = vmatprep.mubr.bf16.mxu0 %v1321
        %2235 = vmatmul.mubr.bf16.gmra.mrb[0].mxu0 %v1319
        %v2236 = vpop.f32.mrb[0].mxu0
        %v2237 = vadd.f32 0.0, %v2236
        %v2238 = vpop.f32.mrb[0].mxu0
        %v2239 = vadd.f32 0.0, %v2238
        %v2240 = vpop.f32.mrb[0].mxu0
        %v2241 = vadd.f32 0.0, %v2240
        %v2242 = vpop.f32.mrb[0].mxu0
        %v2243 = vadd.f32 0.0, %v2242
        %2244 = vmatprep.mubr.bf16.mxu0 %v1322
        %2245 = vmatmul.mubr.bf16.gmra.mrb[0].mxu0 %v1320
        %v2246 = vpop.f32.mrb[0].mxu0
        %v2247 = vadd.f32 0.0, %v2246
        %v2248 = vpop.f32.mrb[0].mxu0
        %v2249 = vadd.f32 0.0, %v2248
        %v2250 = vpop.f32.mrb[0].mxu0
        %v2251 = vadd.f32 0.0, %v2250
        %v2252 = vpop.f32.mrb[0].mxu0
        %v2253 = vadd.f32 0.0, %v2252
        %2254 = vmatprep.mubr.bf16.mxu0 %v1323
        %2255 = vmatmul.mubr.bf16.gmra.mrb[0].mxu0 %v1321
        %v2256 = vpop.f32.mrb[0].mxu0
        %v2257 = vadd.f32 0.0, %v2256
        %v2258 = vpop.f32.mrb[0].mxu0
        %v2259 = vadd.f32 0.0, %v2258
        %v2260 = vpop.f32.mrb[0].mxu0
        %v2261 = vadd.f32 0.0, %v2260
        %v2262 = vpop.f32.mrb[0].mxu0
        %v2263 = vadd.f32 0.0, %v2262
        %2264 = vmatprep.mubr.bf16.mxu0 %v1324
        %2265 = vmatmul.mubr.bf16.gmra.mrb[0].mxu0 %v1322
        %v2266 = vpop.f32.mrb[0].mxu0
        %v2267 = vadd.f32 0.0, %v2266
        %v2268 = vpop.f32.mrb[0].mxu0
        %v2269 = vadd.f32 0.0, %v2268
        %v2270 = vpop.f32.mrb[0].mxu0
        %v2271 = vadd.f32 0.0, %v2270
        %v2272 = vpop.f32.mrb[0].mxu0
        %v2273 = vadd.f32 0.0, %v2272
        %2274 = vmatprep.mubr.bf16.mxu0 %v1325
        %2275 = vmatmul.mubr.bf16.gmra.mrb[0].mxu0 %v1323
        %v2276 = vpop.f32.mrb[0].mxu0
        %v2277 = vadd.f32 0.0, %v2276
        %v2278 = vpop.f32.mrb[0].mxu0
        %v2279 = vadd.f32 0.0, %v2278
        %v2280 = vpop.f32.mrb[0].mxu0
        %v2281 = vadd.f32 0.0, %v2280
        %v2282 = vpop.f32.mrb[0].mxu0
        %v2283 = vadd.f32 0.0, %v2282
        %2284 = vmatprep.mubr.bf16.mxu0 %v1326
        %2285 = vmatmul.mubr.bf16.gmra.mrb[0].mxu0 %v1324
        %v2286 = vpop.f32.mrb[0].mxu0
        %v2287 = vadd.f32 0.0, %v2286
        %v2288 = vpop.f32.mrb[0].mxu0
        %v2289 = vadd.f32 0.0, %v2288
        %v2290 = vpop.f32.mrb[0].mxu0
        %v2291 = vadd.f32 0.0, %v2290
        %v2292 = vpop.f32.mrb[0].mxu0
        %v2293 = vadd.f32 0.0, %v2292
        %2294 = vmatprep.mubr.bf16.mxu0 %v1327
        %2295 = vmatmul.mubr.bf16.gmra.mrb[0].mxu0 %v1325
        %v2296 = vpop.f32.mrb[0].mxu0
        %v2297 = vadd.f32 0.0, %v2296
        %v2298 = vpop.f32.mrb[0].mxu0
        %v2299 = vadd.f32 0.0, %v2298
        %v2300 = vpop.f32.mrb[0].mxu0
        %v2301 = vadd.f32 0.0, %v2300
        %v2302 = vpop.f32.mrb[0].mxu0
        %v2303 = vadd.f32 0.0, %v2302
        %2304 = vmatprep.mubr.bf16.mxu0 %v1328
        %2305 = vmatmul.mubr.bf16.gmra.mrb[0].mxu0 %v1326
        %v2306 = vpop.f32.mrb[0].mxu0
        %v2307 = vadd.f32 0.0, %v2306
        %v2308 = vpop.f32.mrb[0].mxu0
        %v2309 = vadd.f32 0.0, %v2308
        %v2310 = vpop.f32.mrb[0].mxu0
        %v2311 = vadd.f32 0.0, %v2310
        %v2312 = vpop.f32.mrb[0].mxu0
        %v2313 = vadd.f32 0.0, %v2312
        %2314 = vmatprep.mubr.bf16.mxu0 %v1329
        %2315 = vmatmul.mubr.bf16.gmra.mrb[0].mxu0 %v1327
        %v2316 = vpop.f32.mrb[0].mxu0
        %v2317 = vadd.f32 0.0, %v2316
        %v2318 = vpop.f32.mrb[0].mxu0
        %v2319 = vadd.f32 0.0, %v2318
        %v2320 = vpop.f32.mrb[0].mxu0
        %v2321 = vadd.f32 0.0, %v2320
        %v2322 = vpop.f32.mrb[0].mxu0
        %v2323 = vadd.f32 0.0, %v2322
        %2324 = vmatprep.mubr.bf16.mxu0 %v1330
        %2325 = vmatmul.mubr.bf16.gmra.mrb[0].mxu0 %v1328
        %v2326 = vpop.f32.mrb[0].mxu0
        %v2327 = vadd.f32 0.0, %v2326
        %v2328 = vpop.f32.mrb[0].mxu0
        %v2329 = vadd.f32 0.0, %v2328
        %v2330 = vpop.f32.mrb[0].mxu0
        %v2331 = vadd.f32 0.0, %v2330
        %v2332 = vpop.f32.mrb[0].mxu0
        %v2333 = vadd.f32 0.0, %v2332
        %2334 = vmatprep.mubr.bf16.mxu0 %v1331
        %2335 = vmatmul.mubr.bf16.gmra.mrb[0].mxu0 %v1329
        %v2336 = vpop.f32.mrb[0].mxu0
        %v2337 = vadd.f32 0.0, %v2336
        %v2338 = vpop.f32.mrb[0].mxu0
        %v2339 = vadd.f32 0.0, %v2338
        %v2340 = vpop.f32.mrb[0].mxu0
        %v2341 = vadd.f32 0.0, %v2340
        %v2342 = vpop.f32.mrb[0].mxu0
        %v2343 = vadd.f32 0.0, %v2342
        %2344 = vmatprep.mubr.bf16.mxu0 %v1332
        %2345 = vmatmul.mubr.bf16.gmra.mrb[0].mxu0 %v1330
        %v2346 = vpop.f32.mrb[0].mxu0
        %v2347 = vadd.f32 0.0, %v2346
        %v2348 = vpop.f32.mrb[0].mxu0
        %v2349 = vadd.f32 0.0, %v2348
        %v2350 = vpop.f32.mrb[0].mxu0
        %v2351 = vadd.f32 0.0, %v2350
        %v2352 = vpop.f32.mrb[0].mxu0
        %v2353 = vadd.f32 0.0, %v2352
        %2354 = vmatprep.mubr.bf16.mxu0 %v1333
        %2355 = vmatmul.mubr.bf16.gmra.mrb[0].mxu0 %v1331
        %v2356 = vpop.f32.mrb[0].mxu0
        %v2357 = vadd.f32 0.0, %v2356
        %v2358 = vpop.f32.mrb[0].mxu0
        %v2359 = vadd.f32 0.0, %v2358
        %v2360 = vpop.f32.mrb[0].mxu0
        %v2361 = vadd.f32 0.0, %v2360
        %v2362 = vpop.f32.mrb[0].mxu0
        %v2363 = vadd.f32 0.0, %v2362
        %2364 = vmatprep.mubr.bf16.mxu0 %v1334
        %2365 = vmatmul.mubr.bf16.gmra.mrb[0].mxu0 %v1332
        %v2366 = vpop.f32.mrb[0].mxu0
        %v2367 = vadd.f32 0.0, %v2366
        %v2368 = vpop.f32.mrb[0].mxu0
        %v2369 = vadd.f32 0.0, %v2368
        %v2370 = vpop.f32.mrb[0].mxu0
        %v2371 = vadd.f32 0.0, %v2370
        %v2372 = vpop.f32.mrb[0].mxu0
        %v2373 = vadd.f32 0.0, %v2372
        %2374 = vmatprep.mubr.bf16.mxu0 %v1335
        %2375 = vmatmul.mubr.bf16.gmra.mrb[0].mxu0 %v1333
        %v2376 = vpop.f32.mrb[0].mxu0
        %v2377 = vadd.f32 0.0, %v2376
        %v2378 = vpop.f32.mrb[0].mxu0
        %v2379 = vadd.f32 0.0, %v2378
        %v2380 = vpop.f32.mrb[0].mxu0
        %v2381 = vadd.f32 0.0, %v2380
        %v2382 = vpop.f32.mrb[0].mxu0
        %v2383 = vadd.f32 0.0, %v2382
        %2384 = vmatprep.mubr.bf16.mxu0 %v1336
        %2385 = vmatmul.mubr.bf16.gmra.mrb[0].mxu0 %v1334
        %v2386 = vpop.f32.mrb[0].mxu0
        %v2387 = vadd.f32 0.0, %v2386
        %v2388 = vpop.f32.mrb[0].mxu0
        %v2389 = vadd.f32 0.0, %v2388
        %v2390 = vpop.f32.mrb[0].mxu0
        %v2391 = vadd.f32 0.0, %v2390
        %v2392 = vpop.f32.mrb[0].mxu0
        %v2393 = vadd.f32 0.0, %v2392
        %2394 = vmatprep.mubr.bf16.mxu0 %v1337
        %2395 = vmatmul.mubr.bf16.gmra.mrb[0].mxu0 %v1335
        %v2396 = vpop.f32.mrb[0].mxu0
        %v2397 = vadd.f32 0.0, %v2396
        %v2398 = vpop.f32.mrb[0].mxu0
        %v2399 = vadd.f32 0.0, %v2398
        %v2400 = vpop.f32.mrb[0].mxu0
        %v2401 = vadd.f32 0.0, %v2400
        %v2402 = vpop.f32.mrb[0].mxu0
        %v2403 = vadd.f32 0.0, %v2402
        %2404 = vmatprep.mubr.bf16.mxu0 %v1338
        %2405 = vmatmul.mubr.bf16.gmra.mrb[0].mxu0 %v1336
        %v2406 = vpop.f32.mrb[0].mxu0
        %v2407 = vadd.f32 0.0, %v2406
        %v2408 = vpop.f32.mrb[0].mxu0
        %v2409 = vadd.f32 0.0, %v2408
        %v2410 = vpop.f32.mrb[0].mxu0
        %v2411 = vadd.f32 0.0, %v2410
        %v2412 = vpop.f32.mrb[0].mxu0
        %v2413 = vadd.f32 0.0, %v2412
        %2414 = vmatprep.mubr.bf16.mxu0 %v1339
        %2415 = vmatmul.mubr.bf16.gmra.mrb[0].mxu0 %v1337
        %v2416 = vpop.f32.mrb[0].mxu0
        %v2417 = vadd.f32 0.0, %v2416
        %v2418 = vpop.f32.mrb[0].mxu0
        %v2419 = vadd.f32 0.0, %v2418
        %v2420 = vpop.f32.mrb[0].mxu0
        %v2421 = vadd.f32 0.0, %v2420
        %v2422 = vpop.f32.mrb[0].mxu0
        %v2423 = vadd.f32 0.0, %v2422
        %2424 = vmatprep.mubr.bf16.mxu0 %v1340
        %2425 = vmatmul.mubr.bf16.gmra.mrb[0].mxu0 %v1338
        %v2426 = vpop.f32.mrb[0].mxu0
        %v2427 = vadd.f32 0.0, %v2426
        %v2428 = vpop.f32.mrb[0].mxu0
        %v2429 = vadd.f32 0.0, %v2428
        %v2430 = vpop.f32.mrb[0].mxu0
        %v2431 = vadd.f32 0.0, %v2430
        %v2432 = vpop.f32.mrb[0].mxu0
        %v2433 = vadd.f32 0.0, %v2432
        %2434 = vmatprep.mubr.bf16.mxu0 %v1341
        %2435 = vmatmul.mubr.bf16.gmra.mrb[0].mxu0 %v1339
        %v2436 = vpop.f32.mrb[0].mxu0
        %v2437 = vadd.f32 0.0, %v2436
        %v2438 = vpop.f32.mrb[0].mxu0
        %v2439 = vadd.f32 0.0, %v2438
        %v2440 = vpop.f32.mrb[0].mxu0
        %v2441 = vadd.f32 0.0, %v2440
        %v2442 = vpop.f32.mrb[0].mxu0
        %v2443 = vadd.f32 0.0, %v2442
        %2444 = vmatprep.mubr.bf16.mxu0 %v1342
        %2445 = vmatmul.mubr.bf16.gmra.mrb[0].mxu0 %v1340
        %v2446 = vpop.f32.mrb[0].mxu0
        %v2447 = vadd.f32 0.0, %v2446
        %v2448 = vpop.f32.mrb[0].mxu0
        %v2449 = vadd.f32 0.0, %v2448
        %v2450 = vpop.f32.mrb[0].mxu0
        %v2451 = vadd.f32 0.0, %v2450
        %v2452 = vpop.f32.mrb[0].mxu0
        %v2453 = vadd.f32 0.0, %v2452
        %2454 = vmatprep.mubr.bf16.mxu0 %v1343
        %2455 = vmatmul.mubr.bf16.gmra.mrb[0].mxu0 %v1341
        %v2456 = vpop.f32.mrb[0].mxu0
        %v2457 = vadd.f32 0.0, %v2456
        %v2458 = vpop.f32.mrb[0].mxu0
        %v2459 = vadd.f32 0.0, %v2458
        %v2460 = vpop.f32.mrb[0].mxu0
        %v2461 = vadd.f32 0.0, %v2460
        %v2462 = vpop.f32.mrb[0].mxu0
        %v2463 = vadd.f32 0.0, %v2462
        %2464 = vmatprep.mubr.bf16.mxu0 %v1344
        %2465 = vmatmul.mubr.bf16.gmra.mrb[0].mxu0 %v1342
        %v2466 = vpop.f32.mrb[0].mxu0
        %v2467 = vadd.f32 0.0, %v2466
        %v2468 = vpop.f32.mrb[0].mxu0
        %v2469 = vadd.f32 0.0, %v2468
        %v2470 = vpop.f32.mrb[0].mxu0
        %v2471 = vadd.f32 0.0, %v2470
        %v2472 = vpop.f32.mrb[0].mxu0
        %v2473 = vadd.f32 0.0, %v2472
        %2474 = vmatprep.mubr.bf16.mxu0 %v1345
        %2475 = vmatmul.mubr.bf16.gmra.mrb[0].mxu0 %v1343
        %v2476 = vpop.f32.mrb[0].mxu0
        %v2477 = vadd.f32 0.0, %v2476
        %v2478 = vpop.f32.mrb[0].mxu0
        %v2479 = vadd.f32 0.0, %v2478
        %v2480 = vpop.f32.mrb[0].mxu0
        %v2481 = vadd.f32 0.0, %v2480
        %v2482 = vpop.f32.mrb[0].mxu0
        %v2483 = vadd.f32 0.0, %v2482
        %2484 = vmatprep.mubr.bf16.mxu0 %v1346
        %2485 = vmatmul.mubr.bf16.gmra.mrb[0].mxu0 %v1344
        %v2486 = vpop.f32.mrb[0].mxu0
        %v2487 = vadd.f32 0.0, %v2486
        %v2488 = vpop.f32.mrb[0].mxu0
        %v2489 = vadd.f32 0.0, %v2488
        %v2490 = vpop.f32.mrb[0].mxu0
        %v2491 = vadd.f32 0.0, %v2490
        %v2492 = vpop.f32.mrb[0].mxu0
        %v2493 = vadd.f32 0.0, %v2492
        %2494 = vmatprep.mubr.bf16.mxu0 %v1347
        %2495 = vmatmul.mubr.bf16.gmra.mrb[0].mxu0 %v1345
        %v2496 = vpop.f32.mrb[0].mxu0
        %v2497 = vadd.f32 0.0, %v2496
        %v2498 = vpop.f32.mrb[0].mxu0
        %v2499 = vadd.f32 0.0, %v2498
        %v2500 = vpop.f32.mrb[0].mxu0
        %v2501 = vadd.f32 0.0, %v2500
        %v2502 = vpop.f32.mrb[0].mxu0
        %v2503 = vadd.f32 0.0, %v2502
        %2504 = vmatprep.mubr.bf16.mxu0 %v1412
        %2505 = vmatmul.mubr.bf16.gmra.mrb[0].mxu0 %v1346
        %v2506 = vpop.f32.mrb[0].mxu0
        %v2507 = vadd.f32 0.0, %v2506
        %v2508 = vpop.f32.mrb[0].mxu0
        %v2509 = vadd.f32 0.0, %v2508
        %v2510 = vpop.f32.mrb[0].mxu0
        %v2511 = vadd.f32 0.0, %v2510
        %v2512 = vpop.f32.mrb[0].mxu0
        %v2513 = vadd.f32 0.0, %v2512
        %2514 = vmatprep.mubr.bf16.mxu0 %v1413
        %2515 = vmatmul.mubr.bf16.gmra.mrb[0].mxu0 %v1347
        %v2516 = vpop.f32.mrb[0].mxu0
        %v2517 = vadd.f32 0.0, %v2516
        %v2518 = vpop.f32.mrb[0].mxu0
        %v2519 = vadd.f32 0.0, %v2518
        %v2520 = vpop.f32.mrb[0].mxu0
        %v2521 = vadd.f32 0.0, %v2520
        %v2522 = vpop.f32.mrb[0].mxu0
        %v2523 = vadd.f32 0.0, %v2522
        %2524 = vdwg.mxu0
        %2525 = vmatprep.subr.bf16.mxu0 %v1805
        %2526 = vmatpush1.bf16.msra.mxu0 %v1804
        %2527 = vmatprep.subr.bf16.mxu0 %v1807
        %2528 = vmatpush1.bf16.msra.mxu0 %v1806
        %2529 = vmatprep.subr.bf16.mxu0 %v1809
        %2530 = vmatpush1.bf16.msra.mxu0 %v1808
        %2531 = vmatprep.subr.bf16.mxu0 %v1811
        %2532 = vmatpush1.bf16.msra.mxu0 %v1810
        %2533 = vmatprep.subr.bf16.mxu0 %v1813
        %2534 = vmatpush1.bf16.msra.mxu0 %v1812
        %2535 = vmatprep.subr.bf16.mxu0 %v1815
        %2536 = vmatpush1.bf16.msra.mxu0 %v1814
        %2537 = vmatprep.subr.bf16.mxu0 %v1817
        %2538 = vmatpush1.bf16.msra.mxu0 %v1816
        %2539 = vmatprep.subr.bf16.mxu0 %v1819
        %2540 = vmatpush1.bf16.msra.mxu0 %v1818
        %2541 = vmatprep.subr.bf16.mxu0 %v1821
        %2542 = vmatpush1.bf16.msra.mxu0 %v1820
        %2543 = vmatprep.subr.bf16.mxu0 %v1823
        %2544 = vmatpush1.bf16.msra.mxu0 %v1822
        %2545 = vmatprep.subr.bf16.mxu0 %v1825
        %2546 = vmatpush1.bf16.msra.mxu0 %v1824
        %2547 = vmatprep.subr.bf16.mxu0 %v1827
        %2548 = vmatpush1.bf16.msra.mxu0 %v1826
        %2549 = vmatprep.subr.bf16.mxu0 %v1829
        %2550 = vmatpush1.bf16.msra.mxu0 %v1828
        %2551 = vmatprep.subr.bf16.mxu0 %v1831
        %2552 = vmatpush1.bf16.msra.mxu0 %v1830
        %2553 = vmatprep.subr.bf16.mxu0 %v1833
        %2554 = vmatpush1.bf16.msra.mxu0 %v1832
        %2555 = vmatprep.subr.bf16.mxu0 %v1835
        %2556 = vmatpush1.bf16.msra.mxu0 %v1834
        %2557 = vmatprep.mubr.bf16.mxu0 %v1298
        %2558 = vmatmul.mubr.bf16.gmra.mrb[0].mxu0 %v1296
        %v2559 = vpop.f32.mrb[0].mxu0
        %v2560 = vadd.f32 %v1967, %v2559
        %v2561 = vpop.f32.mrb[0].mxu0
        %v2562 = vadd.f32 %v1969, %v2561
        %v2563 = vpop.f32.mrb[0].mxu0
        %v2564 = vadd.f32 %v1971, %v2563
        %v2565 = vpop.f32.mrb[0].mxu0
        %v2566 = vadd.f32 %v1973, %v2565
        %2567 = vmatprep.mubr.bf16.mxu0 %v1299
        %2568 = vmatmul.mubr.bf16.gmra.mrb[0].mxu0 %v1297
        %v2569 = vpop.f32.mrb[0].mxu0
        %v2570 = vadd.f32 %v1977, %v2569
        %v2571 = vpop.f32.mrb[0].mxu0
        %v2572 = vadd.f32 %v1979, %v2571
        %v2573 = vpop.f32.mrb[0].mxu0
        %v2574 = vadd.f32 %v1981, %v2573
        %v2575 = vpop.f32.mrb[0].mxu0
        %v2576 = vadd.f32 %v1983, %v2575
        %2577 = vmatprep.mubr.bf16.mxu0 %v1300
        %2578 = vmatmul.mubr.bf16.gmra.mrb[0].mxu0 %v1298
        %v2579 = vpop.f32.mrb[0].mxu0
        %v2580 = vadd.f32 %v1987, %v2579
        %v2581 = vpop.f32.mrb[0].mxu0
        %v2582 = vadd.f32 %v1989, %v2581
        %v2583 = vpop.f32.mrb[0].mxu0
        %v2584 = vadd.f32 %v1991, %v2583
        %v2585 = vpop.f32.mrb[0].mxu0
        %v2586 = vadd.f32 %v1993, %v2585
        %2587 = vmatprep.mubr.bf16.mxu0 %v1301
        %2588 = vmatmul.mubr.bf16.gmra.mrb[0].mxu0 %v1299
        %v2589 = vpop.f32.mrb[0].mxu0
        %v2590 = vadd.f32 %v1997, %v2589
        %v2591 = vpop.f32.mrb[0].mxu0
        %v2592 = vadd.f32 %v1999, %v2591
        %v2593 = vpop.f32.mrb[0].mxu0
        %v2594 = vadd.f32 %v2001, %v2593
        %v2595 = vpop.f32.mrb[0].mxu0
        %v2596 = vadd.f32 %v2003, %v2595
        %2597 = vmatprep.mubr.bf16.mxu0 %v1302
        %2598 = vmatmul.mubr.bf16.gmra.mrb[0].mxu0 %v1300
        %v2599 = vpop.f32.mrb[0].mxu0
        %v2600 = vadd.f32 %v2007, %v2599
        %v2601 = vpop.f32.mrb[0].mxu0
        %v2602 = vadd.f32 %v2009, %v2601
        %v2603 = vpop.f32.mrb[0].mxu0
        %v2604 = vadd.f32 %v2011, %v2603
        %v2605 = vpop.f32.mrb[0].mxu0
        %v2606 = vadd.f32 %v2013, %v2605
        %2607 = vmatprep.mubr.bf16.mxu0 %v1303
        %2608 = vmatmul.mubr.bf16.gmra.mrb[0].mxu0 %v1301
        %v2609 = vpop.f32.mrb[0].mxu0
        %v2610 = vadd.f32 %v2017, %v2609
        %v2611 = vpop.f32.mrb[0].mxu0
        %v2612 = vadd.f32 %v2019, %v2611
        %v2613 = vpop.f32.mrb[0].mxu0
        %v2614 = vadd.f32 %v2021, %v2613
        %v2615 = vpop.f32.mrb[0].mxu0
        %v2616 = vadd.f32 %v2023, %v2615
        %2617 = vmatprep.mubr.bf16.mxu0 %v1304
        %2618 = vmatmul.mubr.bf16.gmra.mrb[0].mxu0 %v1302
        %v2619 = vpop.f32.mrb[0].mxu0
        %v2620 = vadd.f32 %v2027, %v2619
        %v2621 = vpop.f32.mrb[0].mxu0
        %v2622 = vadd.f32 %v2029, %v2621
        %v2623 = vpop.f32.mrb[0].mxu0
        %v2624 = vadd.f32 %v2031, %v2623
        %v2625 = vpop.f32.mrb[0].mxu0
        %v2626 = vadd.f32 %v2033, %v2625
        %2627 = vmatprep.mubr.bf16.mxu0 %v1305
        %2628 = vmatmul.mubr.bf16.gmra.mrb[0].mxu0 %v1303
        %v2629 = vpop.f32.mrb[0].mxu0
        %v2630 = vadd.f32 %v2037, %v2629
        %v2631 = vpop.f32.mrb[0].mxu0
        %v2632 = vadd.f32 %v2039, %v2631
        %v2633 = vpop.f32.mrb[0].mxu0
        %v2634 = vadd.f32 %v2041, %v2633
        %v2635 = vpop.f32.mrb[0].mxu0
        %v2636 = vadd.f32 %v2043, %v2635
        %2637 = vmatprep.mubr.bf16.mxu0 %v1306
        %2638 = vmatmul.mubr.bf16.gmra.mrb[0].mxu0 %v1304
        %v2639 = vpop.f32.mrb[0].mxu0
        %v2640 = vadd.f32 %v2047, %v2639
        %v2641 = vpop.f32.mrb[0].mxu0
        %v2642 = vadd.f32 %v2049, %v2641
        %v2643 = vpop.f32.mrb[0].mxu0
        %v2644 = vadd.f32 %v2051, %v2643
        %v2645 = vpop.f32.mrb[0].mxu0
        %v2646 = vadd.f32 %v2053, %v2645
        %2647 = vmatprep.mubr.bf16.mxu0 %v1307
        %2648 = vmatmul.mubr.bf16.gmra.mrb[0].mxu0 %v1305
        %v2649 = vpop.f32.mrb[0].mxu0
        %v2650 = vadd.f32 %v2057, %v2649
        %v2651 = vpop.f32.mrb[0].mxu0
        %v2652 = vadd.f32 %v2059, %v2651
        %v2653 = vpop.f32.mrb[0].mxu0
        %v2654 = vadd.f32 %v2061, %v2653
        %v2655 = vpop.f32.mrb[0].mxu0
        %v2656 = vadd.f32 %v2063, %v2655
        %2657 = vmatprep.mubr.bf16.mxu0 %v1308
        %2658 = vmatmul.mubr.bf16.gmra.mrb[0].mxu0 %v1306
        %v2659 = vpop.f32.mrb[0].mxu0
        %v2660 = vadd.f32 %v2067, %v2659
        %v2661 = vpop.f32.mrb[0].mxu0
        %v2662 = vadd.f32 %v2069, %v2661
        %v2663 = vpop.f32.mrb[0].mxu0
        %v2664 = vadd.f32 %v2071, %v2663
        %v2665 = vpop.f32.mrb[0].mxu0
        %v2666 = vadd.f32 %v2073, %v2665
        %2667 = vmatprep.mubr.bf16.mxu0 %v1309
        %2668 = vmatmul.mubr.bf16.gmra.mrb[0].mxu0 %v1307
        %v2669 = vpop.f32.mrb[0].mxu0
        %v2670 = vadd.f32 %v2077, %v2669
        %v2671 = vpop.f32.mrb[0].mxu0
        %v2672 = vadd.f32 %v2079, %v2671
        %v2673 = vpop.f32.mrb[0].mxu0
        %v2674 = vadd.f32 %v2081, %v2673
        %v2675 = vpop.f32.mrb[0].mxu0
        %v2676 = vadd.f32 %v2083, %v2675
        %2677 = vmatprep.mubr.bf16.mxu0 %v1310
        %2678 = vmatmul.mubr.bf16.gmra.mrb[0].mxu0 %v1308
        %v2679 = vpop.f32.mrb[0].mxu0
        %v2680 = vadd.f32 %v2087, %v2679
        %v2681 = vpop.f32.mrb[0].mxu0
        %v2682 = vadd.f32 %v2089, %v2681
        %v2683 = vpop.f32.mrb[0].mxu0
        %v2684 = vadd.f32 %v2091, %v2683
        %v2685 = vpop.f32.mrb[0].mxu0
        %v2686 = vadd.f32 %v2093, %v2685
        %2687 = vmatprep.mubr.bf16.mxu0 %v1311
        %2688 = vmatmul.mubr.bf16.gmra.mrb[0].mxu0 %v1309
        %v2689 = vpop.f32.mrb[0].mxu0
        %v2690 = vadd.f32 %v2097, %v2689
        %v2691 = vpop.f32.mrb[0].mxu0
        %v2692 = vadd.f32 %v2099, %v2691
        %v2693 = vpop.f32.mrb[0].mxu0
        %v2694 = vadd.f32 %v2101, %v2693
        %v2695 = vpop.f32.mrb[0].mxu0
        %v2696 = vadd.f32 %v2103, %v2695
        %2697 = vmatprep.mubr.bf16.mxu0 %v1312
        %2698 = vmatmul.mubr.bf16.gmra.mrb[0].mxu0 %v1310
        %v2699 = vpop.f32.mrb[0].mxu0
        %v2700 = vadd.f32 %v2107, %v2699
        %v2701 = vpop.f32.mrb[0].mxu0
        %v2702 = vadd.f32 %v2109, %v2701
        %v2703 = vpop.f32.mrb[0].mxu0
        %v2704 = vadd.f32 %v2111, %v2703
        %v2705 = vpop.f32.mrb[0].mxu0
        %v2706 = vadd.f32 %v2113, %v2705
        %2707 = vmatprep.mubr.bf16.mxu0 %v1313
        %2708 = vmatmul.mubr.bf16.gmra.mrb[0].mxu0 %v1311
        %v2709 = vpop.f32.mrb[0].mxu0
        %v2710 = vadd.f32 %v2117, %v2709
        %v2711 = vpop.f32.mrb[0].mxu0
        %v2712 = vadd.f32 %v2119, %v2711
        %v2713 = vpop.f32.mrb[0].mxu0
        %v2714 = vadd.f32 %v2121, %v2713
        %v2715 = vpop.f32.mrb[0].mxu0
        %v2716 = vadd.f32 %v2123, %v2715
        %2717 = vmatprep.mubr.bf16.mxu0 %v1314
        %2718 = vmatmul.mubr.bf16.gmra.mrb[0].mxu0 %v1312
        %v2719 = vpop.f32.mrb[0].mxu0
        %v2720 = vadd.f32 %v2127, %v2719
        %v2721 = vpop.f32.mrb[0].mxu0
        %v2722 = vadd.f32 %v2129, %v2721
        %v2723 = vpop.f32.mrb[0].mxu0
        %v2724 = vadd.f32 %v2131, %v2723
        %v2725 = vpop.f32.mrb[0].mxu0
        %v2726 = vadd.f32 %v2133, %v2725
        %2727 = vmatprep.mubr.bf16.mxu0 %v1315
        %2728 = vmatmul.mubr.bf16.gmra.mrb[0].mxu0 %v1313
        %v2729 = vpop.f32.mrb[0].mxu0
        %v2730 = vadd.f32 %v2137, %v2729
        %v2731 = vpop.f32.mrb[0].mxu0
        %v2732 = vadd.f32 %v2139, %v2731
        %v2733 = vpop.f32.mrb[0].mxu0
        %v2734 = vadd.f32 %v2141, %v2733
        %v2735 = vpop.f32.mrb[0].mxu0
        %v2736 = vadd.f32 %v2143, %v2735
        %2737 = vmatprep.mubr.bf16.mxu0 %v1316
        %2738 = vmatmul.mubr.bf16.gmra.mrb[0].mxu0 %v1314
        %v2739 = vpop.f32.mrb[0].mxu0
        %v2740 = vadd.f32 %v2147, %v2739
        %v2741 = vpop.f32.mrb[0].mxu0
        %v2742 = vadd.f32 %v2149, %v2741
        %v2743 = vpop.f32.mrb[0].mxu0
        %v2744 = vadd.f32 %v2151, %v2743
        %v2745 = vpop.f32.mrb[0].mxu0
        %v2746 = vadd.f32 %v2153, %v2745
        %2747 = vmatprep.mubr.bf16.mxu0 %v1317
        %2748 = vmatmul.mubr.bf16.gmra.mrb[0].mxu0 %v1315
        %v2749 = vpop.f32.mrb[0].mxu0
        %v2750 = vadd.f32 %v2157, %v2749
        %v2751 = vpop.f32.mrb[0].mxu0
        %v2752 = vadd.f32 %v2159, %v2751
        %v2753 = vpop.f32.mrb[0].mxu0
        %v2754 = vadd.f32 %v2161, %v2753
        %v2755 = vpop.f32.mrb[0].mxu0
        %v2756 = vadd.f32 %v2163, %v2755
        %2757 = vmatprep.mubr.bf16.mxu0 %v1318
        %2758 = vmatmul.mubr.bf16.gmra.mrb[0].mxu0 %v1316
        %v2759 = vpop.f32.mrb[0].mxu0
        %v2760 = vadd.f32 %v2167, %v2759
        %v2761 = vpop.f32.mrb[0].mxu0
        %v2762 = vadd.f32 %v2169, %v2761
        %v2763 = vpop.f32.mrb[0].mxu0
        %v2764 = vadd.f32 %v2171, %v2763
        %v2765 = vpop.f32.mrb[0].mxu0
        %v2766 = vadd.f32 %v2173, %v2765
        %2767 = vmatprep.mubr.bf16.mxu0 %v1319
        %2768 = vmatmul.mubr.bf16.gmra.mrb[0].mxu0 %v1317
        %v2769 = vpop.f32.mrb[0].mxu0
        %v2770 = vadd.f32 %v2177, %v2769
        %v2771 = vpop.f32.mrb[0].mxu0
        %v2772 = vadd.f32 %v2179, %v2771
        %v2773 = vpop.f32.mrb[0].mxu0
        %v2774 = vadd.f32 %v2181, %v2773
        %v2775 = vpop.f32.mrb[0].mxu0
        %v2776 = vadd.f32 %v2183, %v2775
        %2777 = vmatprep.mubr.bf16.mxu0 %v1320
        %2778 = vmatmul.mubr.bf16.gmra.mrb[0].mxu0 %v1318
        %v2779 = vpop.f32.mrb[0].mxu0
        %v2780 = vadd.f32 %v2187, %v2779
        %v2781 = vpop.f32.mrb[0].mxu0
        %v2782 = vadd.f32 %v2189, %v2781
        %v2783 = vpop.f32.mrb[0].mxu0
        %v2784 = vadd.f32 %v2191, %v2783
        %v2785 = vpop.f32.mrb[0].mxu0
        %v2786 = vadd.f32 %v2193, %v2785
        %2787 = vmatprep.mubr.bf16.mxu0 %v1321
        %2788 = vmatmul.mubr.bf16.gmra.mrb[0].mxu0 %v1319
        %v2789 = vpop.f32.mrb[0].mxu0
        %v2790 = vadd.f32 %v2197, %v2789
        %v2791 = vpop.f32.mrb[0].mxu0
        %v2792 = vadd.f32 %v2199, %v2791
        %v2793 = vpop.f32.mrb[0].mxu0
        %v2794 = vadd.f32 %v2201, %v2793
        %v2795 = vpop.f32.mrb[0].mxu0
        %v2796 = vadd.f32 %v2203, %v2795
        %2797 = vmatprep.mubr.bf16.mxu0 %v1322
        %2798 = vmatmul.mubr.bf16.gmra.mrb[0].mxu0 %v1320
        %v2799 = vpop.f32.mrb[0].mxu0
        %v2800 = vadd.f32 %v2207, %v2799
        %v2801 = vpop.f32.mrb[0].mxu0
        %v2802 = vadd.f32 %v2209, %v2801
        %v2803 = vpop.f32.mrb[0].mxu0
        %v2804 = vadd.f32 %v2211, %v2803
        %v2805 = vpop.f32.mrb[0].mxu0
        %v2806 = vadd.f32 %v2213, %v2805
        %2807 = vmatprep.mubr.bf16.mxu0 %v1323
        %2808 = vmatmul.mubr.bf16.gmra.mrb[0].mxu0 %v1321
        %v2809 = vpop.f32.mrb[0].mxu0
        %v2810 = vadd.f32 %v2217, %v2809
        %v2811 = vpop.f32.mrb[0].mxu0
        %v2812 = vadd.f32 %v2219, %v2811
        %v2813 = vpop.f32.mrb[0].mxu0
        %v2814 = vadd.f32 %v2221, %v2813
        %v2815 = vpop.f32.mrb[0].mxu0
        %v2816 = vadd.f32 %v2223, %v2815
        %2817 = vmatprep.mubr.bf16.mxu0 %v1324
        %2818 = vmatmul.mubr.bf16.gmra.mrb[0].mxu0 %v1322
        %v2819 = vpop.f32.mrb[0].mxu0
        %v2820 = vadd.f32 %v2227, %v2819
        %v2821 = vpop.f32.mrb[0].mxu0
        %v2822 = vadd.f32 %v2229, %v2821
        %v2823 = vpop.f32.mrb[0].mxu0
        %v2824 = vadd.f32 %v2231, %v2823
        %v2825 = vpop.f32.mrb[0].mxu0
        %v2826 = vadd.f32 %v2233, %v2825
        %2827 = vmatprep.mubr.bf16.mxu0 %v1325
        %2828 = vmatmul.mubr.bf16.gmra.mrb[0].mxu0 %v1323
        %v2829 = vpop.f32.mrb[0].mxu0
        %v2830 = vadd.f32 %v2237, %v2829
        %v2831 = vpop.f32.mrb[0].mxu0
        %v2832 = vadd.f32 %v2239, %v2831
        %v2833 = vpop.f32.mrb[0].mxu0
        %v2834 = vadd.f32 %v2241, %v2833
        %v2835 = vpop.f32.mrb[0].mxu0
        %v2836 = vadd.f32 %v2243, %v2835
        %2837 = vmatprep.mubr.bf16.mxu0 %v1326
        %2838 = vmatmul.mubr.bf16.gmra.mrb[0].mxu0 %v1324
        %v2839 = vpop.f32.mrb[0].mxu0
        %v2840 = vadd.f32 %v2247, %v2839
        %v2841 = vpop.f32.mrb[0].mxu0
        %v2842 = vadd.f32 %v2249, %v2841
        %v2843 = vpop.f32.mrb[0].mxu0
        %v2844 = vadd.f32 %v2251, %v2843
        %v2845 = vpop.f32.mrb[0].mxu0
        %v2846 = vadd.f32 %v2253, %v2845
        %2847 = vmatprep.mubr.bf16.mxu0 %v1327
        %2848 = vmatmul.mubr.bf16.gmra.mrb[0].mxu0 %v1325
        %v2849 = vpop.f32.mrb[0].mxu0
        %v2850 = vadd.f32 %v2257, %v2849
        %v2851 = vpop.f32.mrb[0].mxu0
        %v2852 = vadd.f32 %v2259, %v2851
        %v2853 = vpop.f32.mrb[0].mxu0
        %v2854 = vadd.f32 %v2261, %v2853
        %v2855 = vpop.f32.mrb[0].mxu0
        %v2856 = vadd.f32 %v2263, %v2855
        %2857 = vmatprep.mubr.bf16.mxu0 %v1328
        %2858 = vmatmul.mubr.bf16.gmra.mrb[0].mxu0 %v1326
        %v2859 = vpop.f32.mrb[0].mxu0
        %v2860 = vadd.f32 %v2267, %v2859
        %v2861 = vpop.f32.mrb[0].mxu0
        %v2862 = vadd.f32 %v2269, %v2861
        %v2863 = vpop.f32.mrb[0].mxu0
        %v2864 = vadd.f32 %v2271, %v2863
        %v2865 = vpop.f32.mrb[0].mxu0
        %v2866 = vadd.f32 %v2273, %v2865
        %2867 = vmatprep.mubr.bf16.mxu0 %v1329
        %2868 = vmatmul.mubr.bf16.gmra.mrb[0].mxu0 %v1327
        %v2869 = vpop.f32.mrb[0].mxu0
        %v2870 = vadd.f32 %v2277, %v2869
        %v2871 = vpop.f32.mrb[0].mxu0
        %v2872 = vadd.f32 %v2279, %v2871
        %v2873 = vpop.f32.mrb[0].mxu0
        %v2874 = vadd.f32 %v2281, %v2873
        %v2875 = vpop.f32.mrb[0].mxu0
        %v2876 = vadd.f32 %v2283, %v2875
        %2877 = vmatprep.mubr.bf16.mxu0 %v1330
        %2878 = vmatmul.mubr.bf16.gmra.mrb[0].mxu0 %v1328
        %v2879 = vpop.f32.mrb[0].mxu0
        %v2880 = vadd.f32 %v2287, %v2879
        %v2881 = vpop.f32.mrb[0].mxu0
        %v2882 = vadd.f32 %v2289, %v2881
        %v2883 = vpop.f32.mrb[0].mxu0
        %v2884 = vadd.f32 %v2291, %v2883
        %v2885 = vpop.f32.mrb[0].mxu0
        %v2886 = vadd.f32 %v2293, %v2885
        %2887 = vmatprep.mubr.bf16.mxu0 %v1331
        %2888 = vmatmul.mubr.bf16.gmra.mrb[0].mxu0 %v1329
        %v2889 = vpop.f32.mrb[0].mxu0
        %v2890 = vadd.f32 %v2297, %v2889
        %v2891 = vpop.f32.mrb[0].mxu0
        %v2892 = vadd.f32 %v2299, %v2891
        %v2893 = vpop.f32.mrb[0].mxu0
        %v2894 = vadd.f32 %v2301, %v2893
        %v2895 = vpop.f32.mrb[0].mxu0
        %v2896 = vadd.f32 %v2303, %v2895
        %2897 = vmatprep.mubr.bf16.mxu0 %v1332
        %2898 = vmatmul.mubr.bf16.gmra.mrb[0].mxu0 %v1330
        %v2899 = vpop.f32.mrb[0].mxu0
        %v2900 = vadd.f32 %v2307, %v2899
        %v2901 = vpop.f32.mrb[0].mxu0
        %v2902 = vadd.f32 %v2309, %v2901
        %v2903 = vpop.f32.mrb[0].mxu0
        %v2904 = vadd.f32 %v2311, %v2903
        %v2905 = vpop.f32.mrb[0].mxu0
        %v2906 = vadd.f32 %v2313, %v2905
        %2907 = vmatprep.mubr.bf16.mxu0 %v1333
        %2908 = vmatmul.mubr.bf16.gmra.mrb[0].mxu0 %v1331
        %v2909 = vpop.f32.mrb[0].mxu0
        %v2910 = vadd.f32 %v2317, %v2909
        %v2911 = vpop.f32.mrb[0].mxu0
        %v2912 = vadd.f32 %v2319, %v2911
        %v2913 = vpop.f32.mrb[0].mxu0
        %v2914 = vadd.f32 %v2321, %v2913
        %v2915 = vpop.f32.mrb[0].mxu0
        %v2916 = vadd.f32 %v2323, %v2915
        %2917 = vmatprep.mubr.bf16.mxu0 %v1334
        %2918 = vmatmul.mubr.bf16.gmra.mrb[0].mxu0 %v1332
        %v2919 = vpop.f32.mrb[0].mxu0
        %v2920 = vadd.f32 %v2327, %v2919
        %v2921 = vpop.f32.mrb[0].mxu0
        %v2922 = vadd.f32 %v2329, %v2921
        %v2923 = vpop.f32.mrb[0].mxu0
        %v2924 = vadd.f32 %v2331, %v2923
        %v2925 = vpop.f32.mrb[0].mxu0
        %v2926 = vadd.f32 %v2333, %v2925
        %2927 = vmatprep.mubr.bf16.mxu0 %v1335
        %2928 = vmatmul.mubr.bf16.gmra.mrb[0].mxu0 %v1333
        %v2929 = vpop.f32.mrb[0].mxu0
        %v2930 = vadd.f32 %v2337, %v2929
        %v2931 = vpop.f32.mrb[0].mxu0
        %v2932 = vadd.f32 %v2339, %v2931
        %v2933 = vpop.f32.mrb[0].mxu0
        %v2934 = vadd.f32 %v2341, %v2933
        %v2935 = vpop.f32.mrb[0].mxu0
        %v2936 = vadd.f32 %v2343, %v2935
        %2937 = vmatprep.mubr.bf16.mxu0 %v1336
        %2938 = vmatmul.mubr.bf16.gmra.mrb[0].mxu0 %v1334
        %v2939 = vpop.f32.mrb[0].mxu0
        %v2940 = vadd.f32 %v2347, %v2939
        %v2941 = vpop.f32.mrb[0].mxu0
        %v2942 = vadd.f32 %v2349, %v2941
        %v2943 = vpop.f32.mrb[0].mxu0
        %v2944 = vadd.f32 %v2351, %v2943
        %v2945 = vpop.f32.mrb[0].mxu0
        %v2946 = vadd.f32 %v2353, %v2945
        %2947 = vmatprep.mubr.bf16.mxu0 %v1337
        %2948 = vmatmul.mubr.bf16.gmra.mrb[0].mxu0 %v1335
        %v2949 = vpop.f32.mrb[0].mxu0
        %v2950 = vadd.f32 %v2357, %v2949
        %v2951 = vpop.f32.mrb[0].mxu0
        %v2952 = vadd.f32 %v2359, %v2951
        %v2953 = vpop.f32.mrb[0].mxu0
        %v2954 = vadd.f32 %v2361, %v2953
        %v2955 = vpop.f32.mrb[0].mxu0
        %v2956 = vadd.f32 %v2363, %v2955
        %2957 = vmatprep.mubr.bf16.mxu0 %v1338
        %2958 = vmatmul.mubr.bf16.gmra.mrb[0].mxu0 %v1336
        %v2959 = vpop.f32.mrb[0].mxu0
        %v2960 = vadd.f32 %v2367, %v2959
        %v2961 = vpop.f32.mrb[0].mxu0
        %v2962 = vadd.f32 %v2369, %v2961
        %v2963 = vpop.f32.mrb[0].mxu0
        %v2964 = vadd.f32 %v2371, %v2963
        %v2965 = vpop.f32.mrb[0].mxu0
        %v2966 = vadd.f32 %v2373, %v2965
        %2967 = vmatprep.mubr.bf16.mxu0 %v1339
        %2968 = vmatmul.mubr.bf16.gmra.mrb[0].mxu0 %v1337
        %v2969 = vpop.f32.mrb[0].mxu0
        %v2970 = vadd.f32 %v2377, %v2969
        %v2971 = vpop.f32.mrb[0].mxu0
        %v2972 = vadd.f32 %v2379, %v2971
        %v2973 = vpop.f32.mrb[0].mxu0
        %v2974 = vadd.f32 %v2381, %v2973
        %v2975 = vpop.f32.mrb[0].mxu0
        %v2976 = vadd.f32 %v2383, %v2975
        %2977 = vmatprep.mubr.bf16.mxu0 %v1340
        %2978 = vmatmul.mubr.bf16.gmra.mrb[0].mxu0 %v1338
        %v2979 = vpop.f32.mrb[0].mxu0
        %v2980 = vadd.f32 %v2387, %v2979
        %v2981 = vpop.f32.mrb[0].mxu0
        %v2982 = vadd.f32 %v2389, %v2981
        %v2983 = vpop.f32.mrb[0].mxu0
        %v2984 = vadd.f32 %v2391, %v2983
        %v2985 = vpop.f32.mrb[0].mxu0
        %v2986 = vadd.f32 %v2393, %v2985
        %2987 = vmatprep.mubr.bf16.mxu0 %v1341
        %2988 = vmatmul.mubr.bf16.gmra.mrb[0].mxu0 %v1339
        %v2989 = vpop.f32.mrb[0].mxu0
        %v2990 = vadd.f32 %v2397, %v2989
        %v2991 = vpop.f32.mrb[0].mxu0
        %v2992 = vadd.f32 %v2399, %v2991
        %v2993 = vpop.f32.mrb[0].mxu0
        %v2994 = vadd.f32 %v2401, %v2993
        %v2995 = vpop.f32.mrb[0].mxu0
        %v2996 = vadd.f32 %v2403, %v2995
        %2997 = vmatprep.mubr.bf16.mxu0 %v1342
        %2998 = vmatmul.mubr.bf16.gmra.mrb[0].mxu0 %v1340
        %v2999 = vpop.f32.mrb[0].mxu0
        %v3000 = vadd.f32 %v2407, %v2999
        %v3001 = vpop.f32.mrb[0].mxu0
        %v3002 = vadd.f32 %v2409, %v3001
        %v3003 = vpop.f32.mrb[0].mxu0
        %v3004 = vadd.f32 %v2411, %v3003
        %v3005 = vpop.f32.mrb[0].mxu0
        %v3006 = vadd.f32 %v2413, %v3005
        %3007 = vmatprep.mubr.bf16.mxu0 %v1343
        %3008 = vmatmul.mubr.bf16.gmra.mrb[0].mxu0 %v1341
        %v3009 = vpop.f32.mrb[0].mxu0
        %v3010 = vadd.f32 %v2417, %v3009
        %v3011 = vpop.f32.mrb[0].mxu0
        %v3012 = vadd.f32 %v2419, %v3011
        %v3013 = vpop.f32.mrb[0].mxu0
        %v3014 = vadd.f32 %v2421, %v3013
        %v3015 = vpop.f32.mrb[0].mxu0
        %v3016 = vadd.f32 %v2423, %v3015
        %3017 = vmatprep.mubr.bf16.mxu0 %v1344
        %3018 = vmatmul.mubr.bf16.gmra.mrb[0].mxu0 %v1342
        %v3019 = vpop.f32.mrb[0].mxu0
        %v3020 = vadd.f32 %v2427, %v3019
        %v3021 = vpop.f32.mrb[0].mxu0
        %v3022 = vadd.f32 %v2429, %v3021
        %v3023 = vpop.f32.mrb[0].mxu0
        %v3024 = vadd.f32 %v2431, %v3023
        %v3025 = vpop.f32.mrb[0].mxu0
        %v3026 = vadd.f32 %v2433, %v3025
        %3027 = vmatprep.mubr.bf16.mxu0 %v1345
        %3028 = vmatmul.mubr.bf16.gmra.mrb[0].mxu0 %v1343
        %v3029 = vpop.f32.mrb[0].mxu0
        %v3030 = vadd.f32 %v2437, %v3029
        %v3031 = vpop.f32.mrb[0].mxu0
        %v3032 = vadd.f32 %v2439, %v3031
        %v3033 = vpop.f32.mrb[0].mxu0
        %v3034 = vadd.f32 %v2441, %v3033
        %v3035 = vpop.f32.mrb[0].mxu0
        %v3036 = vadd.f32 %v2443, %v3035
        %3037 = vmatprep.mubr.bf16.mxu0 %v1346
        %3038 = vmatmul.mubr.bf16.gmra.mrb[0].mxu0 %v1344
        %v3039 = vpop.f32.mrb[0].mxu0
        %v3040 = vadd.f32 %v2447, %v3039
        %v3041 = vpop.f32.mrb[0].mxu0
        %v3042 = vadd.f32 %v2449, %v3041
        %v3043 = vpop.f32.mrb[0].mxu0
        %v3044 = vadd.f32 %v2451, %v3043
        %v3045 = vpop.f32.mrb[0].mxu0
        %v3046 = vadd.f32 %v2453, %v3045
        %3047 = vmatprep.mubr.bf16.mxu0 %v1347
        %3048 = vmatmul.mubr.bf16.gmra.mrb[0].mxu0 %v1345
        %v3049 = vpop.f32.mrb[0].mxu0
        %v3050 = vadd.f32 %v2457, %v3049
        %v3051 = vpop.f32.mrb[0].mxu0
        %v3052 = vadd.f32 %v2459, %v3051
        %v3053 = vpop.f32.mrb[0].mxu0
        %v3054 = vadd.f32 %v2461, %v3053
        %v3055 = vpop.f32.mrb[0].mxu0
        %v3056 = vadd.f32 %v2463, %v3055
        %3057 = vmatprep.mubr.bf16.mxu0 %v1412
        %3058 = vmatmul.mubr.bf16.gmra.mrb[0].mxu0 %v1346
        %v3059 = vpop.f32.mrb[0].mxu0
        %v3060 = vadd.f32 %v2467, %v3059
        %v3061 = vpop.f32.mrb[0].mxu0
        %v3062 = vadd.f32 %v2469, %v3061
        %v3063 = vpop.f32.mrb[0].mxu0
        %v3064 = vadd.f32 %v2471, %v3063
        %v3065 = vpop.f32.mrb[0].mxu0
        %v3066 = vadd.f32 %v2473, %v3065
        %3067 = vmatprep.mubr.bf16.mxu0 %v1413
        %3068 = vmatmul.mubr.bf16.gmra.mrb[0].mxu0 %v1347
        %v3069 = vpop.f32.mrb[0].mxu0
        %v3070 = vadd.f32 %v2477, %v3069
        %v3071 = vpop.f32.mrb[0].mxu0
        %v3072 = vadd.f32 %v2479, %v3071
        %v3073 = vpop.f32.mrb[0].mxu0
        %v3074 = vadd.f32 %v2481, %v3073
        %v3075 = vpop.f32.mrb[0].mxu0
        %v3076 = vadd.f32 %v2483, %v3075
        %3077 = vmatprep.mubr.bf16.mxu0 %v1424
        %3078 = vmatmul.mubr.bf16.gmra.mrb[0].mxu0 %v1412
        %v3079 = vpop.f32.mrb[0].mxu0
        %v3080 = vadd.f32 %v2487, %v3079
        %v3081 = vpop.f32.mrb[0].mxu0
        %v3082 = vadd.f32 %v2489, %v3081
        %v3083 = vpop.f32.mrb[0].mxu0
        %v3084 = vadd.f32 %v2491, %v3083
        %v3085 = vpop.f32.mrb[0].mxu0
        %v3086 = vadd.f32 %v2493, %v3085
        %3087 = vmatprep.mubr.bf16.mxu0 %v1425
        %3088 = vmatmul.mubr.bf16.gmra.mrb[0].mxu0 %v1413
        %v3089 = vpop.f32.mrb[0].mxu0
        %v3090 = vadd.f32 %v2497, %v3089
        %v3091 = vpop.f32.mrb[0].mxu0
        %v3092 = vadd.f32 %v2499, %v3091
        %v3093 = vpop.f32.mrb[0].mxu0
        %v3094 = vadd.f32 %v2501, %v3093
        %v3095 = vpop.f32.mrb[0].mxu0
        %v3096 = vadd.f32 %v2503, %v3095
        %3097 = vmatprep.mubr.bf16.mxu0 %v1436
        %3098 = vmatmul.mubr.bf16.gmra.mrb[0].mxu0 %v1424
        %v3099 = vpop.f32.mrb[0].mxu0
        %v3100 = vadd.f32 %v2507, %v3099
        %v3101 = vpop.f32.mrb[0].mxu0
        %v3102 = vadd.f32 %v2509, %v3101
        %v3103 = vpop.f32.mrb[0].mxu0
        %v3104 = vadd.f32 %v2511, %v3103
        %v3105 = vpop.f32.mrb[0].mxu0
        %v3106 = vadd.f32 %v2513, %v3105
        %3107 = vmatprep.mubr.bf16.mxu0 %v1437
        %3108 = vmatmul.mubr.bf16.gmra.mrb[0].mxu0 %v1425
        %v3109 = vpop.f32.mrb[0].mxu0
        %v3110 = vadd.f32 %v2517, %v3109
        %v3111 = vpop.f32.mrb[0].mxu0
        %v3112 = vadd.f32 %v2519, %v3111
        %v3113 = vpop.f32.mrb[0].mxu0
        %v3114 = vadd.f32 %v2521, %v3113
        %v3115 = vpop.f32.mrb[0].mxu0
        %v3116 = vadd.f32 %v2523, %v3115
        %3117 = vdwg.mxu0
        %3118 = vmatprep.subr.bf16.mxu0 %v1837
        %3119 = vmatpush1.bf16.msra.mxu0 %v1836
        %3120 = vmatprep.subr.bf16.mxu0 %v1839
        %3121 = vmatpush1.bf16.msra.mxu0 %v1838
        %3122 = vmatprep.subr.bf16.mxu0 %v1841
        %3123 = vmatpush1.bf16.msra.mxu0 %v1840
        %3124 = vmatprep.subr.bf16.mxu0 %v1843
        %3125 = vmatpush1.bf16.msra.mxu0 %v1842
        %3126 = vmatprep.subr.bf16.mxu0 %v1845
        %3127 = vmatpush1.bf16.msra.mxu0 %v1844
        %3128 = vmatprep.subr.bf16.mxu0 %v1847
        %3129 = vmatpush1.bf16.msra.mxu0 %v1846
        %3130 = vmatprep.subr.bf16.mxu0 %v1849
        %3131 = vmatpush1.bf16.msra.mxu0 %v1848
        %3132 = vmatprep.subr.bf16.mxu0 %v1851
        %3133 = vmatpush1.bf16.msra.mxu0 %v1850
        %3134 = vmatprep.subr.bf16.mxu0 0
        %3135 = vmatpush1.bf16.msra.mxu0 0
        %3136 = vmatprep.subr.bf16.mxu0 0
        %3137 = vmatpush1.bf16.msra.mxu0 0
        %3138 = vmatprep.subr.bf16.mxu0 0
        %3139 = vmatpush1.bf16.msra.mxu0 0
        %3140 = vmatprep.subr.bf16.mxu0 0
        %3141 = vmatpush1.bf16.msra.mxu0 0
        %3142 = vmatprep.subr.bf16.mxu0 0
        %3143 = vmatpush1.bf16.msra.mxu0 0
        %3144 = vmatprep.subr.bf16.mxu0 0
        %3145 = vmatpush1.bf16.msra.mxu0 0
        %3146 = vmatprep.subr.bf16.mxu0 0
        %3147 = vmatpush1.bf16.msra.mxu0 0
        %3148 = vmatprep.subr.bf16.mxu0 0
        %3149 = vmatpush1.bf16.msra.mxu0 0
        %3150 = vmatprep.mubr.bf16.mxu0 0
        %3151 = vmatmul.mubr.bf16.gmra.mrb[0].mxu0 %v1300
        %v3152 = vpop.f32.mrb[0].mxu0
        %v3153 = vadd.f32 %v2560, %v3152
        %v3154 = vpop.f32.mrb[0].mxu0
        %v3155 = vadd.f32 %v2562, %v3154
        %v3156 = vpop.f32.mrb[0].mxu0
        %v3157 = vadd.f32 %v2564, %v3156
        %v3158 = vpop.f32.mrb[0].mxu0
        %v3159 = vadd.f32 %v2566, %v3158
        %3160 = vmatprep.mubr.bf16.mxu0 0
        %3161 = vmatmul.mubr.bf16.gmra.mrb[0].mxu0 %v1301
        %v3162 = vpop.f32.mrb[0].mxu0
        %v3163 = vadd.f32 %v2570, %v3162
        %v3164 = vpop.f32.mrb[0].mxu0
        %v3165 = vadd.f32 %v2572, %v3164
        %v3166 = vpop.f32.mrb[0].mxu0
        %v3167 = vadd.f32 %v2574, %v3166
        %v3168 = vpop.f32.mrb[0].mxu0
        %v3169 = vadd.f32 %v2576, %v3168
        %3170 = vmatprep.mubr.bf16.mxu0 0
        %3171 = vmatmul.mubr.bf16.gmra.mrb[0].mxu0 %v1302
        %v3172 = vpop.f32.mrb[0].mxu0
        %v3173 = vadd.f32 %v2580, %v3172
        %v3174 = vpop.f32.mrb[0].mxu0
        %v3175 = vadd.f32 %v2582, %v3174
        %v3176 = vpop.f32.mrb[0].mxu0
        %v3177 = vadd.f32 %v2584, %v3176
        %v3178 = vpop.f32.mrb[0].mxu0
        %v3179 = vadd.f32 %v2586, %v3178
        %3180 = vmatprep.mubr.bf16.mxu0 0
        %3181 = vmatmul.mubr.bf16.gmra.mrb[0].mxu0 %v1303
        %v3182 = vpop.f32.mrb[0].mxu0
        %v3183 = vadd.f32 %v2590, %v3182
        %v3184 = vpop.f32.mrb[0].mxu0
        %v3185 = vadd.f32 %v2592, %v3184
        %v3186 = vpop.f32.mrb[0].mxu0
        %v3187 = vadd.f32 %v2594, %v3186
        %v3188 = vpop.f32.mrb[0].mxu0
        %v3189 = vadd.f32 %v2596, %v3188
        %3190 = vmatprep.mubr.bf16.mxu0 0
        %3191 = vmatmul.mubr.bf16.gmra.mrb[0].mxu0 %v1304
        %v3192 = vpop.f32.mrb[0].mxu0
        %v3193 = vadd.f32 %v2600, %v3192
        %v3194 = vpop.f32.mrb[0].mxu0
        %v3195 = vadd.f32 %v2602, %v3194
        %v3196 = vpop.f32.mrb[0].mxu0
        %v3197 = vadd.f32 %v2604, %v3196
        %v3198 = vpop.f32.mrb[0].mxu0
        %v3199 = vadd.f32 %v2606, %v3198
        %3200 = vmatprep.mubr.bf16.mxu0 0
        %3201 = vmatmul.mubr.bf16.gmra.mrb[0].mxu0 %v1305
        %v3202 = vpop.f32.mrb[0].mxu0
        %v3203 = vadd.f32 %v2610, %v3202
        %v3204 = vpop.f32.mrb[0].mxu0
        %v3205 = vadd.f32 %v2612, %v3204
        %v3206 = vpop.f32.mrb[0].mxu0
        %v3207 = vadd.f32 %v2614, %v3206
        %v3208 = vpop.f32.mrb[0].mxu0
        %v3209 = vadd.f32 %v2616, %v3208
        %3210 = vmatprep.mubr.bf16.mxu0 0
        %3211 = vmatmul.mubr.bf16.gmra.mrb[0].mxu0 %v1306
        %v3212 = vpop.f32.mrb[0].mxu0
        %v3213 = vadd.f32 %v2620, %v3212
        %v3214 = vpop.f32.mrb[0].mxu0
        %v3215 = vadd.f32 %v2622, %v3214
        %v3216 = vpop.f32.mrb[0].mxu0
        %v3217 = vadd.f32 %v2624, %v3216
        %v3218 = vpop.f32.mrb[0].mxu0
        %v3219 = vadd.f32 %v2626, %v3218
        %3220 = vmatprep.mubr.bf16.mxu0 0
        %3221 = vmatmul.mubr.bf16.gmra.mrb[0].mxu0 %v1307
        %v3222 = vpop.f32.mrb[0].mxu0
        %v3223 = vadd.f32 %v2630, %v3222
        %v3224 = vpop.f32.mrb[0].mxu0
        %v3225 = vadd.f32 %v2632, %v3224
        %v3226 = vpop.f32.mrb[0].mxu0
        %v3227 = vadd.f32 %v2634, %v3226
        %v3228 = vpop.f32.mrb[0].mxu0
        %v3229 = vadd.f32 %v2636, %v3228
        %3230 = vmatprep.mubr.bf16.mxu0 0
        %3231 = vmatmul.mubr.bf16.gmra.mrb[0].mxu0 %v1308
        %v3232 = vpop.f32.mrb[0].mxu0
        %v3233 = vadd.f32 %v2640, %v3232
        %v3234 = vpop.f32.mrb[0].mxu0
        %v3235 = vadd.f32 %v2642, %v3234
        %v3236 = vpop.f32.mrb[0].mxu0
        %v3237 = vadd.f32 %v2644, %v3236
        %v3238 = vpop.f32.mrb[0].mxu0
        %v3239 = vadd.f32 %v2646, %v3238
        %3240 = vmatprep.mubr.bf16.mxu0 0
        %3241 = vmatmul.mubr.bf16.gmra.mrb[0].mxu0 %v1309
        %v3242 = vpop.f32.mrb[0].mxu0
        %v3243 = vadd.f32 %v2650, %v3242
        %v3244 = vpop.f32.mrb[0].mxu0
        %v3245 = vadd.f32 %v2652, %v3244
        %v3246 = vpop.f32.mrb[0].mxu0
        %v3247 = vadd.f32 %v2654, %v3246
        %v3248 = vpop.f32.mrb[0].mxu0
        %v3249 = vadd.f32 %v2656, %v3248
        %3250 = vmatprep.mubr.bf16.mxu0 0
        %3251 = vmatmul.mubr.bf16.gmra.mrb[0].mxu0 %v1310
        %v3252 = vpop.f32.mrb[0].mxu0
        %v3253 = vadd.f32 %v2660, %v3252
        %v3254 = vpop.f32.mrb[0].mxu0
        %v3255 = vadd.f32 %v2662, %v3254
        %v3256 = vpop.f32.mrb[0].mxu0
        %v3257 = vadd.f32 %v2664, %v3256
        %v3258 = vpop.f32.mrb[0].mxu0
        %v3259 = vadd.f32 %v2666, %v3258
        %3260 = vmatprep.mubr.bf16.mxu0 0
        %3261 = vmatmul.mubr.bf16.gmra.mrb[0].mxu0 %v1311
        %v3262 = vpop.f32.mrb[0].mxu0
        %v3263 = vadd.f32 %v2670, %v3262
        %v3264 = vpop.f32.mrb[0].mxu0
        %v3265 = vadd.f32 %v2672, %v3264
        %v3266 = vpop.f32.mrb[0].mxu0
        %v3267 = vadd.f32 %v2674, %v3266
        %v3268 = vpop.f32.mrb[0].mxu0
        %v3269 = vadd.f32 %v2676, %v3268
        %3270 = vmatprep.mubr.bf16.mxu0 0
        %3271 = vmatmul.mubr.bf16.gmra.mrb[0].mxu0 %v1312
        %v3272 = vpop.f32.mrb[0].mxu0
        %v3273 = vadd.f32 %v2680, %v3272
        %v3274 = vpop.f32.mrb[0].mxu0
        %v3275 = vadd.f32 %v2682, %v3274
        %v3276 = vpop.f32.mrb[0].mxu0
        %v3277 = vadd.f32 %v2684, %v3276
        %v3278 = vpop.f32.mrb[0].mxu0
        %v3279 = vadd.f32 %v2686, %v3278
        %3280 = vmatprep.mubr.bf16.mxu0 0
        %3281 = vmatmul.mubr.bf16.gmra.mrb[0].mxu0 %v1313
        %v3282 = vpop.f32.mrb[0].mxu0
        %v3283 = vadd.f32 %v2690, %v3282
        %v3284 = vpop.f32.mrb[0].mxu0
        %v3285 = vadd.f32 %v2692, %v3284
        %v3286 = vpop.f32.mrb[0].mxu0
        %v3287 = vadd.f32 %v2694, %v3286
        %v3288 = vpop.f32.mrb[0].mxu0
        %v3289 = vadd.f32 %v2696, %v3288
        %3290 = vmatprep.mubr.bf16.mxu0 0
        %3291 = vmatmul.mubr.bf16.gmra.mrb[0].mxu0 %v1314
        %v3292 = vpop.f32.mrb[0].mxu0
        %v3293 = vadd.f32 %v2700, %v3292
        %v3294 = vpop.f32.mrb[0].mxu0
        %v3295 = vadd.f32 %v2702, %v3294
        %v3296 = vpop.f32.mrb[0].mxu0
        %v3297 = vadd.f32 %v2704, %v3296
        %v3298 = vpop.f32.mrb[0].mxu0
        %v3299 = vadd.f32 %v2706, %v3298
        %3300 = vmatprep.mubr.bf16.mxu0 0
        %3301 = vmatmul.mubr.bf16.gmra.mrb[0].mxu0 %v1315
        %v3302 = vpop.f32.mrb[0].mxu0
        %v3303 = vadd.f32 %v2710, %v3302
        %v3304 = vpop.f32.mrb[0].mxu0
        %v3305 = vadd.f32 %v2712, %v3304
        %v3306 = vpop.f32.mrb[0].mxu0
        %v3307 = vadd.f32 %v2714, %v3306
        %v3308 = vpop.f32.mrb[0].mxu0
        %v3309 = vadd.f32 %v2716, %v3308
        %3310 = vmatprep.mubr.bf16.mxu0 0
        %3311 = vmatmul.mubr.bf16.gmra.mrb[0].mxu0 %v1316
        %v3312 = vpop.f32.mrb[0].mxu0
        %v3313 = vadd.f32 %v2720, %v3312
        %v3314 = vpop.f32.mrb[0].mxu0
        %v3315 = vadd.f32 %v2722, %v3314
        %v3316 = vpop.f32.mrb[0].mxu0
        %v3317 = vadd.f32 %v2724, %v3316
        %v3318 = vpop.f32.mrb[0].mxu0
        %v3319 = vadd.f32 %v2726, %v3318
        %3320 = vmatprep.mubr.bf16.mxu0 0
        %3321 = vmatmul.mubr.bf16.gmra.mrb[0].mxu0 %v1317
        %v3322 = vpop.f32.mrb[0].mxu0
        %v3323 = vadd.f32 %v2730, %v3322
        %v3324 = vpop.f32.mrb[0].mxu0
        %v3325 = vadd.f32 %v2732, %v3324
        %v3326 = vpop.f32.mrb[0].mxu0
        %v3327 = vadd.f32 %v2734, %v3326
        %v3328 = vpop.f32.mrb[0].mxu0
        %v3329 = vadd.f32 %v2736, %v3328
        %3330 = vmatprep.mubr.bf16.mxu0 0
        %3331 = vmatmul.mubr.bf16.gmra.mrb[0].mxu0 %v1318
        %v3332 = vpop.f32.mrb[0].mxu0
        %v3333 = vadd.f32 %v2740, %v3332
        %v3334 = vpop.f32.mrb[0].mxu0
        %v3335 = vadd.f32 %v2742, %v3334
        %v3336 = vpop.f32.mrb[0].mxu0
        %v3337 = vadd.f32 %v2744, %v3336
        %v3338 = vpop.f32.mrb[0].mxu0
        %v3339 = vadd.f32 %v2746, %v3338
        %3340 = vmatprep.mubr.bf16.mxu0 0
        %3341 = vmatmul.mubr.bf16.gmra.mrb[0].mxu0 %v1319
        %v3342 = vpop.f32.mrb[0].mxu0
        %v3343 = vadd.f32 %v2750, %v3342
        %v3344 = vpop.f32.mrb[0].mxu0
        %v3345 = vadd.f32 %v2752, %v3344
        %v3346 = vpop.f32.mrb[0].mxu0
        %v3347 = vadd.f32 %v2754, %v3346
        %v3348 = vpop.f32.mrb[0].mxu0
        %v3349 = vadd.f32 %v2756, %v3348
        %3350 = vmatprep.mubr.bf16.mxu0 0
        %3351 = vmatmul.mubr.bf16.gmra.mrb[0].mxu0 %v1320
        %v3352 = vpop.f32.mrb[0].mxu0
        %v3353 = vadd.f32 %v2760, %v3352
        %v3354 = vpop.f32.mrb[0].mxu0
        %v3355 = vadd.f32 %v2762, %v3354
        %v3356 = vpop.f32.mrb[0].mxu0
        %v3357 = vadd.f32 %v2764, %v3356
        %v3358 = vpop.f32.mrb[0].mxu0
        %v3359 = vadd.f32 %v2766, %v3358
        %3360 = vmatprep.mubr.bf16.mxu0 0
        %3361 = vmatmul.mubr.bf16.gmra.mrb[0].mxu0 %v1321
        %v3362 = vpop.f32.mrb[0].mxu0
        %v3363 = vadd.f32 %v2770, %v3362
        %v3364 = vpop.f32.mrb[0].mxu0
        %v3365 = vadd.f32 %v2772, %v3364
        %v3366 = vpop.f32.mrb[0].mxu0
        %v3367 = vadd.f32 %v2774, %v3366
        %v3368 = vpop.f32.mrb[0].mxu0
        %v3369 = vadd.f32 %v2776, %v3368
        %3370 = vmatprep.mubr.bf16.mxu0 0
        %3371 = vmatmul.mubr.bf16.gmra.mrb[0].mxu0 %v1322
        %v3372 = vpop.f32.mrb[0].mxu0
        %v3373 = vadd.f32 %v2780, %v3372
        %v3374 = vpop.f32.mrb[0].mxu0
        %v3375 = vadd.f32 %v2782, %v3374
        %v3376 = vpop.f32.mrb[0].mxu0
        %v3377 = vadd.f32 %v2784, %v3376
        %v3378 = vpop.f32.mrb[0].mxu0
        %v3379 = vadd.f32 %v2786, %v3378
        %3380 = vmatprep.mubr.bf16.mxu0 0
        %3381 = vmatmul.mubr.bf16.gmra.mrb[0].mxu0 %v1323
        %v3382 = vpop.f32.mrb[0].mxu0
        %v3383 = vadd.f32 %v2790, %v3382
        %v3384 = vpop.f32.mrb[0].mxu0
        %v3385 = vadd.f32 %v2792, %v3384
        %v3386 = vpop.f32.mrb[0].mxu0
        %v3387 = vadd.f32 %v2794, %v3386
        %v3388 = vpop.f32.mrb[0].mxu0
        %v3389 = vadd.f32 %v2796, %v3388
        %3390 = vmatprep.mubr.bf16.mxu0 0
        %3391 = vmatmul.mubr.bf16.gmra.mrb[0].mxu0 %v1324
        %v3392 = vpop.f32.mrb[0].mxu0
        %v3393 = vadd.f32 %v2800, %v3392
        %v3394 = vpop.f32.mrb[0].mxu0
        %v3395 = vadd.f32 %v2802, %v3394
        %v3396 = vpop.f32.mrb[0].mxu0
        %v3397 = vadd.f32 %v2804, %v3396
        %v3398 = vpop.f32.mrb[0].mxu0
        %v3399 = vadd.f32 %v2806, %v3398
        %3400 = vmatprep.mubr.bf16.mxu0 0
        %3401 = vmatmul.mubr.bf16.gmra.mrb[0].mxu0 %v1325
        %v3402 = vpop.f32.mrb[0].mxu0
        %v3403 = vadd.f32 %v2810, %v3402
        %v3404 = vpop.f32.mrb[0].mxu0
        %v3405 = vadd.f32 %v2812, %v3404
        %v3406 = vpop.f32.mrb[0].mxu0
        %v3407 = vadd.f32 %v2814, %v3406
        %v3408 = vpop.f32.mrb[0].mxu0
        %v3409 = vadd.f32 %v2816, %v3408
        %3410 = vmatprep.mubr.bf16.mxu0 0
        %3411 = vmatmul.mubr.bf16.gmra.mrb[0].mxu0 %v1326
        %v3412 = vpop.f32.mrb[0].mxu0
        %v3413 = vadd.f32 %v2820, %v3412
        %v3414 = vpop.f32.mrb[0].mxu0
        %v3415 = vadd.f32 %v2822, %v3414
        %v3416 = vpop.f32.mrb[0].mxu0
        %v3417 = vadd.f32 %v2824, %v3416
        %v3418 = vpop.f32.mrb[0].mxu0
        %v3419 = vadd.f32 %v2826, %v3418
        %3420 = vmatprep.mubr.bf16.mxu0 0
        %3421 = vmatmul.mubr.bf16.gmra.mrb[0].mxu0 %v1327
        %v3422 = vpop.f32.mrb[0].mxu0
        %v3423 = vadd.f32 %v2830, %v3422
        %v3424 = vpop.f32.mrb[0].mxu0
        %v3425 = vadd.f32 %v2832, %v3424
        %v3426 = vpop.f32.mrb[0].mxu0
        %v3427 = vadd.f32 %v2834, %v3426
        %v3428 = vpop.f32.mrb[0].mxu0
        %v3429 = vadd.f32 %v2836, %v3428
        %3430 = vmatprep.mubr.bf16.mxu0 0
        %3431 = vmatmul.mubr.bf16.gmra.mrb[0].mxu0 %v1328
        %v3432 = vpop.f32.mrb[0].mxu0
        %v3433 = vadd.f32 %v2840, %v3432
        %v3434 = vpop.f32.mrb[0].mxu0
        %v3435 = vadd.f32 %v2842, %v3434
        %v3436 = vpop.f32.mrb[0].mxu0
        %v3437 = vadd.f32 %v2844, %v3436
        %v3438 = vpop.f32.mrb[0].mxu0
        %v3439 = vadd.f32 %v2846, %v3438
        %3440 = vmatprep.mubr.bf16.mxu0 0
        %3441 = vmatmul.mubr.bf16.gmra.mrb[0].mxu0 %v1329
        %v3442 = vpop.f32.mrb[0].mxu0
        %v3443 = vadd.f32 %v2850, %v3442
        %v3444 = vpop.f32.mrb[0].mxu0
        %v3445 = vadd.f32 %v2852, %v3444
        %v3446 = vpop.f32.mrb[0].mxu0
        %v3447 = vadd.f32 %v2854, %v3446
        %v3448 = vpop.f32.mrb[0].mxu0
        %v3449 = vadd.f32 %v2856, %v3448
        %3450 = vmatprep.mubr.bf16.mxu0 0
        %3451 = vmatmul.mubr.bf16.gmra.mrb[0].mxu0 %v1330
        %v3452 = vpop.f32.mrb[0].mxu0
        %v3453 = vadd.f32 %v2860, %v3452
        %v3454 = vpop.f32.mrb[0].mxu0
        %v3455 = vadd.f32 %v2862, %v3454
        %v3456 = vpop.f32.mrb[0].mxu0
        %v3457 = vadd.f32 %v2864, %v3456
        %v3458 = vpop.f32.mrb[0].mxu0
        %v3459 = vadd.f32 %v2866, %v3458
        %3460 = vmatprep.mubr.bf16.mxu0 0
        %3461 = vmatmul.mubr.bf16.gmra.mrb[0].mxu0 %v1331
        %v3462 = vpop.f32.mrb[0].mxu0
        %v3463 = vadd.f32 %v2870, %v3462
        %v3464 = vpop.f32.mrb[0].mxu0
        %v3465 = vadd.f32 %v2872, %v3464
        %v3466 = vpop.f32.mrb[0].mxu0
        %v3467 = vadd.f32 %v2874, %v3466
        %v3468 = vpop.f32.mrb[0].mxu0
        %v3469 = vadd.f32 %v2876, %v3468
        %3470 = vmatprep.mubr.bf16.mxu0 0
        %3471 = vmatmul.mubr.bf16.gmra.mrb[0].mxu0 %v1332
        %v3472 = vpop.f32.mrb[0].mxu0
        %v3473 = vadd.f32 %v2880, %v3472
        %v3474 = vpop.f32.mrb[0].mxu0
        %v3475 = vadd.f32 %v2882, %v3474
        %v3476 = vpop.f32.mrb[0].mxu0
        %v3477 = vadd.f32 %v2884, %v3476
        %v3478 = vpop.f32.mrb[0].mxu0
        %v3479 = vadd.f32 %v2886, %v3478
        %3480 = vmatprep.mubr.bf16.mxu0 0
        %3481 = vmatmul.mubr.bf16.gmra.mrb[0].mxu0 %v1333
        %v3482 = vpop.f32.mrb[0].mxu0
        %v3483 = vadd.f32 %v2890, %v3482
        %v3484 = vpop.f32.mrb[0].mxu0
        %v3485 = vadd.f32 %v2892, %v3484
        %v3486 = vpop.f32.mrb[0].mxu0
        %v3487 = vadd.f32 %v2894, %v3486
        %v3488 = vpop.f32.mrb[0].mxu0
        %v3489 = vadd.f32 %v2896, %v3488
        %3490 = vmatprep.mubr.bf16.mxu0 0
        %3491 = vmatmul.mubr.bf16.gmra.mrb[0].mxu0 %v1334
        %v3492 = vpop.f32.mrb[0].mxu0
        %v3493 = vadd.f32 %v2900, %v3492
        %v3494 = vpop.f32.mrb[0].mxu0
        %v3495 = vadd.f32 %v2902, %v3494
        %v3496 = vpop.f32.mrb[0].mxu0
        %v3497 = vadd.f32 %v2904, %v3496
        %v3498 = vpop.f32.mrb[0].mxu0
        %v3499 = vadd.f32 %v2906, %v3498
        %3500 = vmatprep.mubr.bf16.mxu0 0
        %3501 = vmatmul.mubr.bf16.gmra.mrb[0].mxu0 %v1335
        %v3502 = vpop.f32.mrb[0].mxu0
        %v3503 = vadd.f32 %v2910, %v3502
        %v3504 = vpop.f32.mrb[0].mxu0
        %v3505 = vadd.f32 %v2912, %v3504
        %v3506 = vpop.f32.mrb[0].mxu0
        %v3507 = vadd.f32 %v2914, %v3506
        %v3508 = vpop.f32.mrb[0].mxu0
        %v3509 = vadd.f32 %v2916, %v3508
        %3510 = vmatprep.mubr.bf16.mxu0 0
        %3511 = vmatmul.mubr.bf16.gmra.mrb[0].mxu0 %v1336
        %v3512 = vpop.f32.mrb[0].mxu0
        %v3513 = vadd.f32 %v2920, %v3512
        %v3514 = vpop.f32.mrb[0].mxu0
        %v3515 = vadd.f32 %v2922, %v3514
        %v3516 = vpop.f32.mrb[0].mxu0
        %v3517 = vadd.f32 %v2924, %v3516
        %v3518 = vpop.f32.mrb[0].mxu0
        %v3519 = vadd.f32 %v2926, %v3518
        %3520 = vmatprep.mubr.bf16.mxu0 0
        %3521 = vmatmul.mubr.bf16.gmra.mrb[0].mxu0 %v1337
        %v3522 = vpop.f32.mrb[0].mxu0
        %v3523 = vadd.f32 %v2930, %v3522
        %v3524 = vpop.f32.mrb[0].mxu0
        %v3525 = vadd.f32 %v2932, %v3524
        %v3526 = vpop.f32.mrb[0].mxu0
        %v3527 = vadd.f32 %v2934, %v3526
        %v3528 = vpop.f32.mrb[0].mxu0
        %v3529 = vadd.f32 %v2936, %v3528
        %3530 = vmatprep.mubr.bf16.mxu0 0
        %3531 = vmatmul.mubr.bf16.gmra.mrb[0].mxu0 %v1338
        %v3532 = vpop.f32.mrb[0].mxu0
        %v3533 = vadd.f32 %v2940, %v3532
        %v3534 = vpop.f32.mrb[0].mxu0
        %v3535 = vadd.f32 %v2942, %v3534
        %v3536 = vpop.f32.mrb[0].mxu0
        %v3537 = vadd.f32 %v2944, %v3536
        %v3538 = vpop.f32.mrb[0].mxu0
        %v3539 = vadd.f32 %v2946, %v3538
        %3540 = vmatprep.mubr.bf16.mxu0 0
        %3541 = vmatmul.mubr.bf16.gmra.mrb[0].mxu0 %v1339
        %v3542 = vpop.f32.mrb[0].mxu0
        %v3543 = vadd.f32 %v2950, %v3542
        %v3544 = vpop.f32.mrb[0].mxu0
        %v3545 = vadd.f32 %v2952, %v3544
        %v3546 = vpop.f32.mrb[0].mxu0
        %v3547 = vadd.f32 %v2954, %v3546
        %v3548 = vpop.f32.mrb[0].mxu0
        %v3549 = vadd.f32 %v2956, %v3548
        %3550 = vmatprep.mubr.bf16.mxu0 0
        %3551 = vmatmul.mubr.bf16.gmra.mrb[0].mxu0 %v1340
        %v3552 = vpop.f32.mrb[0].mxu0
        %v3553 = vadd.f32 %v2960, %v3552
        %v3554 = vpop.f32.mrb[0].mxu0
        %v3555 = vadd.f32 %v2962, %v3554
        %v3556 = vpop.f32.mrb[0].mxu0
        %v3557 = vadd.f32 %v2964, %v3556
        %v3558 = vpop.f32.mrb[0].mxu0
        %v3559 = vadd.f32 %v2966, %v3558
        %3560 = vmatprep.mubr.bf16.mxu0 0
        %3561 = vmatmul.mubr.bf16.gmra.mrb[0].mxu0 %v1341
        %v3562 = vpop.f32.mrb[0].mxu0
        %v3563 = vadd.f32 %v2970, %v3562
        %v3564 = vpop.f32.mrb[0].mxu0
        %v3565 = vadd.f32 %v2972, %v3564
        %v3566 = vpop.f32.mrb[0].mxu0
        %v3567 = vadd.f32 %v2974, %v3566
        %v3568 = vpop.f32.mrb[0].mxu0
        %v3569 = vadd.f32 %v2976, %v3568
        %3570 = vmatprep.mubr.bf16.mxu0 0
        %3571 = vmatmul.mubr.bf16.gmra.mrb[0].mxu0 %v1342
        %v3572 = vpop.f32.mrb[0].mxu0
        %v3573 = vadd.f32 %v2980, %v3572
        %v3574 = vpop.f32.mrb[0].mxu0
        %v3575 = vadd.f32 %v2982, %v3574
        %v3576 = vpop.f32.mrb[0].mxu0
        %v3577 = vadd.f32 %v2984, %v3576
        %v3578 = vpop.f32.mrb[0].mxu0
        %v3579 = vadd.f32 %v2986, %v3578
        %3580 = vmatprep.mubr.bf16.mxu0 0
        %3581 = vmatmul.mubr.bf16.gmra.mrb[0].mxu0 %v1343
        %v3582 = vpop.f32.mrb[0].mxu0
        %v3583 = vadd.f32 %v2990, %v3582
        %v3584 = vpop.f32.mrb[0].mxu0
        %v3585 = vadd.f32 %v2992, %v3584
        %v3586 = vpop.f32.mrb[0].mxu0
        %v3587 = vadd.f32 %v2994, %v3586
        %v3588 = vpop.f32.mrb[0].mxu0
        %v3589 = vadd.f32 %v2996, %v3588
        %3590 = vmatprep.mubr.bf16.mxu0 0
        %3591 = vmatmul.mubr.bf16.gmra.mrb[0].mxu0 %v1344
        %v3592 = vpop.f32.mrb[0].mxu0
        %v3593 = vadd.f32 %v3000, %v3592
        %v3594 = vpop.f32.mrb[0].mxu0
        %v3595 = vadd.f32 %v3002, %v3594
        %v3596 = vpop.f32.mrb[0].mxu0
        %v3597 = vadd.f32 %v3004, %v3596
        %v3598 = vpop.f32.mrb[0].mxu0
        %v3599 = vadd.f32 %v3006, %v3598
        %3600 = vmatprep.mubr.bf16.mxu0 0
        %3601 = vmatmul.mubr.bf16.gmra.mrb[0].mxu0 %v1345
        %v3602 = vpop.f32.mrb[0].mxu0
        %v3603 = vadd.f32 %v3010, %v3602
        %v3604 = vpop.f32.mrb[0].mxu0
        %v3605 = vadd.f32 %v3012, %v3604
        %v3606 = vpop.f32.mrb[0].mxu0
        %v3607 = vadd.f32 %v3014, %v3606
        %v3608 = vpop.f32.mrb[0].mxu0
        %v3609 = vadd.f32 %v3016, %v3608
        %3610 = vmatprep.mubr.bf16.mxu0 0
        %3611 = vmatmul.mubr.bf16.gmra.mrb[0].mxu0 %v1346
        %v3612 = vpop.f32.mrb[0].mxu0
        %v3613 = vadd.f32 %v3020, %v3612
        %v3614 = vpop.f32.mrb[0].mxu0
        %v3615 = vadd.f32 %v3022, %v3614
        %v3616 = vpop.f32.mrb[0].mxu0
        %v3617 = vadd.f32 %v3024, %v3616
        %v3618 = vpop.f32.mrb[0].mxu0
        %v3619 = vadd.f32 %v3026, %v3618
        %3620 = vmatprep.mubr.bf16.mxu0 0
        %3621 = vmatmul.mubr.bf16.gmra.mrb[0].mxu0 %v1347
        %v3622 = vpop.f32.mrb[0].mxu0
        %v3623 = vadd.f32 %v3030, %v3622
        %v3624 = vpop.f32.mrb[0].mxu0
        %v3625 = vadd.f32 %v3032, %v3624
        %v3626 = vpop.f32.mrb[0].mxu0
        %v3627 = vadd.f32 %v3034, %v3626
        %v3628 = vpop.f32.mrb[0].mxu0
        %v3629 = vadd.f32 %v3036, %v3628
        %3630 = vmatprep.mubr.bf16.mxu0 0
        %3631 = vmatmul.mubr.bf16.gmra.mrb[0].mxu0 %v1412
        %v3632 = vpop.f32.mrb[0].mxu0
        %v3633 = vadd.f32 %v3040, %v3632
        %v3634 = vpop.f32.mrb[0].mxu0
        %v3635 = vadd.f32 %v3042, %v3634
        %v3636 = vpop.f32.mrb[0].mxu0
        %v3637 = vadd.f32 %v3044, %v3636
        %v3638 = vpop.f32.mrb[0].mxu0
        %v3639 = vadd.f32 %v3046, %v3638
        %3640 = vmatprep.mubr.bf16.mxu0 0
        %3641 = vmatmul.mubr.bf16.gmra.mrb[0].mxu0 %v1413
        %v3642 = vpop.f32.mrb[0].mxu0
        %v3643 = vadd.f32 %v3050, %v3642
        %v3644 = vpop.f32.mrb[0].mxu0
        %v3645 = vadd.f32 %v3052, %v3644
        %v3646 = vpop.f32.mrb[0].mxu0
        %v3647 = vadd.f32 %v3054, %v3646
        %v3648 = vpop.f32.mrb[0].mxu0
        %v3649 = vadd.f32 %v3056, %v3648
        %3650 = vmatprep.mubr.bf16.mxu0 0
        %3651 = vmatmul.mubr.bf16.gmra.mrb[0].mxu0 %v1424
        %v3652 = vpop.f32.mrb[0].mxu0
        %v3653 = vadd.f32 %v3060, %v3652
        %v3654 = vpop.f32.mrb[0].mxu0
        %v3655 = vadd.f32 %v3062, %v3654
        %v3656 = vpop.f32.mrb[0].mxu0
        %v3657 = vadd.f32 %v3064, %v3656
        %v3658 = vpop.f32.mrb[0].mxu0
        %v3659 = vadd.f32 %v3066, %v3658
        %3660 = vmatprep.mubr.bf16.mxu0 0
        %3661 = vmatmul.mubr.bf16.gmra.mrb[0].mxu0 %v1425
        %v3662 = vpop.f32.mrb[0].mxu0
        %v3663 = vadd.f32 %v3070, %v3662
        %v3664 = vpop.f32.mrb[0].mxu0
        %v3665 = vadd.f32 %v3072, %v3664
        %v3666 = vpop.f32.mrb[0].mxu0
        %v3667 = vadd.f32 %v3074, %v3666
        %v3668 = vpop.f32.mrb[0].mxu0
        %v3669 = vadd.f32 %v3076, %v3668
        %3670 = vmatprep.mubr.bf16.mxu0 0
        %3671 = vmatmul.mubr.bf16.gmra.mrb[0].mxu0 %v1436
        %v3672 = vpop.f32.mrb[0].mxu0
        %v3673 = vadd.f32 %v3080, %v3672
        %v3674 = vpop.f32.mrb[0].mxu0
        %v3675 = vadd.f32 %v3082, %v3674
        %v3676 = vpop.f32.mrb[0].mxu0
        %v3677 = vadd.f32 %v3084, %v3676
        %v3678 = vpop.f32.mrb[0].mxu0
        %v3679 = vadd.f32 %v3086, %v3678
        %3680 = vmatprep.mubr.bf16.mxu0 0
        %3681 = vmatmul.mubr.bf16.gmra.mrb[0].mxu0 %v1437
        %v3682 = vpop.f32.mrb[0].mxu0
        %v3683 = vadd.f32 %v3090, %v3682
        %v3684 = vpop.f32.mrb[0].mxu0
        %v3685 = vadd.f32 %v3092, %v3684
        %v3686 = vpop.f32.mrb[0].mxu0
        %v3687 = vadd.f32 %v3094, %v3686
        %v3688 = vpop.f32.mrb[0].mxu0
        %v3689 = vadd.f32 %v3096, %v3688
        %3690 = vmatprep.mubr.bf16.mxu0 0
        %3691 = vmatmul.mubr.bf16.gmra.mrb[0].mxu0 %v1448
        %v3692 = vpop.f32.mrb[0].mxu0
        %v3693 = vadd.f32 %v3100, %v3692
        %v3694 = vpop.f32.mrb[0].mxu0
        %v3695 = vadd.f32 %v3102, %v3694
        %v3696 = vpop.f32.mrb[0].mxu0
        %v3697 = vadd.f32 %v3104, %v3696
        %v3698 = vpop.f32.mrb[0].mxu0
        %v3699 = vadd.f32 %v3106, %v3698
        %3700 = vmatprep.mubr.bf16.mxu0 0
        %3701 = vmatmul.mubr.bf16.gmra.mrb[0].mxu0 %v1449
        %v3702 = vpop.f32.mrb[0].mxu0
        %v3703 = vadd.f32 %v3110, %v3702
        %v3704 = vpop.f32.mrb[0].mxu0
        %v3705 = vadd.f32 %v3112, %v3704
        %v3706 = vpop.f32.mrb[0].mxu0
        %v3707 = vadd.f32 %v3114, %v3706
        %v3708 = vpop.f32.mrb[0].mxu0
        %v3709 = vadd.f32 %v3116, %v3708
        %3710 = vdwg.mxu0
        %v3711 = vmax.f32 %v3153, %v3173
        %v3712 = vmax.f32 %v3155, %v3175
        %v3713 = vmax.f32 %v3157, %v3177
        %v3714 = vmax.f32 %v3159, %v3179
        %v3715 = vmax.f32 %v3163, %v3183
        %v3716 = vmax.f32 %v3165, %v3185
        %v3717 = vmax.f32 %v3167, %v3187
        %v3718 = vmax.f32 %v3169, %v3189
        %v3719 = vmax.f32 %v3193, %v3213
        %v3720 = vmax.f32 %v3195, %v3215
        %v3721 = vmax.f32 %v3197, %v3217
        %v3722 = vmax.f32 %v3199, %v3219
        %v3723 = vmax.f32 %v3203, %v3223
        %v3724 = vmax.f32 %v3205, %v3225
        %v3725 = vmax.f32 %v3207, %v3227
        %v3726 = vmax.f32 %v3209, %v3229
        %v3727 = vmax.f32 %v3233, %v3253
        %v3728 = vmax.f32 %v3235, %v3255
        %v3729 = vmax.f32 %v3237, %v3257
        %v3730 = vmax.f32 %v3239, %v3259
        %v3731 = vmax.f32 %v3243, %v3263
        %v3732 = vmax.f32 %v3245, %v3265
        %v3733 = vmax.f32 %v3247, %v3267
        %v3734 = vmax.f32 %v3249, %v3269
        %v3735 = vmax.f32 %v3273, %v3293
        %v3736 = vmax.f32 %v3275, %v3295
        %v3737 = vmax.f32 %v3277, %v3297
        %v3738 = vmax.f32 %v3279, %v3299
        %v3739 = vmax.f32 %v3283, %v3303
        %v3740 = vmax.f32 %v3285, %v3305
        %v3741 = vmax.f32 %v3287, %v3307
        %v3742 = vmax.f32 %v3289, %v3309
        %v3743 = vmax.f32 %v3313, %v3333
        %v3744 = vmax.f32 %v3315, %v3335
        %v3745 = vmax.f32 %v3317, %v3337
        %v3746 = vmax.f32 %v3319, %v3339
        %v3747 = vmax.f32 %v3323, %v3343
        %v3748 = vmax.f32 %v3325, %v3345
        %v3749 = vmax.f32 %v3327, %v3347
        %v3750 = vmax.f32 %v3329, %v3349
        %v3751 = vmax.f32 %v3353, %v3373
        %v3752 = vmax.f32 %v3355, %v3375
        %v3753 = vmax.f32 %v3357, %v3377
        %v3754 = vmax.f32 %v3359, %v3379
        %v3755 = vmax.f32 %v3363, %v3383
        %v3756 = vmax.f32 %v3365, %v3385
        %v3757 = vmax.f32 %v3367, %v3387
        %v3758 = vmax.f32 %v3369, %v3389
        %v3759 = vmax.f32 %v3393, %v3413
        %v3760 = vmax.f32 %v3395, %v3415
        %v3761 = vmax.f32 %v3397, %v3417
        %v3762 = vmax.f32 %v3399, %v3419
        %v3763 = vmax.f32 %v3403, %v3423
        %v3764 = vmax.f32 %v3405, %v3425
        %v3765 = vmax.f32 %v3407, %v3427
        %v3766 = vmax.f32 %v3409, %v3429
        %v3767 = vmax.f32 %v3433, %v3453
        %v3768 = vmax.f32 %v3435, %v3455
        %v3769 = vmax.f32 %v3437, %v3457
        %v3770 = vmax.f32 %v3439, %v3459
        %v3771 = vmax.f32 %v3443, %v3463
        %v3772 = vmax.f32 %v3445, %v3465
        %v3773 = vmax.f32 %v3447, %v3467
        %v3774 = vmax.f32 %v3449, %v3469
        %v3775 = vmax.f32 %v3473, %v3493
        %v3776 = vmax.f32 %v3475, %v3495
        %v3777 = vmax.f32 %v3477, %v3497
        %v3778 = vmax.f32 %v3479, %v3499
        %v3779 = vmax.f32 %v3483, %v3503
        %v3780 = vmax.f32 %v3485, %v3505
        %v3781 = vmax.f32 %v3487, %v3507
        %v3782 = vmax.f32 %v3489, %v3509
        %v3783 = vmax.f32 %v3513, %v3533
        %v3784 = vmax.f32 %v3515, %v3535
        %v3785 = vmax.f32 %v3517, %v3537
        %v3786 = vmax.f32 %v3519, %v3539
        %v3787 = vmax.f32 %v3523, %v3543
        %v3788 = vmax.f32 %v3525, %v3545
        %v3789 = vmax.f32 %v3527, %v3547
        %v3790 = vmax.f32 %v3529, %v3549
        %v3791 = vmax.f32 %v3553, %v3573
        %v3792 = vmax.f32 %v3555, %v3575
        %v3793 = vmax.f32 %v3557, %v3577
        %v3794 = vmax.f32 %v3559, %v3579
        %v3795 = vmax.f32 %v3563, %v3583
        %v3796 = vmax.f32 %v3565, %v3585
        %v3797 = vmax.f32 %v3567, %v3587
        %v3798 = vmax.f32 %v3569, %v3589
        %v3799 = vmax.f32 %v3593, %v3613
        %v3800 = vmax.f32 %v3595, %v3615
        %v3801 = vmax.f32 %v3597, %v3617
        %v3802 = vmax.f32 %v3599, %v3619
        %v3803 = vmax.f32 %v3603, %v3623
        %v3804 = vmax.f32 %v3605, %v3625
        %v3805 = vmax.f32 %v3607, %v3627
        %v3806 = vmax.f32 %v3609, %v3629
        %v3807 = vmax.f32 %v3633, %v3653
        %v3808 = vmax.f32 %v3635, %v3655
        %v3809 = vmax.f32 %v3637, %v3657
        %v3810 = vmax.f32 %v3639, %v3659
        %v3811 = vmax.f32 %v3643, %v3663
        %v3812 = vmax.f32 %v3645, %v3665
        %v3813 = vmax.f32 %v3647, %v3667
        %v3814 = vmax.f32 %v3649, %v3669
        %v3815 = vmax.f32 %v3673, %v3693
        %v3816 = vmax.f32 %v3675, %v3695
        %v3817 = vmax.f32 %v3677, %v3697
        %v3818 = vmax.f32 %v3679, %v3699
        %v3819 = vmax.f32 %v3683, %v3703
        %v3820 = vmax.f32 %v3685, %v3705
        %v3821 = vmax.f32 %v3687, %v3707
        %v3822 = vmax.f32 %v3689, %v3709
        %v3823 = vmax.f32 %v3711, %v3712
        %v3824 = vmax.f32 %v3713, %v3714
        %v3825 = vmax.f32 %v3715, %v3716
        %v3826 = vmax.f32 %v3717, %v3718
        %v3827 = vmax.f32 %v3719, %v3720
        %v3828 = vmax.f32 %v3721, %v3722
        %v3829 = vmax.f32 %v3723, %v3724
        %v3830 = vmax.f32 %v3725, %v3726
        %v3831 = vmax.f32 %v3727, %v3728
        %v3832 = vmax.f32 %v3729, %v3730
        %v3833 = vmax.f32 %v3731, %v3732
        %v3834 = vmax.f32 %v3733, %v3734
        %v3835 = vmax.f32 %v3735, %v3736
        %v3836 = vmax.f32 %v3737, %v3738
        %v3837 = vmax.f32 %v3739, %v3740
        %v3838 = vmax.f32 %v3741, %v3742
        %v3839 = vmax.f32 %v3743, %v3744
        %v3840 = vmax.f32 %v3745, %v3746
        %v3841 = vmax.f32 %v3747, %v3748
        %v3842 = vmax.f32 %v3749, %v3750
        %v3843 = vmax.f32 %v3751, %v3752
        %v3844 = vmax.f32 %v3753, %v3754
        %v3845 = vmax.f32 %v3755, %v3756
        %v3846 = vmax.f32 %v3757, %v3758
        %v3847 = vmax.f32 %v3759, %v3760
        %v3848 = vmax.f32 %v3761, %v3762
        %v3849 = vmax.f32 %v3763, %v3764
        %v3850 = vmax.f32 %v3765, %v3766
        %v3851 = vmax.f32 %v3767, %v3768
        %v3852 = vmax.f32 %v3769, %v3770
        %v3853 = vmax.f32 %v3771, %v3772
        %v3854 = vmax.f32 %v3773, %v3774
        %v3855 = vmax.f32 %v3775, %v3776
        %v3856 = vmax.f32 %v3777, %v3778
        %v3857 = vmax.f32 %v3779, %v3780
        %v3858 = vmax.f32 %v3781, %v3782
        %v3859 = vmax.f32 %v3783, %v3784
        %v3860 = vmax.f32 %v3785, %v3786
        %v3861 = vmax.f32 %v3787, %v3788
        %v3862 = vmax.f32 %v3789, %v3790
        %v3863 = vmax.f32 %v3791, %v3792
        %v3864 = vmax.f32 %v3793, %v3794
        %v3865 = vmax.f32 %v3795, %v3796
        %v3866 = vmax.f32 %v3797, %v3798
        %v3867 = vmax.f32 %v3799, %v3800
        %v3868 = vmax.f32 %v3801, %v3802
        %v3869 = vmax.f32 %v3803, %v3804
        %v3870 = vmax.f32 %v3805, %v3806
        %v3871 = vmax.f32 %v3807, %v3808
        %v3872 = vmax.f32 %v3809, %v3810
        %v3873 = vmax.f32 %v3811, %v3812
        %v3874 = vmax.f32 %v3813, %v3814
        %v3875 = vmax.f32 %v3815, %v3816
        %v3876 = vmax.f32 %v3817, %v3818
        %v3877 = vmax.f32 %v3819, %v3820
        %v3878 = vmax.f32 %v3821, %v3822
        %v3879 = vld [vmem:[%s2] sm:$0x1]
        %v3881 = vlaneseq
        %v3882 = vshrl.u32 %v3881, 7
        %v3883 = vsub.s32 0, %v3882
        %v3884 = vrot.slane %v3879, %v3883
        %v3886 = vadd.f32 %v3823, %v3884
        %v3887 = vadd.f32 %v3824, %v3884
        %v3888 = vadd.f32 %v3825, %v3884
        %v3889 = vadd.f32 %v3826, %v3884
        %v3890 = vadd.f32 %v3827, %v3884
        %v3891 = vadd.f32 %v3828, %v3884
        %v3892 = vadd.f32 %v3829, %v3884
        %v3893 = vadd.f32 %v3830, %v3884
        %v3894 = vadd.f32 %v3831, %v3884
        %v3895 = vadd.f32 %v3832, %v3884
        %v3896 = vadd.f32 %v3833, %v3884
        %v3897 = vadd.f32 %v3834, %v3884
        %v3898 = vadd.f32 %v3835, %v3884
        %v3899 = vadd.f32 %v3836, %v3884
        %v3900 = vadd.f32 %v3837, %v3884
        %v3901 = vadd.f32 %v3838, %v3884
        %v3902 = vadd.f32 %v3839, %v3884
        %v3903 = vadd.f32 %v3840, %v3884
        %v3904 = vadd.f32 %v3841, %v3884
        %v3905 = vadd.f32 %v3842, %v3884
        %v3906 = vadd.f32 %v3843, %v3884
        %v3907 = vadd.f32 %v3844, %v3884
        %v3908 = vadd.f32 %v3845, %v3884
        %v3909 = vadd.f32 %v3846, %v3884
        %v3910 = vadd.f32 %v3847, %v3884
        %v3911 = vadd.f32 %v3848, %v3884
        %v3912 = vadd.f32 %v3849, %v3884
        %v3913 = vadd.f32 %v3850, %v3884
        %v3914 = vadd.f32 %v3851, %v3884
        %v3915 = vadd.f32 %v3852, %v3884
        %v3916 = vadd.f32 %v3853, %v3884
        %v3917 = vadd.f32 %v3854, %v3884
        %v3918 = vadd.f32 %v3855, %v3884
        %v3919 = vadd.f32 %v3856, %v3884
        %v3920 = vadd.f32 %v3857, %v3884
        %v3921 = vadd.f32 %v3858, %v3884
        %v3922 = vadd.f32 %v3859, %v3884
        %v3923 = vadd.f32 %v3860, %v3884
        %v3924 = vadd.f32 %v3861, %v3884
        %v3925 = vadd.f32 %v3862, %v3884
        %v3926 = vadd.f32 %v3863, %v3884
        %v3927 = vadd.f32 %v3864, %v3884
        %v3928 = vadd.f32 %v3865, %v3884
        %v3929 = vadd.f32 %v3866, %v3884
        %v3930 = vadd.f32 %v3867, %v3884
        %v3931 = vadd.f32 %v3868, %v3884
        %v3932 = vadd.f32 %v3869, %v3884
        %v3933 = vadd.f32 %v3870, %v3884
        %v3934 = vadd.f32 %v3871, %v3884
        %v3935 = vadd.f32 %v3872, %v3884
        %v3936 = vadd.f32 %v3873, %v3884
        %v3937 = vadd.f32 %v3874, %v3884
        %v3938 = vadd.f32 %v3875, %v3884
        %v3939 = vadd.f32 %v3876, %v3884
        %v3940 = vadd.f32 %v3877, %v3884
        %v3941 = vadd.f32 %v3878, %v3884
        %v3942 = vpack.c.bf16 %v3887, %v3886
        %v3943 = vpack.c.bf16 %v3889, %v3888
        %v3944 = vpack.c.bf16 %v3891, %v3890
        %v3945 = vpack.c.bf16 %v3893, %v3892
        %v3946 = vpack.c.bf16 %v3895, %v3894
        %v3947 = vpack.c.bf16 %v3897, %v3896
        %v3948 = vpack.c.bf16 %v3899, %v3898
        %v3949 = vpack.c.bf16 %v3901, %v3900
        %v3950 = vpack.c.bf16 %v3903, %v3902
        %v3951 = vpack.c.bf16 %v3905, %v3904
        %v3952 = vpack.c.bf16 %v3907, %v3906
        %v3953 = vpack.c.bf16 %v3909, %v3908
        %v3954 = vpack.c.bf16 %v3911, %v3910
        %v3955 = vpack.c.bf16 %v3913, %v3912
        %v3956 = vpack.c.bf16 %v3915, %v3914
        %v3957 = vpack.c.bf16 %v3917, %v3916
        %v3958 = vpack.c.bf16 %v3919, %v3918
        %v3959 = vpack.c.bf16 %v3921, %v3920
        %v3960 = vpack.c.bf16 %v3923, %v3922
        %v3961 = vpack.c.bf16 %v3925, %v3924
        %v3962 = vpack.c.bf16 %v3927, %v3926
        %v3963 = vpack.c.bf16 %v3929, %v3928
        %v3964 = vpack.c.bf16 %v3931, %v3930
        %v3965 = vpack.c.bf16 %v3933, %v3932
        %v3966 = vpack.c.bf16 %v3935, %v3934
        %v3967 = vpack.c.bf16 %v3937, %v3936
        %v3968 = vpack.c.bf16 %v3939, %v3938
        %v3969 = vpack.c.bf16 %v3941, %v3940
        %v3970 = vld [vmem:[%s3] sm:$0xff]
        %v3971 = vld [vmem:[%s3 + $0x8] sm:$0xff]
        %v3972 = vld [vmem:[%s3 + $0x10] sm:$0xff]
        %v3973 = vld [vmem:[%s3 + $0x18] sm:$0xff]
        %v3974 = vld [vmem:[%s3 + $0x20] sm:$0xff]
        %v3975 = vld [vmem:[%s3 + $0x28] sm:$0xff]
        %v3976 = vld [vmem:[%s3 + $0x30] sm:$0xff]
        %v3977 = vld [vmem:[%s3 + $0x38] sm:$0xff]
        %v3978 = vld [vmem:[%s3 + $0x40] sm:$0xff]
        %v3979 = vld [vmem:[%s3 + $0x48] sm:$0xff]
        %v3980 = vld [vmem:[%s3 + $0x50] sm:$0xff]
        %v3981 = vld [vmem:[%s3 + $0x58] sm:$0xff]
        %v3982 = vld [vmem:[%s3 + $0x60] sm:$0xff]
        %v3983 = vld [vmem:[%s3 + $0x68] sm:$0xff]
        %v3984 = vld [vmem:[%s3 + $0x70] sm:$0xff]
        %v3985 = vld [vmem:[%s3 + $0x78] sm:$0xff]
        %v3986 = vld [vmem:[%s3 + $0x80] sm:$0xff]
        %v3987 = vld [vmem:[%s3 + $0x88] sm:$0xff]
        %v3988 = vld [vmem:[%s3 + $0x90] sm:$0xff]
        %v3989 = vld [vmem:[%s3 + $0x98] sm:$0xff]
        %v3990 = vld [vmem:[%s3 + $0xa0] sm:$0xff]
        %v3991 = vld [vmem:[%s3 + $0xa8] sm:$0xff]
        %v3992 = vld [vmem:[%s3 + $0xb0] sm:$0xff]
        %v3993 = vld [vmem:[%s3 + $0xb8] sm:$0xff]
        %v3994 = vld [vmem:[%s3 + $0xc0] sm:$0xff]
        %v3995 = vld [vmem:[%s3 + $0xc8] sm:$0xff]
        %v3996 = vld [vmem:[%s3 + $0xd0] sm:$0xff]
        %v3997 = vld [vmem:[%s3 + $0xd8] sm:$0xff]
        %v3998 = vld [vmem:[%s3 + $0xe0] sm:$0xff]
        %v3999 = vld [vmem:[%s3 + $0xe8] sm:$0xff]
        %v4000 = vld [vmem:[%s3 + $0xf0] sm:$0xff]
        %v4001 = vld [vmem:[%s3 + $0xf8] sm:$0xff]
        %v4002 = vld [vmem:[%s3 + $0x100] sm:$0xff]
        %v4003 = vld [vmem:[%s3 + $0x108] sm:$0xff]
        %v4004 = vld [vmem:[%s3 + $0x110] sm:$0xff]
        %v4005 = vld [vmem:[%s3 + $0x118] sm:$0xff]
        %v4006 = vld [vmem:[%s3 + $0x120] sm:$0xff]
        %v4007 = vld [vmem:[%s3 + $0x128] sm:$0xff]
        %v4008 = vld [vmem:[%s3 + $0x130] sm:$0xff]
        %v4009 = vld [vmem:[%s3 + $0x138] sm:$0xff]
        %v4010 = vld [vmem:[%s3 + $0x140] sm:$0xff]
        %v4011 = vld [vmem:[%s3 + $0x148] sm:$0xff]
        %v4012 = vld [vmem:[%s3 + $0x150] sm:$0xff]
        %v4013 = vld [vmem:[%s3 + $0x158] sm:$0xff]
        %v4014 = vld [vmem:[%s3 + $0x160] sm:$0xff]
        %v4015 = vld [vmem:[%s3 + $0x168] sm:$0xff]
        %v4016 = vld [vmem:[%s3 + $0x170] sm:$0xff]
        %v4017 = vld [vmem:[%s3 + $0x178] sm:$0xff]
        %v4018 = vld [vmem:[%s3 + $0x180] sm:$0xff]
        %v4019 = vld [vmem:[%s3 + $0x188] sm:$0xff]
        %v4020 = vld [vmem:[%s3 + $0x190] sm:$0xff]
        %v4021 = vld [vmem:[%s3 + $0x198] sm:$0xff]
        %v4022 = vld [vmem:[%s3 + $0x1a0] sm:$0xff]
        %v4023 = vld [vmem:[%s3 + $0x1a8] sm:$0xff]
        %v4024 = vld [vmem:[%s3 + $0x1b0] sm:$0xff]
        %v4025 = vld [vmem:[%s3 + $0x1b8] sm:$0xff]
        %v4026 = vld [vmem:[%s3 + $0x1c0] sm:$0xff]
        %v4027 = vld [vmem:[%s3 + $0x1c8] sm:$0xff]
        %v4028 = vld [vmem:[%s3 + $0x1d0] sm:$0xff]
        %v4029 = vld [vmem:[%s3 + $0x1d8] sm:$0xff]
        %v4030 = vld [vmem:[%s3 + $0x1e0] sm:$0xff]
        %v4031 = vld [vmem:[%s3 + $0x1e8] sm:$0xff]
        %v4032 = vld [vmem:[%s3 + $0x1f0] sm:$0xff]
        %v4033 = vld [vmem:[%s3 + $0x1f8] sm:$0xff]
        %v4034 = vld [vmem:[%s3 + $0x200] sm:$0xff]
        %v4035 = vld [vmem:[%s3 + $0x208] sm:$0xff]
        %v4036 = vld [vmem:[%s3 + $0x210] sm:$0xff]
        %v4037 = vld [vmem:[%s3 + $0x218] sm:$0xff]
        %v4038 = vld [vmem:[%s3 + $0x220] sm:$0xff]
        %v4039 = vld [vmem:[%s3 + $0x228] sm:$0xff]
        %v4040 = vld [vmem:[%s3 + $0x230] sm:$0xff]
        %v4041 = vld [vmem:[%s3 + $0x238] sm:$0xff]
        %v4042 = vld [vmem:[%s3 + $0x240] sm:$0xff]
        %v4043 = vld [vmem:[%s3 + $0x248] sm:$0xff]
        %v4044 = vld [vmem:[%s3 + $0x250] sm:$0xff]
        %v4045 = vld [vmem:[%s3 + $0x258] sm:$0xff]
        %v4046 = vld [vmem:[%s3 + $0x260] sm:$0xff]
        %v4047 = vld [vmem:[%s3 + $0x268] sm:$0xff]
        %v4048 = vld [vmem:[%s3 + $0x270] sm:$0xff]
        %v4049 = vld [vmem:[%s3 + $0x278] sm:$0xff]
        %v4130 = vunpack.c.l.b16 %v3970
        %v4131 = vunpack.c.h.b16 %v3970
        %v4132 = vunpack.c.l.b16 %v3971
        %v4133 = vunpack.c.h.b16 %v3971
        %v4134 = vunpack.c.l.b16 %v3972
        %v4135 = vunpack.c.h.b16 %v3972
        %v4136 = vunpack.c.l.b16 %v3973
        %v4137 = vunpack.c.h.b16 %v3973
        %v4138 = vunpack.c.l.b16 %v3974
        %v4139 = vunpack.c.h.b16 %v3974
        %v4140 = vunpack.c.l.b16 %v3975
        %v4141 = vunpack.c.h.b16 %v3975
        %v4142 = vunpack.c.l.b16 %v3976
        %v4143 = vunpack.c.h.b16 %v3976
        %v4144 = vunpack.c.l.b16 %v3977
        %v4145 = vunpack.c.h.b16 %v3977
        %v4146 = vunpack.c.l.b16 %v3978
        %v4147 = vunpack.c.h.b16 %v3978
        %v4148 = vunpack.c.l.b16 %v3979
        %v4149 = vunpack.c.h.b16 %v3979
        %v4150 = vunpack.c.l.b16 %v3980
        %v4151 = vunpack.c.h.b16 %v3980
        %v4152 = vunpack.c.l.b16 %v3981
        %v4153 = vunpack.c.h.b16 %v3981
        %v4154 = vunpack.c.l.b16 %v3982
        %v4155 = vunpack.c.h.b16 %v3982
        %v4156 = vunpack.c.l.b16 %v3983
        %v4157 = vunpack.c.h.b16 %v3983
        %v4158 = vunpack.c.l.b16 %v3984
        %v4159 = vunpack.c.h.b16 %v3984
        %v4160 = vunpack.c.l.b16 %v3985
        %v4161 = vunpack.c.h.b16 %v3985
        %v4162 = vunpack.c.l.b16 %v3986
        %v4163 = vunpack.c.h.b16 %v3986
        %v4164 = vunpack.c.l.b16 %v3987
        %v4165 = vunpack.c.h.b16 %v3987
        %v4166 = vunpack.c.l.b16 %v3988
        %v4167 = vunpack.c.h.b16 %v3988
        %v4168 = vunpack.c.l.b16 %v3989
        %v4169 = vunpack.c.h.b16 %v3989
        %v4170 = vunpack.c.l.b16 %v3990
        %v4171 = vunpack.c.h.b16 %v3990
        %v4172 = vunpack.c.l.b16 %v3991
        %v4173 = vunpack.c.h.b16 %v3991
        %v4174 = vunpack.c.l.b16 %v3992
        %v4175 = vunpack.c.h.b16 %v3992
        %v4176 = vunpack.c.l.b16 %v3993
        %v4177 = vunpack.c.h.b16 %v3993
        %v4178 = vunpack.c.l.b16 %v3994
        %v4179 = vunpack.c.h.b16 %v3994
        %v4180 = vunpack.c.l.b16 %v3995
        %v4181 = vunpack.c.h.b16 %v3995
        %v4182 = vunpack.c.l.b16 %v3996
        %v4183 = vunpack.c.h.b16 %v3996
        %v4184 = vunpack.c.l.b16 %v3997
        %v4185 = vunpack.c.h.b16 %v3997
        %v4186 = vunpack.c.l.b16 %v3998
        %v4187 = vunpack.c.h.b16 %v3998
        %v4188 = vunpack.c.l.b16 %v3999
        %v4189 = vunpack.c.h.b16 %v3999
        %v4190 = vunpack.c.l.b16 %v4000
        %v4191 = vunpack.c.h.b16 %v4000
        %v4192 = vunpack.c.l.b16 %v4001
        %v4193 = vunpack.c.h.b16 %v4001
        %v4194 = vunpack.c.l.b16 %v4002
        %v4195 = vunpack.c.h.b16 %v4002
        %v4196 = vunpack.c.l.b16 %v4003
        %v4197 = vunpack.c.h.b16 %v4003
        %v4198 = vunpack.c.l.b16 %v4004
        %v4199 = vunpack.c.h.b16 %v4004
        %v4200 = vunpack.c.l.b16 %v4005
        %v4201 = vunpack.c.h.b16 %v4005
        %v4202 = vunpack.c.l.b16 %v4006
        %v4203 = vunpack.c.h.b16 %v4006
        %v4204 = vunpack.c.l.b16 %v4007
        %v4205 = vunpack.c.h.b16 %v4007
        %v4206 = vunpack.c.l.b16 %v4008
        %v4207 = vunpack.c.h.b16 %v4008
        %v4208 = vunpack.c.l.b16 %v4009
        %v4209 = vunpack.c.h.b16 %v4009
        %v4210 = vunpack.c.l.b16 %v4010
        %v4211 = vunpack.c.h.b16 %v4010
        %v4212 = vunpack.c.l.b16 %v4011
        %v4213 = vunpack.c.h.b16 %v4011
        %v4214 = vunpack.c.l.b16 %v4012
        %v4215 = vunpack.c.h.b16 %v4012
        %v4216 = vunpack.c.l.b16 %v4013
        %v4217 = vunpack.c.h.b16 %v4013
        %v4218 = vunpack.c.l.b16 %v4014
        %v4219 = vunpack.c.h.b16 %v4014
        %v4220 = vunpack.c.l.b16 %v4015
        %v4221 = vunpack.c.h.b16 %v4015
        %v4222 = vunpack.c.l.b16 %v4016
        %v4223 = vunpack.c.h.b16 %v4016
        %v4224 = vunpack.c.l.b16 %v4017
        %v4225 = vunpack.c.h.b16 %v4017
        %v4226 = vunpack.c.l.b16 %v4018
        %v4227 = vunpack.c.h.b16 %v4018
        %v4228 = vunpack.c.l.b16 %v4019
        %v4229 = vunpack.c.h.b16 %v4019
        %v4230 = vunpack.c.l.b16 %v4020
        %v4231 = vunpack.c.h.b16 %v4020
        %v4232 = vunpack.c.l.b16 %v4021
        %v4233 = vunpack.c.h.b16 %v4021
        %v4234 = vunpack.c.l.b16 %v4022
        %v4235 = vunpack.c.h.b16 %v4022
        %v4236 = vunpack.c.l.b16 %v4023
        %v4237 = vunpack.c.h.b16 %v4023
        %v4238 = vunpack.c.l.b16 %v4024
        %v4239 = vunpack.c.h.b16 %v4024
        %v4240 = vunpack.c.l.b16 %v4025
        %v4241 = vunpack.c.h.b16 %v4025
        %v4242 = vunpack.c.l.b16 %v4026
        %v4243 = vunpack.c.h.b16 %v4026
        %v4244 = vunpack.c.l.b16 %v4027
        %v4245 = vunpack.c.h.b16 %v4027
        %v4246 = vunpack.c.l.b16 %v4028
        %v4247 = vunpack.c.h.b16 %v4028
        %v4248 = vunpack.c.l.b16 %v4029
        %v4249 = vunpack.c.h.b16 %v4029
        %v4250 = vunpack.c.l.b16 %v4030
        %v4251 = vunpack.c.h.b16 %v4030
        %v4252 = vunpack.c.l.b16 %v4031
        %v4253 = vunpack.c.h.b16 %v4031
        %v4254 = vunpack.c.l.b16 %v4032
        %v4255 = vunpack.c.h.b16 %v4032
        %v4256 = vunpack.c.l.b16 %v4033
        %v4257 = vunpack.c.h.b16 %v4033
        %v4258 = vunpack.c.l.b16 %v4034
        %v4259 = vunpack.c.h.b16 %v4034
        %v4260 = vunpack.c.l.b16 %v4035
        %v4261 = vunpack.c.h.b16 %v4035
        %v4262 = vunpack.c.l.b16 %v4036
        %v4263 = vunpack.c.h.b16 %v4036
        %v4264 = vunpack.c.l.b16 %v4037
        %v4265 = vunpack.c.h.b16 %v4037
        %v4266 = vunpack.c.l.b16 %v4038
        %v4267 = vunpack.c.h.b16 %v4038
        %v4268 = vunpack.c.l.b16 %v4039
        %v4269 = vunpack.c.h.b16 %v4039
        %v4270 = vunpack.c.l.b16 %v4040
        %v4271 = vunpack.c.h.b16 %v4040
        %v4272 = vunpack.c.l.b16 %v4041
        %v4273 = vunpack.c.h.b16 %v4041
        %v4274 = vunpack.c.l.b16 %v4042
        %v4275 = vunpack.c.h.b16 %v4042
        %v4276 = vunpack.c.l.b16 %v4043
        %v4277 = vunpack.c.h.b16 %v4043
        %v4278 = vunpack.c.l.b16 %v4044
        %v4279 = vunpack.c.h.b16 %v4044
        %v4280 = vunpack.c.l.b16 %v4045
        %v4281 = vunpack.c.h.b16 %v4045
        %v4282 = vunpack.c.l.b16 %v4046
        %v4283 = vunpack.c.h.b16 %v4046
        %v4284 = vunpack.c.l.b16 %v4047
        %v4285 = vunpack.c.h.b16 %v4047
        %v4286 = vunpack.c.l.b16 %v4048
        %v4287 = vunpack.c.h.b16 %v4048
        %v4288 = vunpack.c.l.b16 %v4049
        %v4289 = vunpack.c.h.b16 %v4049
        %v4290 = vpack.c.b16 %v4132, %v4130
        %v4291 = vpack.c.b16 %v4133, %v4131
        %v4292 = vpack.c.b16 %v4136, %v4134
        %v4293 = vpack.c.b16 %v4137, %v4135
        %v4294 = vpack.c.b16 %v4140, %v4138
        %v4295 = vpack.c.b16 %v4141, %v4139
        %v4296 = vpack.c.b16 %v4144, %v4142
        %v4297 = vpack.c.b16 %v4145, %v4143
        %v4298 = vpack.c.b16 %v4148, %v4146
        %v4299 = vpack.c.b16 %v4149, %v4147
        %v4300 = vpack.c.b16 %v4152, %v4150
        %v4301 = vpack.c.b16 %v4153, %v4151
        %v4302 = vpack.c.b16 %v4156, %v4154
        %v4303 = vpack.c.b16 %v4157, %v4155
        %v4304 = vpack.c.b16 %v4160, %v4158
        %v4305 = vpack.c.b16 %v4161, %v4159
        %v4306 = vpack.c.b16 %v4164, %v4162
        %v4307 = vpack.c.b16 %v4165, %v4163
        %v4308 = vpack.c.b16 %v4168, %v4166
        %v4309 = vpack.c.b16 %v4169, %v4167
        %v4310 = vpack.c.b16 %v4172, %v4170
        %v4311 = vpack.c.b16 %v4173, %v4171
        %v4312 = vpack.c.b16 %v4176, %v4174
        %v4313 = vpack.c.b16 %v4177, %v4175
        %v4314 = vpack.c.b16 %v4180, %v4178
        %v4315 = vpack.c.b16 %v4181, %v4179
        %v4316 = vpack.c.b16 %v4184, %v4182
        %v4317 = vpack.c.b16 %v4185, %v4183
        %v4318 = vpack.c.b16 %v4188, %v4186
        %v4319 = vpack.c.b16 %v4189, %v4187
        %v4320 = vpack.c.b16 %v4192, %v4190
        %v4321 = vpack.c.b16 %v4193, %v4191
        %v4322 = vpack.c.b16 %v4196, %v4194
        %v4323 = vpack.c.b16 %v4197, %v4195
        %v4324 = vpack.c.b16 %v4200, %v4198
        %v4325 = vpack.c.b16 %v4201, %v4199
        %v4326 = vpack.c.b16 %v4204, %v4202
        %v4327 = vpack.c.b16 %v4205, %v4203
        %v4328 = vpack.c.b16 %v4208, %v4206
        %v4329 = vpack.c.b16 %v4209, %v4207
        %v4330 = vpack.c.b16 %v4212, %v4210
        %v4331 = vpack.c.b16 %v4213, %v4211
        %v4332 = vpack.c.b16 %v4216, %v4214
        %v4333 = vpack.c.b16 %v4217, %v4215
        %v4334 = vpack.c.b16 %v4220, %v4218
        %v4335 = vpack.c.b16 %v4221, %v4219
        %v4336 = vpack.c.b16 %v4224, %v4222
        %v4337 = vpack.c.b16 %v4225, %v4223
        %v4338 = vpack.c.b16 %v4228, %v4226
        %v4339 = vpack.c.b16 %v4229, %v4227
        %v4340 = vpack.c.b16 %v4232, %v4230
        %v4341 = vpack.c.b16 %v4233, %v4231
        %v4342 = vpack.c.b16 %v4236, %v4234
        %v4343 = vpack.c.b16 %v4237, %v4235
        %v4344 = vpack.c.b16 %v4240, %v4238
        %v4345 = vpack.c.b16 %v4241, %v4239
        %v4346 = vpack.c.b16 %v4244, %v4242
        %v4347 = vpack.c.b16 %v4245, %v4243
        %v4348 = vpack.c.b16 %v4248, %v4246
        %v4349 = vpack.c.b16 %v4249, %v4247
        %v4350 = vpack.c.b16 %v4252, %v4250
        %v4351 = vpack.c.b16 %v4253, %v4251
        %v4352 = vpack.c.b16 %v4256, %v4254
        %v4353 = vpack.c.b16 %v4257, %v4255
        %v4354 = vpack.c.b16 %v4260, %v4258
        %v4355 = vpack.c.b16 %v4261, %v4259
        %v4356 = vpack.c.b16 %v4264, %v4262
        %v4357 = vpack.c.b16 %v4265, %v4263
        %v4358 = vpack.c.b16 %v4268, %v4266
        %v4359 = vpack.c.b16 %v4269, %v4267
        %v4360 = vpack.c.b16 %v4272, %v4270
        %v4361 = vpack.c.b16 %v4273, %v4271
        %v4362 = vpack.c.b16 %v4276, %v4274
        %v4363 = vpack.c.b16 %v4277, %v4275
        %v4364 = vpack.c.b16 %v4280, %v4278
        %v4365 = vpack.c.b16 %v4281, %v4279
        %v4366 = vpack.c.b16 %v4284, %v4282
        %v4367 = vpack.c.b16 %v4285, %v4283
        %v4368 = vpack.c.b16 %v4288, %v4286
        %v4369 = vpack.c.b16 %v4289, %v4287
        %4450 = vmatprep.subr.bf16.mxu0 %v4291
        %4451 = vmatpush1.bf16.msra.mxu0 %v4290
        %4452 = vmatprep.subr.bf16.mxu0 %v4293
        %4453 = vmatpush1.bf16.msra.mxu0 %v4292
        %4454 = vmatprep.subr.bf16.mxu0 %v4295
        %4455 = vmatpush1.bf16.msra.mxu0 %v4294
        %4456 = vmatprep.subr.bf16.mxu0 %v4297
        %4457 = vmatpush1.bf16.msra.mxu0 %v4296
        %4458 = vmatprep.subr.bf16.mxu0 %v4299
        %4459 = vmatpush1.bf16.msra.mxu0 %v4298
        %4460 = vmatprep.subr.bf16.mxu0 %v4301
        %4461 = vmatpush1.bf16.msra.mxu0 %v4300
        %4462 = vmatprep.subr.bf16.mxu0 %v4303
        %4463 = vmatpush1.bf16.msra.mxu0 %v4302
        %4464 = vmatprep.subr.bf16.mxu0 %v4305
        %4465 = vmatpush1.bf16.msra.mxu0 %v4304
        %4466 = vmatprep.subr.bf16.mxu0 %v4307
        %4467 = vmatpush1.bf16.msra.mxu0 %v4306
        %4468 = vmatprep.subr.bf16.mxu0 %v4309
        %4469 = vmatpush1.bf16.msra.mxu0 %v4308
        %4470 = vmatprep.subr.bf16.mxu0 %v4311
        %4471 = vmatpush1.bf16.msra.mxu0 %v4310
        %4472 = vmatprep.subr.bf16.mxu0 %v4313
        %4473 = vmatpush1.bf16.msra.mxu0 %v4312
        %4474 = vmatprep.subr.bf16.mxu0 %v4315
        %4475 = vmatpush1.bf16.msra.mxu0 %v4314
        %4476 = vmatprep.subr.bf16.mxu0 %v4317
        %4477 = vmatpush1.bf16.msra.mxu0 %v4316
        %4478 = vmatprep.subr.bf16.mxu0 %v4319
        %4479 = vmatpush1.bf16.msra.mxu0 %v4318
        %4480 = vmatprep.subr.bf16.mxu0 %v4321
        %4481 = vmatpush1.bf16.msra.mxu0 %v4320
        %4482 = vmatprep.mubr.bf16.mxu0 %v3944
        %4483 = vmatmul.mubr.bf16.gmra.mrb[0].mxu0 %v3942
        %v4484 = vpop.f32.mrb[0].mxu0
        %v4485 = vadd.f32 0.0, %v4484
        %v4486 = vpop.f32.mrb[0].mxu0
        %v4487 = vadd.f32 0.0, %v4486
        %v4488 = vpop.f32.mrb[0].mxu0
        %v4489 = vadd.f32 0.0, %v4488
        %v4490 = vpop.f32.mrb[0].mxu0
        %v4491 = vadd.f32 0.0, %v4490
        %4492 = vmatprep.mubr.bf16.mxu0 %v3945
        %4493 = vmatmul.mubr.bf16.gmra.mrb[0].mxu0 %v3943
        %v4494 = vpop.f32.mrb[0].mxu0
        %v4495 = vadd.f32 0.0, %v4494
        %v4496 = vpop.f32.mrb[0].mxu0
        %v4497 = vadd.f32 0.0, %v4496
        %v4498 = vpop.f32.mrb[0].mxu0
        %v4499 = vadd.f32 0.0, %v4498
        %v4500 = vpop.f32.mrb[0].mxu0
        %v4501 = vadd.f32 0.0, %v4500
        %4502 = vmatprep.mubr.bf16.mxu0 %v3946
        %4503 = vmatmul.mubr.bf16.gmra.mrb[0].mxu0 %v3944
        %v4504 = vpop.f32.mrb[0].mxu0
        %v4505 = vadd.f32 0.0, %v4504
        %v4506 = vpop.f32.mrb[0].mxu0
        %v4507 = vadd.f32 0.0, %v4506
        %v4508 = vpop.f32.mrb[0].mxu0
        %v4509 = vadd.f32 0.0, %v4508
        %v4510 = vpop.f32.mrb[0].mxu0
        %v4511 = vadd.f32 0.0, %v4510
        %4512 = vmatprep.mubr.bf16.mxu0 %v3947
        %4513 = vmatmul.mubr.bf16.gmra.mrb[0].mxu0 %v3945
        %v4514 = vpop.f32.mrb[0].mxu0
        %v4515 = vadd.f32 0.0, %v4514
        %v4516 = vpop.f32.mrb[0].mxu0
        %v4517 = vadd.f32 0.0, %v4516
        %v4518 = vpop.f32.mrb[0].mxu0
        %v4519 = vadd.f32 0.0, %v4518
        %v4520 = vpop.f32.mrb[0].mxu0
        %v4521 = vadd.f32 0.0, %v4520
        %4522 = vmatprep.mubr.bf16.mxu0 %v3948
        %4523 = vmatmul.mubr.bf16.gmra.mrb[0].mxu0 %v3946
        %v4524 = vpop.f32.mrb[0].mxu0
        %v4525 = vadd.f32 0.0, %v4524
        %v4526 = vpop.f32.mrb[0].mxu0
        %v4527 = vadd.f32 0.0, %v4526
        %v4528 = vpop.f32.mrb[0].mxu0
        %v4529 = vadd.f32 0.0, %v4528
        %v4530 = vpop.f32.mrb[0].mxu0
        %v4531 = vadd.f32 0.0, %v4530
        %4532 = vmatprep.mubr.bf16.mxu0 %v3949
        %4533 = vmatmul.mubr.bf16.gmra.mrb[0].mxu0 %v3947
        %v4534 = vpop.f32.mrb[0].mxu0
        %v4535 = vadd.f32 0.0, %v4534
        %v4536 = vpop.f32.mrb[0].mxu0
        %v4537 = vadd.f32 0.0, %v4536
        %v4538 = vpop.f32.mrb[0].mxu0
        %v4539 = vadd.f32 0.0, %v4538
        %v4540 = vpop.f32.mrb[0].mxu0
        %v4541 = vadd.f32 0.0, %v4540
        %4542 = vmatprep.mubr.bf16.mxu0 %v3950
        %4543 = vmatmul.mubr.bf16.gmra.mrb[0].mxu0 %v3948
        %v4544 = vpop.f32.mrb[0].mxu0
        %v4545 = vadd.f32 0.0, %v4544
        %v4546 = vpop.f32.mrb[0].mxu0
        %v4547 = vadd.f32 0.0, %v4546
        %v4548 = vpop.f32.mrb[0].mxu0
        %v4549 = vadd.f32 0.0, %v4548
        %v4550 = vpop.f32.mrb[0].mxu0
        %v4551 = vadd.f32 0.0, %v4550
        %4552 = vmatprep.mubr.bf16.mxu0 %v3951
        %4553 = vmatmul.mubr.bf16.gmra.mrb[0].mxu0 %v3949
        %v4554 = vpop.f32.mrb[0].mxu0
        %v4555 = vadd.f32 0.0, %v4554
        %v4556 = vpop.f32.mrb[0].mxu0
        %v4557 = vadd.f32 0.0, %v4556
        %v4558 = vpop.f32.mrb[0].mxu0
        %v4559 = vadd.f32 0.0, %v4558
        %v4560 = vpop.f32.mrb[0].mxu0
        %v4561 = vadd.f32 0.0, %v4560
        %4562 = vmatprep.mubr.bf16.mxu0 %v3952
        %4563 = vmatmul.mubr.bf16.gmra.mrb[0].mxu0 %v3950
        %v4564 = vpop.f32.mrb[0].mxu0
        %v4565 = vadd.f32 0.0, %v4564
        %v4566 = vpop.f32.mrb[0].mxu0
        %v4567 = vadd.f32 0.0, %v4566
        %v4568 = vpop.f32.mrb[0].mxu0
        %v4569 = vadd.f32 0.0, %v4568
        %v4570 = vpop.f32.mrb[0].mxu0
        %v4571 = vadd.f32 0.0, %v4570
        %4572 = vmatprep.mubr.bf16.mxu0 %v3953
        %4573 = vmatmul.mubr.bf16.gmra.mrb[0].mxu0 %v3951
        %v4574 = vpop.f32.mrb[0].mxu0
        %v4575 = vadd.f32 0.0, %v4574
        %v4576 = vpop.f32.mrb[0].mxu0
        %v4577 = vadd.f32 0.0, %v4576
        %v4578 = vpop.f32.mrb[0].mxu0
        %v4579 = vadd.f32 0.0, %v4578
        %v4580 = vpop.f32.mrb[0].mxu0
        %v4581 = vadd.f32 0.0, %v4580
        %4582 = vmatprep.mubr.bf16.mxu0 %v3954
        %4583 = vmatmul.mubr.bf16.gmra.mrb[0].mxu0 %v3952
        %v4584 = vpop.f32.mrb[0].mxu0
        %v4585 = vadd.f32 0.0, %v4584
        %v4586 = vpop.f32.mrb[0].mxu0
        %v4587 = vadd.f32 0.0, %v4586
        %v4588 = vpop.f32.mrb[0].mxu0
        %v4589 = vadd.f32 0.0, %v4588
        %v4590 = vpop.f32.mrb[0].mxu0
        %v4591 = vadd.f32 0.0, %v4590
        %4592 = vmatprep.mubr.bf16.mxu0 %v3955
        %4593 = vmatmul.mubr.bf16.gmra.mrb[0].mxu0 %v3953
        %v4594 = vpop.f32.mrb[0].mxu0
        %v4595 = vadd.f32 0.0, %v4594
        %v4596 = vpop.f32.mrb[0].mxu0
        %v4597 = vadd.f32 0.0, %v4596
        %v4598 = vpop.f32.mrb[0].mxu0
        %v4599 = vadd.f32 0.0, %v4598
        %v4600 = vpop.f32.mrb[0].mxu0
        %v4601 = vadd.f32 0.0, %v4600
        %4602 = vmatprep.mubr.bf16.mxu0 %v3956
        %4603 = vmatmul.mubr.bf16.gmra.mrb[0].mxu0 %v3954
        %v4604 = vpop.f32.mrb[0].mxu0
        %v4605 = vadd.f32 0.0, %v4604
        %v4606 = vpop.f32.mrb[0].mxu0
        %v4607 = vadd.f32 0.0, %v4606
        %v4608 = vpop.f32.mrb[0].mxu0
        %v4609 = vadd.f32 0.0, %v4608
        %v4610 = vpop.f32.mrb[0].mxu0
        %v4611 = vadd.f32 0.0, %v4610
        %4612 = vmatprep.mubr.bf16.mxu0 %v3957
        %4613 = vmatmul.mubr.bf16.gmra.mrb[0].mxu0 %v3955
        %v4614 = vpop.f32.mrb[0].mxu0
        %v4615 = vadd.f32 0.0, %v4614
        %v4616 = vpop.f32.mrb[0].mxu0
        %v4617 = vadd.f32 0.0, %v4616
        %v4618 = vpop.f32.mrb[0].mxu0
        %v4619 = vadd.f32 0.0, %v4618
        %v4620 = vpop.f32.mrb[0].mxu0
        %v4621 = vadd.f32 0.0, %v4620
        %4622 = vmatprep.mubr.bf16.mxu0 %v3958
        %4623 = vmatmul.mubr.bf16.gmra.mrb[0].mxu0 %v3956
        %v4624 = vpop.f32.mrb[0].mxu0
        %v4625 = vadd.f32 0.0, %v4624
        %v4626 = vpop.f32.mrb[0].mxu0
        %v4627 = vadd.f32 0.0, %v4626
        %v4628 = vpop.f32.mrb[0].mxu0
        %v4629 = vadd.f32 0.0, %v4628
        %v4630 = vpop.f32.mrb[0].mxu0
        %v4631 = vadd.f32 0.0, %v4630
        %4632 = vmatprep.mubr.bf16.mxu0 %v3959
        %4633 = vmatmul.mubr.bf16.gmra.mrb[0].mxu0 %v3957
        %v4634 = vpop.f32.mrb[0].mxu0
        %v4635 = vadd.f32 0.0, %v4634
        %v4636 = vpop.f32.mrb[0].mxu0
        %v4637 = vadd.f32 0.0, %v4636
        %v4638 = vpop.f32.mrb[0].mxu0
        %v4639 = vadd.f32 0.0, %v4638
        %v4640 = vpop.f32.mrb[0].mxu0
        %v4641 = vadd.f32 0.0, %v4640
        %4642 = vmatprep.mubr.bf16.mxu0 %v3960
        %4643 = vmatmul.mubr.bf16.gmra.mrb[0].mxu0 %v3958
        %v4644 = vpop.f32.mrb[0].mxu0
        %v4645 = vadd.f32 0.0, %v4644
        %v4646 = vpop.f32.mrb[0].mxu0
        %v4647 = vadd.f32 0.0, %v4646
        %v4648 = vpop.f32.mrb[0].mxu0
        %v4649 = vadd.f32 0.0, %v4648
        %v4650 = vpop.f32.mrb[0].mxu0
        %v4651 = vadd.f32 0.0, %v4650
        %4652 = vmatprep.mubr.bf16.mxu0 %v3961
        %4653 = vmatmul.mubr.bf16.gmra.mrb[0].mxu0 %v3959
        %v4654 = vpop.f32.mrb[0].mxu0
        %v4655 = vadd.f32 0.0, %v4654
        %v4656 = vpop.f32.mrb[0].mxu0
        %v4657 = vadd.f32 0.0, %v4656
        %v4658 = vpop.f32.mrb[0].mxu0
        %v4659 = vadd.f32 0.0, %v4658
        %v4660 = vpop.f32.mrb[0].mxu0
        %v4661 = vadd.f32 0.0, %v4660
        %4662 = vmatprep.mubr.bf16.mxu0 %v3962
        %4663 = vmatmul.mubr.bf16.gmra.mrb[0].mxu0 %v3960
        %v4664 = vpop.f32.mrb[0].mxu0
        %v4665 = vadd.f32 0.0, %v4664
        %v4666 = vpop.f32.mrb[0].mxu0
        %v4667 = vadd.f32 0.0, %v4666
        %v4668 = vpop.f32.mrb[0].mxu0
        %v4669 = vadd.f32 0.0, %v4668
        %v4670 = vpop.f32.mrb[0].mxu0
        %v4671 = vadd.f32 0.0, %v4670
        %4672 = vmatprep.mubr.bf16.mxu0 %v3963
        %4673 = vmatmul.mubr.bf16.gmra.mrb[0].mxu0 %v3961
        %v4674 = vpop.f32.mrb[0].mxu0
        %v4675 = vadd.f32 0.0, %v4674
        %v4676 = vpop.f32.mrb[0].mxu0
        %v4677 = vadd.f32 0.0, %v4676
        %v4678 = vpop.f32.mrb[0].mxu0
        %v4679 = vadd.f32 0.0, %v4678
        %v4680 = vpop.f32.mrb[0].mxu0
        %v4681 = vadd.f32 0.0, %v4680
        %4682 = vdwg.mxu0
        %4683 = vmatprep.subr.bf16.mxu0 %v4323
        %4684 = vmatpush1.bf16.msra.mxu0 %v4322
        %4685 = vmatprep.subr.bf16.mxu0 %v4325
        %4686 = vmatpush1.bf16.msra.mxu0 %v4324
        %4687 = vmatprep.subr.bf16.mxu0 %v4327
        %4688 = vmatpush1.bf16.msra.mxu0 %v4326
        %4689 = vmatprep.subr.bf16.mxu0 %v4329
        %4690 = vmatpush1.bf16.msra.mxu0 %v4328
        %4691 = vmatprep.subr.bf16.mxu0 %v4331
        %4692 = vmatpush1.bf16.msra.mxu0 %v4330
        %4693 = vmatprep.subr.bf16.mxu0 %v4333
        %4694 = vmatpush1.bf16.msra.mxu0 %v4332
        %4695 = vmatprep.subr.bf16.mxu0 %v4335
        %4696 = vmatpush1.bf16.msra.mxu0 %v4334
        %4697 = vmatprep.subr.bf16.mxu0 %v4337
        %4698 = vmatpush1.bf16.msra.mxu0 %v4336
        %4699 = vmatprep.subr.bf16.mxu0 %v4339
        %4700 = vmatpush1.bf16.msra.mxu0 %v4338
        %4701 = vmatprep.subr.bf16.mxu0 %v4341
        %4702 = vmatpush1.bf16.msra.mxu0 %v4340
        %4703 = vmatprep.subr.bf16.mxu0 %v4343
        %4704 = vmatpush1.bf16.msra.mxu0 %v4342
        %4705 = vmatprep.subr.bf16.mxu0 %v4345
        %4706 = vmatpush1.bf16.msra.mxu0 %v4344
        %4707 = vmatprep.subr.bf16.mxu0 %v4347
        %4708 = vmatpush1.bf16.msra.mxu0 %v4346
        %4709 = vmatprep.subr.bf16.mxu0 %v4349
        %4710 = vmatpush1.bf16.msra.mxu0 %v4348
        %4711 = vmatprep.subr.bf16.mxu0 %v4351
        %4712 = vmatpush1.bf16.msra.mxu0 %v4350
        %4713 = vmatprep.subr.bf16.mxu0 %v4353
        %4714 = vmatpush1.bf16.msra.mxu0 %v4352
        %4715 = vmatprep.mubr.bf16.mxu0 %v3948
        %4716 = vmatmul.mubr.bf16.gmra.mrb[0].mxu0 %v3946
        %v4717 = vpop.f32.mrb[0].mxu0
        %v4718 = vadd.f32 %v4485, %v4717
        %v4719 = vpop.f32.mrb[0].mxu0
        %v4720 = vadd.f32 %v4487, %v4719
        %v4721 = vpop.f32.mrb[0].mxu0
        %v4722 = vadd.f32 %v4489, %v4721
        %v4723 = vpop.f32.mrb[0].mxu0
        %v4724 = vadd.f32 %v4491, %v4723
        %4725 = vmatprep.mubr.bf16.mxu0 %v3949
        %4726 = vmatmul.mubr.bf16.gmra.mrb[0].mxu0 %v3947
        %v4727 = vpop.f32.mrb[0].mxu0
        %v4728 = vadd.f32 %v4495, %v4727
        %v4729 = vpop.f32.mrb[0].mxu0
        %v4730 = vadd.f32 %v4497, %v4729
        %v4731 = vpop.f32.mrb[0].mxu0
        %v4732 = vadd.f32 %v4499, %v4731
        %v4733 = vpop.f32.mrb[0].mxu0
        %v4734 = vadd.f32 %v4501, %v4733
        %4735 = vmatprep.mubr.bf16.mxu0 %v3950
        %4736 = vmatmul.mubr.bf16.gmra.mrb[0].mxu0 %v3948
        %v4737 = vpop.f32.mrb[0].mxu0
        %v4738 = vadd.f32 %v4505, %v4737
        %v4739 = vpop.f32.mrb[0].mxu0
        %v4740 = vadd.f32 %v4507, %v4739
        %v4741 = vpop.f32.mrb[0].mxu0
        %v4742 = vadd.f32 %v4509, %v4741
        %v4743 = vpop.f32.mrb[0].mxu0
        %v4744 = vadd.f32 %v4511, %v4743
        %4745 = vmatprep.mubr.bf16.mxu0 %v3951
        %4746 = vmatmul.mubr.bf16.gmra.mrb[0].mxu0 %v3949
        %v4747 = vpop.f32.mrb[0].mxu0
        %v4748 = vadd.f32 %v4515, %v4747
        %v4749 = vpop.f32.mrb[0].mxu0
        %v4750 = vadd.f32 %v4517, %v4749
        %v4751 = vpop.f32.mrb[0].mxu0
        %v4752 = vadd.f32 %v4519, %v4751
        %v4753 = vpop.f32.mrb[0].mxu0
        %v4754 = vadd.f32 %v4521, %v4753
        %4755 = vmatprep.mubr.bf16.mxu0 %v3952
        %4756 = vmatmul.mubr.bf16.gmra.mrb[0].mxu0 %v3950
        %v4757 = vpop.f32.mrb[0].mxu0
        %v4758 = vadd.f32 %v4525, %v4757
        %v4759 = vpop.f32.mrb[0].mxu0
        %v4760 = vadd.f32 %v4527, %v4759
        %v4761 = vpop.f32.mrb[0].mxu0
        %v4762 = vadd.f32 %v4529, %v4761
        %v4763 = vpop.f32.mrb[0].mxu0
        %v4764 = vadd.f32 %v4531, %v4763
        %4765 = vmatprep.mubr.bf16.mxu0 %v3953
        %4766 = vmatmul.mubr.bf16.gmra.mrb[0].mxu0 %v3951
        %v4767 = vpop.f32.mrb[0].mxu0
        %v4768 = vadd.f32 %v4535, %v4767
        %v4769 = vpop.f32.mrb[0].mxu0
        %v4770 = vadd.f32 %v4537, %v4769
        %v4771 = vpop.f32.mrb[0].mxu0
        %v4772 = vadd.f32 %v4539, %v4771
        %v4773 = vpop.f32.mrb[0].mxu0
        %v4774 = vadd.f32 %v4541, %v4773
        %4775 = vmatprep.mubr.bf16.mxu0 %v3954
        %4776 = vmatmul.mubr.bf16.gmra.mrb[0].mxu0 %v3952
        %v4777 = vpop.f32.mrb[0].mxu0
        %v4778 = vadd.f32 %v4545, %v4777
        %v4779 = vpop.f32.mrb[0].mxu0
        %v4780 = vadd.f32 %v4547, %v4779
        %v4781 = vpop.f32.mrb[0].mxu0
        %v4782 = vadd.f32 %v4549, %v4781
        %v4783 = vpop.f32.mrb[0].mxu0
        %v4784 = vadd.f32 %v4551, %v4783
        %4785 = vmatprep.mubr.bf16.mxu0 %v3955
        %4786 = vmatmul.mubr.bf16.gmra.mrb[0].mxu0 %v3953
        %v4787 = vpop.f32.mrb[0].mxu0
        %v4788 = vadd.f32 %v4555, %v4787
        %v4789 = vpop.f32.mrb[0].mxu0
        %v4790 = vadd.f32 %v4557, %v4789
        %v4791 = vpop.f32.mrb[0].mxu0
        %v4792 = vadd.f32 %v4559, %v4791
        %v4793 = vpop.f32.mrb[0].mxu0
        %v4794 = vadd.f32 %v4561, %v4793
        %4795 = vmatprep.mubr.bf16.mxu0 %v3956
        %4796 = vmatmul.mubr.bf16.gmra.mrb[0].mxu0 %v3954
        %v4797 = vpop.f32.mrb[0].mxu0
        %v4798 = vadd.f32 %v4565, %v4797
        %v4799 = vpop.f32.mrb[0].mxu0
        %v4800 = vadd.f32 %v4567, %v4799
        %v4801 = vpop.f32.mrb[0].mxu0
        %v4802 = vadd.f32 %v4569, %v4801
        %v4803 = vpop.f32.mrb[0].mxu0
        %v4804 = vadd.f32 %v4571, %v4803
        %4805 = vmatprep.mubr.bf16.mxu0 %v3957
        %4806 = vmatmul.mubr.bf16.gmra.mrb[0].mxu0 %v3955
        %v4807 = vpop.f32.mrb[0].mxu0
        %v4808 = vadd.f32 %v4575, %v4807
        %v4809 = vpop.f32.mrb[0].mxu0
        %v4810 = vadd.f32 %v4577, %v4809
        %v4811 = vpop.f32.mrb[0].mxu0
        %v4812 = vadd.f32 %v4579, %v4811
        %v4813 = vpop.f32.mrb[0].mxu0
        %v4814 = vadd.f32 %v4581, %v4813
        %4815 = vmatprep.mubr.bf16.mxu0 %v3958
        %4816 = vmatmul.mubr.bf16.gmra.mrb[0].mxu0 %v3956
        %v4817 = vpop.f32.mrb[0].mxu0
        %v4818 = vadd.f32 %v4585, %v4817
        %v4819 = vpop.f32.mrb[0].mxu0
        %v4820 = vadd.f32 %v4587, %v4819
        %v4821 = vpop.f32.mrb[0].mxu0
        %v4822 = vadd.f32 %v4589, %v4821
        %v4823 = vpop.f32.mrb[0].mxu0
        %v4824 = vadd.f32 %v4591, %v4823
        %4825 = vmatprep.mubr.bf16.mxu0 %v3959
        %4826 = vmatmul.mubr.bf16.gmra.mrb[0].mxu0 %v3957
        %v4827 = vpop.f32.mrb[0].mxu0
        %v4828 = vadd.f32 %v4595, %v4827
        %v4829 = vpop.f32.mrb[0].mxu0
        %v4830 = vadd.f32 %v4597, %v4829
        %v4831 = vpop.f32.mrb[0].mxu0
        %v4832 = vadd.f32 %v4599, %v4831
        %v4833 = vpop.f32.mrb[0].mxu0
        %v4834 = vadd.f32 %v4601, %v4833
        %4835 = vmatprep.mubr.bf16.mxu0 %v3960
        %4836 = vmatmul.mubr.bf16.gmra.mrb[0].mxu0 %v3958
        %v4837 = vpop.f32.mrb[0].mxu0
        %v4838 = vadd.f32 %v4605, %v4837
        %v4839 = vpop.f32.mrb[0].mxu0
        %v4840 = vadd.f32 %v4607, %v4839
        %v4841 = vpop.f32.mrb[0].mxu0
        %v4842 = vadd.f32 %v4609, %v4841
        %v4843 = vpop.f32.mrb[0].mxu0
        %v4844 = vadd.f32 %v4611, %v4843
        %4845 = vmatprep.mubr.bf16.mxu0 %v3961
        %4846 = vmatmul.mubr.bf16.gmra.mrb[0].mxu0 %v3959
        %v4847 = vpop.f32.mrb[0].mxu0
        %v4848 = vadd.f32 %v4615, %v4847
        %v4849 = vpop.f32.mrb[0].mxu0
        %v4850 = vadd.f32 %v4617, %v4849
        %v4851 = vpop.f32.mrb[0].mxu0
        %v4852 = vadd.f32 %v4619, %v4851
        %v4853 = vpop.f32.mrb[0].mxu0
        %v4854 = vadd.f32 %v4621, %v4853
        %4855 = vmatprep.mubr.bf16.mxu0 %v3962
        %4856 = vmatmul.mubr.bf16.gmra.mrb[0].mxu0 %v3960
        %v4857 = vpop.f32.mrb[0].mxu0
        %v4858 = vadd.f32 %v4625, %v4857
        %v4859 = vpop.f32.mrb[0].mxu0
        %v4860 = vadd.f32 %v4627, %v4859
        %v4861 = vpop.f32.mrb[0].mxu0
        %v4862 = vadd.f32 %v4629, %v4861
        %v4863 = vpop.f32.mrb[0].mxu0
        %v4864 = vadd.f32 %v4631, %v4863
        %4865 = vmatprep.mubr.bf16.mxu0 %v3963
        %4866 = vmatmul.mubr.bf16.gmra.mrb[0].mxu0 %v3961
        %v4867 = vpop.f32.mrb[0].mxu0
        %v4868 = vadd.f32 %v4635, %v4867
        %v4869 = vpop.f32.mrb[0].mxu0
        %v4870 = vadd.f32 %v4637, %v4869
        %v4871 = vpop.f32.mrb[0].mxu0
        %v4872 = vadd.f32 %v4639, %v4871
        %v4873 = vpop.f32.mrb[0].mxu0
        %v4874 = vadd.f32 %v4641, %v4873
        %4875 = vmatprep.mubr.bf16.mxu0 %v3964
        %4876 = vmatmul.mubr.bf16.gmra.mrb[0].mxu0 %v3962
        %v4877 = vpop.f32.mrb[0].mxu0
        %v4878 = vadd.f32 %v4645, %v4877
        %v4879 = vpop.f32.mrb[0].mxu0
        %v4880 = vadd.f32 %v4647, %v4879
        %v4881 = vpop.f32.mrb[0].mxu0
        %v4882 = vadd.f32 %v4649, %v4881
        %v4883 = vpop.f32.mrb[0].mxu0
        %v4884 = vadd.f32 %v4651, %v4883
        %4885 = vmatprep.mubr.bf16.mxu0 %v3965
        %4886 = vmatmul.mubr.bf16.gmra.mrb[0].mxu0 %v3963
        %v4887 = vpop.f32.mrb[0].mxu0
        %v4888 = vadd.f32 %v4655, %v4887
        %v4889 = vpop.f32.mrb[0].mxu0
        %v4890 = vadd.f32 %v4657, %v4889
        %v4891 = vpop.f32.mrb[0].mxu0
        %v4892 = vadd.f32 %v4659, %v4891
        %v4893 = vpop.f32.mrb[0].mxu0
        %v4894 = vadd.f32 %v4661, %v4893
        %4895 = vmatprep.mubr.bf16.mxu0 %v3966
        %4896 = vmatmul.mubr.bf16.gmra.mrb[0].mxu0 %v3964
        %v4897 = vpop.f32.mrb[0].mxu0
        %v4898 = vadd.f32 %v4665, %v4897
        %v4899 = vpop.f32.mrb[0].mxu0
        %v4900 = vadd.f32 %v4667, %v4899
        %v4901 = vpop.f32.mrb[0].mxu0
        %v4902 = vadd.f32 %v4669, %v4901
        %v4903 = vpop.f32.mrb[0].mxu0
        %v4904 = vadd.f32 %v4671, %v4903
        %4905 = vmatprep.mubr.bf16.mxu0 %v3967
        %4906 = vmatmul.mubr.bf16.gmra.mrb[0].mxu0 %v3965
        %v4907 = vpop.f32.mrb[0].mxu0
        %v4908 = vadd.f32 %v4675, %v4907
        %v4909 = vpop.f32.mrb[0].mxu0
        %v4910 = vadd.f32 %v4677, %v4909
        %v4911 = vpop.f32.mrb[0].mxu0
        %v4912 = vadd.f32 %v4679, %v4911
        %v4913 = vpop.f32.mrb[0].mxu0
        %v4914 = vadd.f32 %v4681, %v4913
        %4915 = vdwg.mxu0
        %4916 = vmatprep.subr.bf16.mxu0 %v4355
        %4917 = vmatpush1.bf16.msra.mxu0 %v4354
        %4918 = vmatprep.subr.bf16.mxu0 %v4357
        %4919 = vmatpush1.bf16.msra.mxu0 %v4356
        %4920 = vmatprep.subr.bf16.mxu0 %v4359
        %4921 = vmatpush1.bf16.msra.mxu0 %v4358
        %4922 = vmatprep.subr.bf16.mxu0 %v4361
        %4923 = vmatpush1.bf16.msra.mxu0 %v4360
        %4924 = vmatprep.subr.bf16.mxu0 %v4363
        %4925 = vmatpush1.bf16.msra.mxu0 %v4362
        %4926 = vmatprep.subr.bf16.mxu0 %v4365
        %4927 = vmatpush1.bf16.msra.mxu0 %v4364
        %4928 = vmatprep.subr.bf16.mxu0 %v4367
        %4929 = vmatpush1.bf16.msra.mxu0 %v4366
        %4930 = vmatprep.subr.bf16.mxu0 %v4369
        %4931 = vmatpush1.bf16.msra.mxu0 %v4368
        %4932 = vmatprep.subr.bf16.mxu0 0
        %4933 = vmatpush1.bf16.msra.mxu0 0
        %4934 = vmatprep.subr.bf16.mxu0 0
        %4935 = vmatpush1.bf16.msra.mxu0 0
        %4936 = vmatprep.subr.bf16.mxu0 0
        %4937 = vmatpush1.bf16.msra.mxu0 0
        %4938 = vmatprep.subr.bf16.mxu0 0
        %4939 = vmatpush1.bf16.msra.mxu0 0
        %4940 = vmatprep.subr.bf16.mxu0 0
        %4941 = vmatpush1.bf16.msra.mxu0 0
        %4942 = vmatprep.subr.bf16.mxu0 0
        %4943 = vmatpush1.bf16.msra.mxu0 0
        %4944 = vmatprep.subr.bf16.mxu0 0
        %4945 = vmatpush1.bf16.msra.mxu0 0
        %4946 = vmatprep.subr.bf16.mxu0 0
        %4947 = vmatpush1.bf16.msra.mxu0 0
        %4948 = vmatprep.mubr.bf16.mxu0 0
        %4949 = vmatmul.mubr.bf16.gmra.mrb[0].mxu0 %v3950
        %v4950 = vpop.f32.mrb[0].mxu0
        %v4951 = vadd.f32 %v4718, %v4950
        %v4952 = vpop.f32.mrb[0].mxu0
        %v4953 = vadd.f32 %v4720, %v4952
        %v4954 = vpop.f32.mrb[0].mxu0
        %v4955 = vadd.f32 %v4722, %v4954
        %v4956 = vpop.f32.mrb[0].mxu0
        %v4957 = vadd.f32 %v4724, %v4956
        %4958 = vmatprep.mubr.bf16.mxu0 0
        %4959 = vmatmul.mubr.bf16.gmra.mrb[0].mxu0 %v3951
        %v4960 = vpop.f32.mrb[0].mxu0
        %v4961 = vadd.f32 %v4728, %v4960
        %v4962 = vpop.f32.mrb[0].mxu0
        %v4963 = vadd.f32 %v4730, %v4962
        %v4964 = vpop.f32.mrb[0].mxu0
        %v4965 = vadd.f32 %v4732, %v4964
        %v4966 = vpop.f32.mrb[0].mxu0
        %v4967 = vadd.f32 %v4734, %v4966
        %4968 = vmatprep.mubr.bf16.mxu0 0
        %4969 = vmatmul.mubr.bf16.gmra.mrb[0].mxu0 %v3952
        %v4970 = vpop.f32.mrb[0].mxu0
        %v4971 = vadd.f32 %v4738, %v4970
        %v4972 = vpop.f32.mrb[0].mxu0
        %v4973 = vadd.f32 %v4740, %v4972
        %v4974 = vpop.f32.mrb[0].mxu0
        %v4975 = vadd.f32 %v4742, %v4974
        %v4976 = vpop.f32.mrb[0].mxu0
        %v4977 = vadd.f32 %v4744, %v4976
        %4978 = vmatprep.mubr.bf16.mxu0 0
        %4979 = vmatmul.mubr.bf16.gmra.mrb[0].mxu0 %v3953
        %v4980 = vpop.f32.mrb[0].mxu0
        %v4981 = vadd.f32 %v4748, %v4980
        %v4982 = vpop.f32.mrb[0].mxu0
        %v4983 = vadd.f32 %v4750, %v4982
        %v4984 = vpop.f32.mrb[0].mxu0
        %v4985 = vadd.f32 %v4752, %v4984
        %v4986 = vpop.f32.mrb[0].mxu0
        %v4987 = vadd.f32 %v4754, %v4986
        %4988 = vmatprep.mubr.bf16.mxu0 0
        %4989 = vmatmul.mubr.bf16.gmra.mrb[0].mxu0 %v3954
        %v4990 = vpop.f32.mrb[0].mxu0
        %v4991 = vadd.f32 %v4758, %v4990
        %v4992 = vpop.f32.mrb[0].mxu0
        %v4993 = vadd.f32 %v4760, %v4992
        %v4994 = vpop.f32.mrb[0].mxu0
        %v4995 = vadd.f32 %v4762, %v4994
        %v4996 = vpop.f32.mrb[0].mxu0
        %v4997 = vadd.f32 %v4764, %v4996
        %4998 = vmatprep.mubr.bf16.mxu0 0
        %4999 = vmatmul.mubr.bf16.gmra.mrb[0].mxu0 %v3955
        %v5000 = vpop.f32.mrb[0].mxu0
        %v5001 = vadd.f32 %v4768, %v5000
        %v5002 = vpop.f32.mrb[0].mxu0
        %v5003 = vadd.f32 %v4770, %v5002
        %v5004 = vpop.f32.mrb[0].mxu0
        %v5005 = vadd.f32 %v4772, %v5004
        %v5006 = vpop.f32.mrb[0].mxu0
        %v5007 = vadd.f32 %v4774, %v5006
        %5008 = vmatprep.mubr.bf16.mxu0 0
        %5009 = vmatmul.mubr.bf16.gmra.mrb[0].mxu0 %v3956
        %v5010 = vpop.f32.mrb[0].mxu0
        %v5011 = vadd.f32 %v4778, %v5010
        %v5012 = vpop.f32.mrb[0].mxu0
        %v5013 = vadd.f32 %v4780, %v5012
        %v5014 = vpop.f32.mrb[0].mxu0
        %v5015 = vadd.f32 %v4782, %v5014
        %v5016 = vpop.f32.mrb[0].mxu0
        %v5017 = vadd.f32 %v4784, %v5016
        %5018 = vmatprep.mubr.bf16.mxu0 0
        %5019 = vmatmul.mubr.bf16.gmra.mrb[0].mxu0 %v3957
        %v5020 = vpop.f32.mrb[0].mxu0
        %v5021 = vadd.f32 %v4788, %v5020
        %v5022 = vpop.f32.mrb[0].mxu0
        %v5023 = vadd.f32 %v4790, %v5022
        %v5024 = vpop.f32.mrb[0].mxu0
        %v5025 = vadd.f32 %v4792, %v5024
        %v5026 = vpop.f32.mrb[0].mxu0
        %v5027 = vadd.f32 %v4794, %v5026
        %5028 = vmatprep.mubr.bf16.mxu0 0
        %5029 = vmatmul.mubr.bf16.gmra.mrb[0].mxu0 %v3958
        %v5030 = vpop.f32.mrb[0].mxu0
        %v5031 = vadd.f32 %v4798, %v5030
        %v5032 = vpop.f32.mrb[0].mxu0
        %v5033 = vadd.f32 %v4800, %v5032
        %v5034 = vpop.f32.mrb[0].mxu0
        %v5035 = vadd.f32 %v4802, %v5034
        %v5036 = vpop.f32.mrb[0].mxu0
        %v5037 = vadd.f32 %v4804, %v5036
        %5038 = vmatprep.mubr.bf16.mxu0 0
        %5039 = vmatmul.mubr.bf16.gmra.mrb[0].mxu0 %v3959
        %v5040 = vpop.f32.mrb[0].mxu0
        %v5041 = vadd.f32 %v4808, %v5040
        %v5042 = vpop.f32.mrb[0].mxu0
        %v5043 = vadd.f32 %v4810, %v5042
        %v5044 = vpop.f32.mrb[0].mxu0
        %v5045 = vadd.f32 %v4812, %v5044
        %v5046 = vpop.f32.mrb[0].mxu0
        %v5047 = vadd.f32 %v4814, %v5046
        %5048 = vmatprep.mubr.bf16.mxu0 0
        %5049 = vmatmul.mubr.bf16.gmra.mrb[0].mxu0 %v3960
        %v5050 = vpop.f32.mrb[0].mxu0
        %v5051 = vadd.f32 %v4818, %v5050
        %v5052 = vpop.f32.mrb[0].mxu0
        %v5053 = vadd.f32 %v4820, %v5052
        %v5054 = vpop.f32.mrb[0].mxu0
        %v5055 = vadd.f32 %v4822, %v5054
        %v5056 = vpop.f32.mrb[0].mxu0
        %v5057 = vadd.f32 %v4824, %v5056
        %5058 = vmatprep.mubr.bf16.mxu0 0
        %5059 = vmatmul.mubr.bf16.gmra.mrb[0].mxu0 %v3961
        %v5060 = vpop.f32.mrb[0].mxu0
        %v5061 = vadd.f32 %v4828, %v5060
        %v5062 = vpop.f32.mrb[0].mxu0
        %v5063 = vadd.f32 %v4830, %v5062
        %v5064 = vpop.f32.mrb[0].mxu0
        %v5065 = vadd.f32 %v4832, %v5064
        %v5066 = vpop.f32.mrb[0].mxu0
        %v5067 = vadd.f32 %v4834, %v5066
        %5068 = vmatprep.mubr.bf16.mxu0 0
        %5069 = vmatmul.mubr.bf16.gmra.mrb[0].mxu0 %v3962
        %v5070 = vpop.f32.mrb[0].mxu0
        %v5071 = vadd.f32 %v4838, %v5070
        %v5072 = vpop.f32.mrb[0].mxu0
        %v5073 = vadd.f32 %v4840, %v5072
        %v5074 = vpop.f32.mrb[0].mxu0
        %v5075 = vadd.f32 %v4842, %v5074
        %v5076 = vpop.f32.mrb[0].mxu0
        %v5077 = vadd.f32 %v4844, %v5076
        %5078 = vmatprep.mubr.bf16.mxu0 0
        %5079 = vmatmul.mubr.bf16.gmra.mrb[0].mxu0 %v3963
        %v5080 = vpop.f32.mrb[0].mxu0
        %v5081 = vadd.f32 %v4848, %v5080
        %v5082 = vpop.f32.mrb[0].mxu0
        %v5083 = vadd.f32 %v4850, %v5082
        %v5084 = vpop.f32.mrb[0].mxu0
        %v5085 = vadd.f32 %v4852, %v5084
        %v5086 = vpop.f32.mrb[0].mxu0
        %v5087 = vadd.f32 %v4854, %v5086
        %5088 = vmatprep.mubr.bf16.mxu0 0
        %5089 = vmatmul.mubr.bf16.gmra.mrb[0].mxu0 %v3964
        %v5090 = vpop.f32.mrb[0].mxu0
        %v5091 = vadd.f32 %v4858, %v5090
        %v5092 = vpop.f32.mrb[0].mxu0
        %v5093 = vadd.f32 %v4860, %v5092
        %v5094 = vpop.f32.mrb[0].mxu0
        %v5095 = vadd.f32 %v4862, %v5094
        %v5096 = vpop.f32.mrb[0].mxu0
        %v5097 = vadd.f32 %v4864, %v5096
        %5098 = vmatprep.mubr.bf16.mxu0 0
        %5099 = vmatmul.mubr.bf16.gmra.mrb[0].mxu0 %v3965
        %v5100 = vpop.f32.mrb[0].mxu0
        %v5101 = vadd.f32 %v4868, %v5100
        %v5102 = vpop.f32.mrb[0].mxu0
        %v5103 = vadd.f32 %v4870, %v5102
        %v5104 = vpop.f32.mrb[0].mxu0
        %v5105 = vadd.f32 %v4872, %v5104
        %v5106 = vpop.f32.mrb[0].mxu0
        %v5107 = vadd.f32 %v4874, %v5106
        %5108 = vmatprep.mubr.bf16.mxu0 0
        %5109 = vmatmul.mubr.bf16.gmra.mrb[0].mxu0 %v3966
        %v5110 = vpop.f32.mrb[0].mxu0
        %v5111 = vadd.f32 %v4878, %v5110
        %v5112 = vpop.f32.mrb[0].mxu0
        %v5113 = vadd.f32 %v4880, %v5112
        %v5114 = vpop.f32.mrb[0].mxu0
        %v5115 = vadd.f32 %v4882, %v5114
        %v5116 = vpop.f32.mrb[0].mxu0
        %v5117 = vadd.f32 %v4884, %v5116
        %5118 = vmatprep.mubr.bf16.mxu0 0
        %5119 = vmatmul.mubr.bf16.gmra.mrb[0].mxu0 %v3967
        %v5120 = vpop.f32.mrb[0].mxu0
        %v5121 = vadd.f32 %v4888, %v5120
        %v5122 = vpop.f32.mrb[0].mxu0
        %v5123 = vadd.f32 %v4890, %v5122
        %v5124 = vpop.f32.mrb[0].mxu0
        %v5125 = vadd.f32 %v4892, %v5124
        %v5126 = vpop.f32.mrb[0].mxu0
        %v5127 = vadd.f32 %v4894, %v5126
        %5128 = vmatprep.mubr.bf16.mxu0 0
        %5129 = vmatmul.mubr.bf16.gmra.mrb[0].mxu0 %v3968
        %v5130 = vpop.f32.mrb[0].mxu0
        %v5131 = vadd.f32 %v4898, %v5130
        %v5132 = vpop.f32.mrb[0].mxu0
        %v5133 = vadd.f32 %v4900, %v5132
        %v5134 = vpop.f32.mrb[0].mxu0
        %v5135 = vadd.f32 %v4902, %v5134
        %v5136 = vpop.f32.mrb[0].mxu0
        %v5137 = vadd.f32 %v4904, %v5136
        %5138 = vmatprep.mubr.bf16.mxu0 0
        %5139 = vmatmul.mubr.bf16.gmra.mrb[0].mxu0 %v3969
        %v5140 = vpop.f32.mrb[0].mxu0
        %v5141 = vadd.f32 %v4908, %v5140
        %v5142 = vpop.f32.mrb[0].mxu0
        %v5143 = vadd.f32 %v4910, %v5142
        %v5144 = vpop.f32.mrb[0].mxu0
        %v5145 = vadd.f32 %v4912, %v5144
        %v5146 = vpop.f32.mrb[0].mxu0
        %v5147 = vadd.f32 %v4914, %v5146
        %5148 = vdwg.mxu0
        %v5149 = vmax.f32 %v4951, %v4971
        %v5150 = vmax.f32 %v4953, %v4973
        %v5151 = vmax.f32 %v4955, %v4975
        %v5152 = vmax.f32 %v4957, %v4977
        %v5153 = vmax.f32 %v4961, %v4981
        %v5154 = vmax.f32 %v4963, %v4983
        %v5155 = vmax.f32 %v4965, %v4985
        %v5156 = vmax.f32 %v4967, %v4987
        %v5157 = vmax.f32 %v4991, %v5011
        %v5158 = vmax.f32 %v4993, %v5013
        %v5159 = vmax.f32 %v4995, %v5015
        %v5160 = vmax.f32 %v4997, %v5017
        %v5161 = vmax.f32 %v5001, %v5021
        %v5162 = vmax.f32 %v5003, %v5023
        %v5163 = vmax.f32 %v5005, %v5025
        %v5164 = vmax.f32 %v5007, %v5027
        %v5165 = vmax.f32 %v5031, %v5051
        %v5166 = vmax.f32 %v5033, %v5053
        %v5167 = vmax.f32 %v5035, %v5055
        %v5168 = vmax.f32 %v5037, %v5057
        %v5169 = vmax.f32 %v5041, %v5061
        %v5170 = vmax.f32 %v5043, %v5063
        %v5171 = vmax.f32 %v5045, %v5065
        %v5172 = vmax.f32 %v5047, %v5067
        %v5173 = vmax.f32 %v5071, %v5091
        %v5174 = vmax.f32 %v5073, %v5093
        %v5175 = vmax.f32 %v5075, %v5095
        %v5176 = vmax.f32 %v5077, %v5097
        %v5177 = vmax.f32 %v5081, %v5101
        %v5178 = vmax.f32 %v5083, %v5103
        %v5179 = vmax.f32 %v5085, %v5105
        %v5180 = vmax.f32 %v5087, %v5107
        %v5181 = vmax.f32 %v5111, %v5131
        %v5182 = vmax.f32 %v5113, %v5133
        %v5183 = vmax.f32 %v5115, %v5135
        %v5184 = vmax.f32 %v5117, %v5137
        %v5185 = vmax.f32 %v5121, %v5141
        %v5186 = vmax.f32 %v5123, %v5143
        %v5187 = vmax.f32 %v5125, %v5145
        %v5188 = vmax.f32 %v5127, %v5147
        %v5189 = vmax.f32 %v5149, %v5150
        %v5190 = vmax.f32 %v5151, %v5152
        %v5191 = vmax.f32 %v5153, %v5154
        %v5192 = vmax.f32 %v5155, %v5156
        %v5193 = vmax.f32 %v5157, %v5158
        %v5194 = vmax.f32 %v5159, %v5160
        %v5195 = vmax.f32 %v5161, %v5162
        %v5196 = vmax.f32 %v5163, %v5164
        %v5197 = vmax.f32 %v5165, %v5166
        %v5198 = vmax.f32 %v5167, %v5168
        %v5199 = vmax.f32 %v5169, %v5170
        %v5200 = vmax.f32 %v5171, %v5172
        %v5201 = vmax.f32 %v5173, %v5174
        %v5202 = vmax.f32 %v5175, %v5176
        %v5203 = vmax.f32 %v5177, %v5178
        %v5204 = vmax.f32 %v5179, %v5180
        %v5205 = vmax.f32 %v5181, %v5182
        %v5206 = vmax.f32 %v5183, %v5184
        %v5207 = vmax.f32 %v5185, %v5186
        %v5208 = vmax.f32 %v5187, %v5188
        %v5209 = vld [vmem:[%s4] sm:$0x1]
        %v5211 = vlaneseq
        %v5212 = vshrl.u32 %v5211, 7
        %v5213 = vsub.s32 0, %v5212
        %v5214 = vrot.slane %v5209, %v5213
        %v5216 = vadd.f32 %v5189, %v5214
        %v5217 = vadd.f32 %v5190, %v5214
        %v5218 = vadd.f32 %v5191, %v5214
        %v5219 = vadd.f32 %v5192, %v5214
        %v5220 = vadd.f32 %v5193, %v5214
        %v5221 = vadd.f32 %v5194, %v5214
        %v5222 = vadd.f32 %v5195, %v5214
        %v5223 = vadd.f32 %v5196, %v5214
        %v5224 = vadd.f32 %v5197, %v5214
        %v5225 = vadd.f32 %v5198, %v5214
        %v5226 = vadd.f32 %v5199, %v5214
        %v5227 = vadd.f32 %v5200, %v5214
        %v5228 = vadd.f32 %v5201, %v5214
        %v5229 = vadd.f32 %v5202, %v5214
        %v5230 = vadd.f32 %v5203, %v5214
        %v5231 = vadd.f32 %v5204, %v5214
        %v5232 = vadd.f32 %v5205, %v5214
        %v5233 = vadd.f32 %v5206, %v5214
        %v5234 = vadd.f32 %v5207, %v5214
        %v5235 = vadd.f32 %v5208, %v5214
        %v5236 = vld [vmem:[%s5] sm:$0xff]
        %v5237 = vld [vmem:[%s5 + $0x8] sm:$0xff]
        %v5238 = vld [vmem:[%s5 + $0x10] sm:$0xff]
        %v5239 = vld [vmem:[%s5 + $0x18] sm:$0xff]
        %v5240 = vld [vmem:[%s5 + $0x20] sm:$0xff]
        %v5241 = vld [vmem:[%s5 + $0x28] sm:$0xff]
        %v5242 = vld [vmem:[%s5 + $0x30] sm:$0xff]
        %v5243 = vld [vmem:[%s5 + $0x38] sm:$0xff]
        %v5244 = vld [vmem:[%s5 + $0x40] sm:$0xff]
        %v5245 = vld [vmem:[%s5 + $0x48] sm:$0xff]
        %v5246 = vld [vmem:[%s5 + $0x50] sm:$0xff]
        %v5247 = vld [vmem:[%s5 + $0x58] sm:$0xff]
        %v5248 = vld [vmem:[%s5 + $0x60] sm:$0xff]
        %v5249 = vld [vmem:[%s5 + $0x68] sm:$0xff]
        %v5250 = vld [vmem:[%s5 + $0x70] sm:$0xff]
        %v5251 = vld [vmem:[%s5 + $0x78] sm:$0xff]
        %v5252 = vld [vmem:[%s5 + $0x80] sm:$0xff]
        %v5253 = vld [vmem:[%s5 + $0x88] sm:$0xff]
        %v5254 = vld [vmem:[%s5 + $0x90] sm:$0xff]
        %v5255 = vld [vmem:[%s5 + $0x98] sm:$0xff]
        %v5256 = vld [vmem:[%s5 + $0xa0] sm:$0xff]
        %v5257 = vld [vmem:[%s5 + $0xa8] sm:$0xff]
        %v5258 = vld [vmem:[%s5 + $0xb0] sm:$0xff]
        %v5259 = vld [vmem:[%s5 + $0xb8] sm:$0xff]
        %v5260 = vld [vmem:[%s5 + $0xc0] sm:$0xff]
        %v5261 = vld [vmem:[%s5 + $0xc8] sm:$0xff]
        %v5262 = vld [vmem:[%s5 + $0xd0] sm:$0xff]
        %v5263 = vld [vmem:[%s5 + $0xd8] sm:$0xff]
        %v5264 = vld [vmem:[%s5 + $0xe0] sm:$0xff]
        %v5265 = vld [vmem:[%s5 + $0xe8] sm:$0xff]
        %v5266 = vld [vmem:[%s5 + $0xf0] sm:$0xff]
        %v5267 = vld [vmem:[%s5 + $0xf8] sm:$0xff]
        %v5268 = vld [vmem:[%s5 + $0x100] sm:$0xff]
        %v5269 = vld [vmem:[%s5 + $0x108] sm:$0xff]
        %v5270 = vld [vmem:[%s5 + $0x110] sm:$0xff]
        %v5271 = vld [vmem:[%s5 + $0x118] sm:$0xff]
        %v5272 = vld [vmem:[%s5 + $0x120] sm:$0xff]
        %v5273 = vld [vmem:[%s5 + $0x128] sm:$0xff]
        %v5274 = vld [vmem:[%s5 + $0x130] sm:$0xff]
        %v5275 = vld [vmem:[%s5 + $0x138] sm:$0xff]
        %v5276 = vld [vmem:[%s5 + $0x140] sm:$0xff]
        %v5277 = vld [vmem:[%s5 + $0x148] sm:$0xff]
        %v5278 = vld [vmem:[%s5 + $0x150] sm:$0xff]
        %v5279 = vld [vmem:[%s5 + $0x158] sm:$0xff]
        %v5280 = vld [vmem:[%s5 + $0x160] sm:$0xff]
        %v5281 = vld [vmem:[%s5 + $0x168] sm:$0xff]
        %v5282 = vld [vmem:[%s5 + $0x170] sm:$0xff]
        %v5283 = vld [vmem:[%s5 + $0x178] sm:$0xff]
        %v5284 = vld [vmem:[%s5 + $0x180] sm:$0xff]
        %v5285 = vld [vmem:[%s5 + $0x188] sm:$0xff]
        %v5286 = vld [vmem:[%s5 + $0x190] sm:$0xff]
        %v5287 = vld [vmem:[%s5 + $0x198] sm:$0xff]
        %v5288 = vld [vmem:[%s5 + $0x1a0] sm:$0xff]
        %v5289 = vld [vmem:[%s5 + $0x1a8] sm:$0xff]
        %v5290 = vld [vmem:[%s5 + $0x1b0] sm:$0xff]
        %v5291 = vld [vmem:[%s5 + $0x1b8] sm:$0xff]
        %v5292 = vld [vmem:[%s5 + $0x1c0] sm:$0xff]
        %v5293 = vld [vmem:[%s5 + $0x1c8] sm:$0xff]
        %v5294 = vld [vmem:[%s5 + $0x1d0] sm:$0xff]
        %v5295 = vld [vmem:[%s5 + $0x1d8] sm:$0xff]
        %v5296 = vld [vmem:[%s5 + $0x1e0] sm:$0xff]
        %v5297 = vld [vmem:[%s5 + $0x1e8] sm:$0xff]
        %v5298 = vld [vmem:[%s5 + $0x1f0] sm:$0xff]
        %v5299 = vld [vmem:[%s5 + $0x1f8] sm:$0xff]
        %v5300 = vld [vmem:[%s5 + $0x200] sm:$0xff]
        %v5301 = vld [vmem:[%s5 + $0x208] sm:$0xff]
        %v5302 = vld [vmem:[%s5 + $0x210] sm:$0xff]
        %v5303 = vld [vmem:[%s5 + $0x218] sm:$0xff]
        %v5304 = vld [vmem:[%s5 + $0x220] sm:$0xff]
        %v5305 = vld [vmem:[%s5 + $0x228] sm:$0xff]
        %v5306 = vld [vmem:[%s5 + $0x230] sm:$0xff]
        %v5307 = vld [vmem:[%s5 + $0x238] sm:$0xff]
        %v5308 = vld [vmem:[%s5 + $0x240] sm:$0xff]
        %v5309 = vld [vmem:[%s5 + $0x248] sm:$0xff]
        %v5310 = vld [vmem:[%s5 + $0x250] sm:$0xff]
        %v5311 = vld [vmem:[%s5 + $0x258] sm:$0xff]
        %v5312 = vld [vmem:[%s5 + $0x260] sm:$0xff]
        %v5313 = vld [vmem:[%s5 + $0x268] sm:$0xff]
        %v5314 = vld [vmem:[%s5 + $0x270] sm:$0xff]
        %v5315 = vld [vmem:[%s5 + $0x278] sm:$0xff]
        %v5316 = vld [vmem:[%s6] sm:$0x1]
        %v5318 = vlaneseq
        %v5319 = vshrl.u32 %v5318, 7
        %v5320 = vsub.s32 0, %v5319
        %v5321 = vrot.slane %v5316, %v5320
        %5323 = vmatprep.subr.mxu0 0.0
        %5324 = vmatpush1.msra.mxu0 %v5236
        %5325 = vmatprep.subr.mxu0 0.0
        %5326 = vmatpush1.msra.mxu0 %v5237
        %5327 = vmatprep.subr.mxu0 0.0
        %5328 = vmatpush1.msra.mxu0 %v5238
        %5329 = vmatprep.subr.mxu0 0.0
        %5330 = vmatpush1.msra.mxu0 %v5239
        %5331 = vmatprep.subr.mxu0 0.0
        %5332 = vmatpush1.msra.mxu0 %v5240
        %5333 = vmatprep.subr.mxu0 0.0
        %5334 = vmatpush1.msra.mxu0 %v5241
        %5335 = vmatprep.subr.mxu0 0.0
        %5336 = vmatpush1.msra.mxu0 %v5242
        %5337 = vmatprep.subr.mxu0 0.0
        %5338 = vmatpush1.msra.mxu0 %v5243
        %5339 = vmatprep.subr.mxu0 0.0
        %5340 = vmatpush1.msra.mxu0 %v5244
        %5341 = vmatprep.subr.mxu0 0.0
        %5342 = vmatpush1.msra.mxu0 %v5245
        %5343 = vmatprep.subr.mxu0 0.0
        %5344 = vmatpush1.msra.mxu0 %v5246
        %5345 = vmatprep.subr.mxu0 0.0
        %5346 = vmatpush1.msra.mxu0 %v5247
        %5347 = vmatprep.subr.mxu0 0.0
        %5348 = vmatpush1.msra.mxu0 %v5248
        %5349 = vmatprep.subr.mxu0 0.0
        %5350 = vmatpush1.msra.mxu0 %v5249
        %5351 = vmatprep.subr.mxu0 0.0
        %5352 = vmatpush1.msra.mxu0 %v5250
        %5353 = vmatprep.subr.mxu0 0.0
        %5354 = vmatpush1.msra.mxu0 %v5251
        %5355 = vmatprep.subr.mxu0 0.0
        %5356 = vmatpush1.msra.mxu0 %v5252
        %5357 = vmatprep.subr.mxu0 0.0
        %5358 = vmatpush1.msra.mxu0 %v5253
        %5359 = vmatprep.subr.mxu0 0.0
        %5360 = vmatpush1.msra.mxu0 %v5254
        %5361 = vmatprep.subr.mxu0 0.0
        %5362 = vmatpush1.msra.mxu0 %v5255
        %5363 = vmatprep.subr.mxu0 0.0
        %5364 = vmatpush1.msra.mxu0 %v5256
        %5365 = vmatprep.subr.mxu0 0.0
        %5366 = vmatpush1.msra.mxu0 %v5257
        %5367 = vmatprep.subr.mxu0 0.0
        %5368 = vmatpush1.msra.mxu0 %v5258
        %5369 = vmatprep.subr.mxu0 0.0
        %5370 = vmatpush1.msra.mxu0 %v5259
        %5371 = vmatprep.subr.mxu0 0.0
        %5372 = vmatpush1.msra.mxu0 %v5260
        %5373 = vmatprep.subr.mxu0 0.0
        %5374 = vmatpush1.msra.mxu0 %v5261
        %5375 = vmatprep.subr.mxu0 0.0
        %5376 = vmatpush1.msra.mxu0 %v5262
        %5377 = vmatprep.subr.mxu0 0.0
        %5378 = vmatpush1.msra.mxu0 %v5263
        %5379 = vmatprep.subr.mxu0 0.0
        %5380 = vmatpush1.msra.mxu0 %v5264
        %5381 = vmatprep.subr.mxu0 0.0
        %5382 = vmatpush1.msra.mxu0 %v5265
        %5383 = vmatprep.subr.mxu0 0.0
        %5384 = vmatpush1.msra.mxu0 %v5266
        %5385 = vmatprep.subr.mxu0 0.0
        %5386 = vmatpush1.msra.mxu0 %v5267
        %5387 = vmatprep.mubr.f32.mxu0 %v5220
        %5388 = vmatmul.mubr.f32.gmra.mrb[0].mxu0 %v5216
        %v5389 = vpop.f32.mrb[0].mxu0
        %v5390 = vadd.f32 %v5321, %v5389
        %v5391 = vpop.f32.mrb[0].mxu0
        %5392 = vmatprep.mubr.f32.mxu0 %v5221
        %5393 = vmatmul.mubr.f32.gmra.mrb[0].mxu0 %v5217
        %v5394 = vpop.f32.mrb[0].mxu0
        %v5395 = vadd.f32 %v5321, %v5394
        %v5396 = vpop.f32.mrb[0].mxu0
        %5397 = vmatprep.mubr.f32.mxu0 %v5222
        %5398 = vmatmul.mubr.f32.gmra.mrb[0].mxu0 %v5218
        %v5399 = vpop.f32.mrb[0].mxu0
        %v5400 = vadd.f32 %v5321, %v5399
        %v5401 = vpop.f32.mrb[0].mxu0
        %5402 = vmatprep.mubr.f32.mxu0 %v5223
        %5403 = vmatmul.mubr.f32.gmra.mrb[0].mxu0 %v5219
        %v5404 = vpop.f32.mrb[0].mxu0
        %v5405 = vadd.f32 %v5321, %v5404
        %v5406 = vpop.f32.mrb[0].mxu0
        %5407 = vdwg.mxu0
        %5408 = vmatprep.subr.mxu0 0.0
        %5409 = vmatpush1.msra.mxu0 %v5268
        %5410 = vmatprep.subr.mxu0 0.0
        %5411 = vmatpush1.msra.mxu0 %v5269
        %5412 = vmatprep.subr.mxu0 0.0
        %5413 = vmatpush1.msra.mxu0 %v5270
        %5414 = vmatprep.subr.mxu0 0.0
        %5415 = vmatpush1.msra.mxu0 %v5271
        %5416 = vmatprep.subr.mxu0 0.0
        %5417 = vmatpush1.msra.mxu0 %v5272
        %5418 = vmatprep.subr.mxu0 0.0
        %5419 = vmatpush1.msra.mxu0 %v5273
        %5420 = vmatprep.subr.mxu0 0.0
        %5421 = vmatpush1.msra.mxu0 %v5274
        %5422 = vmatprep.subr.mxu0 0.0
        %5423 = vmatpush1.msra.mxu0 %v5275
        %5424 = vmatprep.subr.mxu0 0.0
        %5425 = vmatpush1.msra.mxu0 %v5276
        %5426 = vmatprep.subr.mxu0 0.0
        %5427 = vmatpush1.msra.mxu0 %v5277
        %5428 = vmatprep.subr.mxu0 0.0
        %5429 = vmatpush1.msra.mxu0 %v5278
        %5430 = vmatprep.subr.mxu0 0.0
        %5431 = vmatpush1.msra.mxu0 %v5279
        %5432 = vmatprep.subr.mxu0 0.0
        %5433 = vmatpush1.msra.mxu0 %v5280
        %5434 = vmatprep.subr.mxu0 0.0
        %5435 = vmatpush1.msra.mxu0 %v5281
        %5436 = vmatprep.subr.mxu0 0.0
        %5437 = vmatpush1.msra.mxu0 %v5282
        %5438 = vmatprep.subr.mxu0 0.0
        %5439 = vmatpush1.msra.mxu0 %v5283
        %5440 = vmatprep.subr.mxu0 0.0
        %5441 = vmatpush1.msra.mxu0 %v5284
        %5442 = vmatprep.subr.mxu0 0.0
        %5443 = vmatpush1.msra.mxu0 %v5285
        %5444 = vmatprep.subr.mxu0 0.0
        %5445 = vmatpush1.msra.mxu0 %v5286
        %5446 = vmatprep.subr.mxu0 0.0
        %5447 = vmatpush1.msra.mxu0 %v5287
        %5448 = vmatprep.subr.mxu0 0.0
        %5449 = vmatpush1.msra.mxu0 %v5288
        %5450 = vmatprep.subr.mxu0 0.0
        %5451 = vmatpush1.msra.mxu0 %v5289
        %5452 = vmatprep.subr.mxu0 0.0
        %5453 = vmatpush1.msra.mxu0 %v5290
        %5454 = vmatprep.subr.mxu0 0.0
        %5455 = vmatpush1.msra.mxu0 %v5291
        %5456 = vmatprep.subr.mxu0 0.0
        %5457 = vmatpush1.msra.mxu0 %v5292
        %5458 = vmatprep.subr.mxu0 0.0
        %5459 = vmatpush1.msra.mxu0 %v5293
        %5460 = vmatprep.subr.mxu0 0.0
        %5461 = vmatpush1.msra.mxu0 %v5294
        %5462 = vmatprep.subr.mxu0 0.0
        %5463 = vmatpush1.msra.mxu0 %v5295
        %5464 = vmatprep.subr.mxu0 0.0
        %5465 = vmatpush1.msra.mxu0 %v5296
        %5466 = vmatprep.subr.mxu0 0.0
        %5467 = vmatpush1.msra.mxu0 %v5297
        %5468 = vmatprep.subr.mxu0 0.0
        %5469 = vmatpush1.msra.mxu0 %v5298
        %5470 = vmatprep.subr.mxu0 0.0
        %5471 = vmatpush1.msra.mxu0 %v5299
        %5472 = vmatprep.mubr.f32.mxu0 %v5228
        %5473 = vmatmul.mubr.f32.gmra.mrb[0].mxu0 %v5224
        %v5474 = vpop.f32.mrb[0].mxu0
        %v5475 = vadd.f32 %v5390, %v5474
        %v5476 = vpop.f32.mrb[0].mxu0
        %5477 = vmatprep.mubr.f32.mxu0 %v5229
        %5478 = vmatmul.mubr.f32.gmra.mrb[0].mxu0 %v5225
        %v5479 = vpop.f32.mrb[0].mxu0
        %v5480 = vadd.f32 %v5395, %v5479
        %v5481 = vpop.f32.mrb[0].mxu0
        %5482 = vmatprep.mubr.f32.mxu0 %v5230
        %5483 = vmatmul.mubr.f32.gmra.mrb[0].mxu0 %v5226
        %v5484 = vpop.f32.mrb[0].mxu0
        %v5485 = vadd.f32 %v5400, %v5484
        %v5486 = vpop.f32.mrb[0].mxu0
        %5487 = vmatprep.mubr.f32.mxu0 %v5231
        %5488 = vmatmul.mubr.f32.gmra.mrb[0].mxu0 %v5227
        %v5489 = vpop.f32.mrb[0].mxu0
        %v5490 = vadd.f32 %v5405, %v5489
        %v5491 = vpop.f32.mrb[0].mxu0
        %5492 = vdwg.mxu0
        %5493 = vmatprep.subr.mxu0 0.0
        %5494 = vmatpush1.msra.mxu0 %v5300
        %5495 = vmatprep.subr.mxu0 0.0
        %5496 = vmatpush1.msra.mxu0 %v5301
        %5497 = vmatprep.subr.mxu0 0.0
        %5498 = vmatpush1.msra.mxu0 %v5302
        %5499 = vmatprep.subr.mxu0 0.0
        %5500 = vmatpush1.msra.mxu0 %v5303
        %5501 = vmatprep.subr.mxu0 0.0
        %5502 = vmatpush1.msra.mxu0 %v5304
        %5503 = vmatprep.subr.mxu0 0.0
        %5504 = vmatpush1.msra.mxu0 %v5305
        %5505 = vmatprep.subr.mxu0 0.0
        %5506 = vmatpush1.msra.mxu0 %v5306
        %5507 = vmatprep.subr.mxu0 0.0
        %5508 = vmatpush1.msra.mxu0 %v5307
        %5509 = vmatprep.subr.mxu0 0.0
        %5510 = vmatpush1.msra.mxu0 %v5308
        %5511 = vmatprep.subr.mxu0 0.0
        %5512 = vmatpush1.msra.mxu0 %v5309
        %5513 = vmatprep.subr.mxu0 0.0
        %5514 = vmatpush1.msra.mxu0 %v5310
        %5515 = vmatprep.subr.mxu0 0.0
        %5516 = vmatpush1.msra.mxu0 %v5311
        %5517 = vmatprep.subr.mxu0 0.0
        %5518 = vmatpush1.msra.mxu0 %v5312
        %5519 = vmatprep.subr.mxu0 0.0
        %5520 = vmatpush1.msra.mxu0 %v5313
        %5521 = vmatprep.subr.mxu0 0.0
        %5522 = vmatpush1.msra.mxu0 %v5314
        %5523 = vmatprep.subr.mxu0 0.0
        %5524 = vmatpush1.msra.mxu0 %v5315
        %5525 = vmatprep.subr.mxu0 0.0
        %5526 = vmatpush1.msra.mxu0 0.0
        %5527 = vmatprep.subr.mxu0 0.0
        %5528 = vmatpush1.msra.mxu0 0.0
        %5529 = vmatprep.subr.mxu0 0.0
        %5530 = vmatpush1.msra.mxu0 0.0
        %5531 = vmatprep.subr.mxu0 0.0
        %5532 = vmatpush1.msra.mxu0 0.0
        %5533 = vmatprep.subr.mxu0 0.0
        %5534 = vmatpush1.msra.mxu0 0.0
        %5535 = vmatprep.subr.mxu0 0.0
        %5536 = vmatpush1.msra.mxu0 0.0
        %5537 = vmatprep.subr.mxu0 0.0
        %5538 = vmatpush1.msra.mxu0 0.0
        %5539 = vmatprep.subr.mxu0 0.0
        %5540 = vmatpush1.msra.mxu0 0.0
        %5541 = vmatprep.subr.mxu0 0.0
        %5542 = vmatpush1.msra.mxu0 0.0
        %5543 = vmatprep.subr.mxu0 0.0
        %5544 = vmatpush1.msra.mxu0 0.0
        %5545 = vmatprep.subr.mxu0 0.0
        %5546 = vmatpush1.msra.mxu0 0.0
        %5547 = vmatprep.subr.mxu0 0.0
        %5548 = vmatpush1.msra.mxu0 0.0
        %5549 = vmatprep.subr.mxu0 0.0
        %5550 = vmatpush1.msra.mxu0 0.0
        %5551 = vmatprep.subr.mxu0 0.0
        %5552 = vmatpush1.msra.mxu0 0.0
        %5553 = vmatprep.subr.mxu0 0.0
        %5554 = vmatpush1.msra.mxu0 0.0
        %5555 = vmatprep.subr.mxu0 0.0
        %5556 = vmatpush1.msra.mxu0 0.0
        %5557 = vmatprep.mubr.f32.mxu0 0.0
        %5558 = vmatmul.mubr.f32.gmra.mrb[0].mxu0 %v5232
        %v5559 = vpop.f32.mrb[0].mxu0
        %v5560 = vadd.f32 %v5475, %v5559
        %v5561 = vpop.f32.mrb[0].mxu0
        %5562 = vmatprep.mubr.f32.mxu0 0.0
        %5563 = vmatmul.mubr.f32.gmra.mrb[0].mxu0 %v5233
        %v5564 = vpop.f32.mrb[0].mxu0
        %v5565 = vadd.f32 %v5480, %v5564
        %v5566 = vpop.f32.mrb[0].mxu0
        %5567 = vmatprep.mubr.f32.mxu0 0.0
        %5568 = vmatmul.mubr.f32.gmra.mrb[0].mxu0 %v5234
        %v5569 = vpop.f32.mrb[0].mxu0
        %v5570 = vadd.f32 %v5485, %v5569
        %v5571 = vpop.f32.mrb[0].mxu0
        %5572 = vmatprep.mubr.f32.mxu0 0.0
        %5573 = vmatmul.mubr.f32.gmra.mrb[0].mxu0 %v5235
        %v5574 = vpop.f32.mrb[0].mxu0
        %v5575 = vadd.f32 %v5490, %v5574
        %v5576 = vpop.f32.mrb[0].mxu0
        %5577 = vdwg.mxu0
        %v5578 = vmax.f32 %v5560, 0.0
        %v5579 = vmax.f32 %v5565, 0.0
        %v5580 = vmax.f32 %v5570, 0.0
        %v5581 = vmax.f32 %v5575, 0.0
        %v5582 = vld [vmem:[%s7] sm:$0xff]
        %v5583 = vld [vmem:[%s7 + $0x8] sm:$0xff]
        %v5584 = vld [vmem:[%s7 + $0x10] sm:$0xff]
        %v5585 = vld [vmem:[%s7 + $0x18] sm:$0xff]
        %v5586 = vld [vmem:[%s7 + $0x20] sm:$0xff]
        %v5587 = vld [vmem:[%s7 + $0x28] sm:$0xff]
        %v5588 = vld [vmem:[%s7 + $0x30] sm:$0xff]
        %v5589 = vld [vmem:[%s7 + $0x38] sm:$0xff]
        %v5590 = vld [vmem:[%s7 + $0x40] sm:$0xff]
        %v5591 = vld [vmem:[%s7 + $0x48] sm:$0xff]
        %v5592 = vld [vmem:[%s7 + $0x50] sm:$0xff]
        %v5593 = vld [vmem:[%s7 + $0x58] sm:$0xff]
        %v5594 = vld [vmem:[%s7 + $0x60] sm:$0xff]
        %v5595 = vld [vmem:[%s7 + $0x68] sm:$0xff]
        %v5596 = vld [vmem:[%s7 + $0x70] sm:$0xff]
        %v5597 = vld [vmem:[%s7 + $0x78] sm:$0xff]
        %v5598 = vld [vmem:[%s8] sm:$0x1]
        %v5600 = vlaneseq
        %v5601 = vshrl.u32 %v5600, 7
        %v5602 = vsub.s32 0, %v5601
        %v5603 = vrot.slane %v5598, %v5602
        %5605 = vmatprep.subr.mxu0 0.0
        %5606 = vmatpush1.msra.mxu0 %v5582
        %5607 = vmatprep.subr.mxu0 0.0
        %5608 = vmatpush1.msra.mxu0 %v5583
        %5609 = vmatprep.subr.mxu0 0.0
        %5610 = vmatpush1.msra.mxu0 %v5584
        %5611 = vmatprep.subr.mxu0 0.0
        %5612 = vmatpush1.msra.mxu0 %v5585
        %5613 = vmatprep.subr.mxu0 0.0
        %5614 = vmatpush1.msra.mxu0 %v5586
        %5615 = vmatprep.subr.mxu0 0.0
        %5616 = vmatpush1.msra.mxu0 %v5587
        %5617 = vmatprep.subr.mxu0 0.0
        %5618 = vmatpush1.msra.mxu0 %v5588
        %5619 = vmatprep.subr.mxu0 0.0
        %5620 = vmatpush1.msra.mxu0 %v5589
        %5621 = vmatprep.subr.mxu0 0.0
        %5622 = vmatpush1.msra.mxu0 %v5590
        %5623 = vmatprep.subr.mxu0 0.0
        %5624 = vmatpush1.msra.mxu0 %v5591
        %5625 = vmatprep.subr.mxu0 0.0
        %5626 = vmatpush1.msra.mxu0 %v5592
        %5627 = vmatprep.subr.mxu0 0.0
        %5628 = vmatpush1.msra.mxu0 %v5593
        %5629 = vmatprep.subr.mxu0 0.0
        %5630 = vmatpush1.msra.mxu0 %v5594
        %5631 = vmatprep.subr.mxu0 0.0
        %5632 = vmatpush1.msra.mxu0 %v5595
        %5633 = vmatprep.subr.mxu0 0.0
        %5634 = vmatpush1.msra.mxu0 %v5596
        %5635 = vmatprep.subr.mxu0 0.0
        %5636 = vmatpush1.msra.mxu0 %v5597
        %5637 = vmatprep.subr.mxu0 0.0
        %5638 = vmatpush1.msra.mxu0 0.0
        %5639 = vmatprep.subr.mxu0 0.0
        %5640 = vmatpush1.msra.mxu0 0.0
        %5641 = vmatprep.subr.mxu0 0.0
        %5642 = vmatpush1.msra.mxu0 0.0
        %5643 = vmatprep.subr.mxu0 0.0
        %5644 = vmatpush1.msra.mxu0 0.0
        %5645 = vmatprep.subr.mxu0 0.0
        %5646 = vmatpush1.msra.mxu0 0.0
        %5647 = vmatprep.subr.mxu0 0.0
        %5648 = vmatpush1.msra.mxu0 0.0
        %5649 = vmatprep.subr.mxu0 0.0
        %5650 = vmatpush1.msra.mxu0 0.0
        %5651 = vmatprep.subr.mxu0 0.0
        %5652 = vmatpush1.msra.mxu0 0.0
        %5653 = vmatprep.subr.mxu0 0.0
        %5654 = vmatpush1.msra.mxu0 0.0
        %5655 = vmatprep.subr.mxu0 0.0
        %5656 = vmatpush1.msra.mxu0 0.0
        %5657 = vmatprep.subr.mxu0 0.0
        %5658 = vmatpush1.msra.mxu0 0.0
        %5659 = vmatprep.subr.mxu0 0.0
        %5660 = vmatpush1.msra.mxu0 0.0
        %5661 = vmatprep.subr.mxu0 0.0
        %5662 = vmatpush1.msra.mxu0 0.0
        %5663 = vmatprep.subr.mxu0 0.0
        %5664 = vmatpush1.msra.mxu0 0.0
        %5665 = vmatprep.subr.mxu0 0.0
        %5666 = vmatpush1.msra.mxu0 0.0
        %5667 = vmatprep.subr.mxu0 0.0
        %5668 = vmatpush1.msra.mxu0 0.0
        %5669 = vmatprep.mubr.f32.mxu0 0.0
        %5670 = vmatmul.mubr.f32.gmra.mrb[0].mxu0 %v5578
        %v5671 = vpop.f32.mrb[0].mxu0
        %v5672 = vadd.f32 %v5603, %v5671
        %v5673 = vpop.f32.mrb[0].mxu0
        %5674 = vmatprep.mubr.f32.mxu0 0.0
        %5675 = vmatmul.mubr.f32.gmra.mrb[0].mxu0 %v5579
        %v5676 = vpop.f32.mrb[0].mxu0
        %v5677 = vadd.f32 %v5603, %v5676
        %v5678 = vpop.f32.mrb[0].mxu0
        %5679 = vmatprep.mubr.f32.mxu0 0.0
        %5680 = vmatmul.mubr.f32.gmra.mrb[0].mxu0 %v5580
        %v5681 = vpop.f32.mrb[0].mxu0
        %v5682 = vadd.f32 %v5603, %v5681
        %v5683 = vpop.f32.mrb[0].mxu0
        %5684 = vmatprep.mubr.f32.mxu0 0.0
        %5685 = vmatmul.mubr.f32.gmra.mrb[0].mxu0 %v5581
        %v5686 = vpop.f32.mrb[0].mxu0
        %v5687 = vadd.f32 %v5603, %v5686
        %v5688 = vpop.f32.mrb[0].mxu0
        %5689 = vdwg.mxu0
        %v5690 = vmax.f32 %v5672, 0.0
        %v5691 = vmax.f32 %v5677, 0.0
        %v5692 = vmax.f32 %v5682, 0.0
        %v5693 = vmax.f32 %v5687, 0.0
        %v5694 = vld [vmem:[%s9] sm:$0xff]
        %v5695 = vld [vmem:[%s9 + $0x8] sm:$0xff]
        %v5696 = vld [vmem:[%s9 + $0x10] sm:$0xff]
        %v5697 = vld [vmem:[%s9 + $0x18] sm:$0xff]
        %v5698 = vld [vmem:[%s9 + $0x20] sm:$0xff]
        %v5699 = vld [vmem:[%s9 + $0x28] sm:$0xff]
        %v5700 = vld [vmem:[%s9 + $0x30] sm:$0xff]
        %v5701 = vld [vmem:[%s9 + $0x38] sm:$0xff]
        %v5702 = vld [vmem:[%s9 + $0x40] sm:$0xff]
        %v5703 = vld [vmem:[%s9 + $0x48] sm:$0xff]
        %v5704 = vld [vmem:[%s9 + $0x50] sm:$0xff]
        %v5705 = vld [vmem:[%s9 + $0x58] sm:$0xff]
        %v5706 = vld [vmem:[%s9 + $0x60] sm:$0xff]
        %v5707 = vld [vmem:[%s9 + $0x68] sm:$0xff]
        %v5708 = vld [vmem:[%s9 + $0x70] sm:$0xff]
        %v5709 = vld [vmem:[%s9 + $0x78] sm:$0xff]
        %v5710 = vld [vmem:[%s10] sm:$0x1]
        %v5712 = vlaneseq
        %v5713 = vshrl.u32 %v5712, 7
        %v5714 = vsub.s32 0, %v5713
        %v5715 = vrot.slane %v5710, %v5714
        %5717 = vmatprep.subr.mxu0 0.0
        %5718 = vmatpush1.msra.mxu0 %v5694
        %5719 = vmatprep.subr.mxu0 0.0
        %5720 = vmatpush1.msra.mxu0 %v5695
        %5721 = vmatprep.subr.mxu0 0.0
        %5722 = vmatpush1.msra.mxu0 %v5696
        %5723 = vmatprep.subr.mxu0 0.0
        %5724 = vmatpush1.msra.mxu0 %v5697
        %5725 = vmatprep.subr.mxu0 0.0
        %5726 = vmatpush1.msra.mxu0 %v5698
        %5727 = vmatprep.subr.mxu0 0.0
        %5728 = vmatpush1.msra.mxu0 %v5699
        %5729 = vmatprep.subr.mxu0 0.0
        %5730 = vmatpush1.msra.mxu0 %v5700
        %5731 = vmatprep.subr.mxu0 0.0
        %5732 = vmatpush1.msra.mxu0 %v5701
        %5733 = vmatprep.subr.mxu0 0.0
        %5734 = vmatpush1.msra.mxu0 %v5702
        %5735 = vmatprep.subr.mxu0 0.0
        %5736 = vmatpush1.msra.mxu0 %v5703
        %5737 = vmatprep.subr.mxu0 0.0
        %5738 = vmatpush1.msra.mxu0 %v5704
        %5739 = vmatprep.subr.mxu0 0.0
        %5740 = vmatpush1.msra.mxu0 %v5705
        %5741 = vmatprep.subr.mxu0 0.0
        %5742 = vmatpush1.msra.mxu0 %v5706
        %5743 = vmatprep.subr.mxu0 0.0
        %5744 = vmatpush1.msra.mxu0 %v5707
        %5745 = vmatprep.subr.mxu0 0.0
        %5746 = vmatpush1.msra.mxu0 %v5708
        %5747 = vmatprep.subr.mxu0 0.0
        %5748 = vmatpush1.msra.mxu0 %v5709
        %5749 = vmatprep.subr.mxu0 0.0
        %5750 = vmatpush1.msra.mxu0 0.0
        %5751 = vmatprep.subr.mxu0 0.0
        %5752 = vmatpush1.msra.mxu0 0.0
        %5753 = vmatprep.subr.mxu0 0.0
        %5754 = vmatpush1.msra.mxu0 0.0
        %5755 = vmatprep.subr.mxu0 0.0
        %5756 = vmatpush1.msra.mxu0 0.0
        %5757 = vmatprep.subr.mxu0 0.0
        %5758 = vmatpush1.msra.mxu0 0.0
        %5759 = vmatprep.subr.mxu0 0.0
        %5760 = vmatpush1.msra.mxu0 0.0
        %5761 = vmatprep.subr.mxu0 0.0
        %5762 = vmatpush1.msra.mxu0 0.0
        %5763 = vmatprep.subr.mxu0 0.0
        %5764 = vmatpush1.msra.mxu0 0.0
        %5765 = vmatprep.subr.mxu0 0.0
        %5766 = vmatpush1.msra.mxu0 0.0
        %5767 = vmatprep.subr.mxu0 0.0
        %5768 = vmatpush1.msra.mxu0 0.0
        %5769 = vmatprep.subr.mxu0 0.0
        %5770 = vmatpush1.msra.mxu0 0.0
        %5771 = vmatprep.subr.mxu0 0.0
        %5772 = vmatpush1.msra.mxu0 0.0
        %5773 = vmatprep.subr.mxu0 0.0
        %5774 = vmatpush1.msra.mxu0 0.0
        %5775 = vmatprep.subr.mxu0 0.0
        %5776 = vmatpush1.msra.mxu0 0.0
        %5777 = vmatprep.subr.mxu0 0.0
        %5778 = vmatpush1.msra.mxu0 0.0
        %5779 = vmatprep.subr.mxu0 0.0
        %5780 = vmatpush1.msra.mxu0 0.0
        %5781 = vmatprep.mubr.f32.mxu0 0.0
        %5782 = vmatmul.mubr.f32.gmra.mrb[0].mxu0 %v5690
        %v5783 = vpop.f32.mrb[0].mxu0
        %v5784 = vadd.f32 %v5715, %v5783
        %v5785 = vpop.f32.mrb[0].mxu0
        %5786 = vmatprep.mubr.f32.mxu0 0.0
        %5787 = vmatmul.mubr.f32.gmra.mrb[0].mxu0 %v5691
        %v5788 = vpop.f32.mrb[0].mxu0
        %v5789 = vadd.f32 %v5715, %v5788
        %v5790 = vpop.f32.mrb[0].mxu0
        %5791 = vmatprep.mubr.f32.mxu0 0.0
        %5792 = vmatmul.mubr.f32.gmra.mrb[0].mxu0 %v5692
        %v5793 = vpop.f32.mrb[0].mxu0
        %v5794 = vadd.f32 %v5715, %v5793
        %v5795 = vpop.f32.mrb[0].mxu0
        %5796 = vmatprep.mubr.f32.mxu0 0.0
        %5797 = vmatmul.mubr.f32.gmra.mrb[0].mxu0 %v5693
        %v5798 = vpop.f32.mrb[0].mxu0
        %v5799 = vadd.f32 %v5715, %v5798
        %v5800 = vpop.f32.mrb[0].mxu0
        %5801 = vdwg.mxu0
        %5802 = vst [vmem:[%s937] sm:$0xff] %v5784
        %5803 = vst [vmem:[%s937 + $0x8] sm:$0xff] %v5789
        %5804 = vst [vmem:[%s937 + $0x10] sm:$0xff] %v5794
        %5805 = vst [vmem:[%s937 + $0x18] sm:$0xff] %v5799
        %s5806 = smul.u32 4, %s22
        %p5807 = scmp.lt.s32.totalorder %s5806, 7
        %s5808 = scalar_select %p5807, %s5806, 7
        %s5809 = smul.addr %s5808, 8
        %s5810 = scalar_lea.vmem %s11, %s5809
        // Predicated region
        $region106: #{convnet_forward.1} parent=100 // pred_check
          %p5811 = pneg %p276
        $region107: #{convnet_forward.1} parent=100 // pred_check_branch
          %5813 = sbr.rel (%p5811) target = $region109
        $region108: #{convnet_forward.1} parent=100 // pred_region
          %s5814 = smul.u32 4, %s22
        $region109: #{convnet_forward.1} parent=100 // pred_fallthru
          _
      $region101: #{convnet_forward.1} parent=5 // pred_fallthru
        _
      %p5815 = scmp.le.s32.totalorder 2, %s17
      // Predicated region
      $region110: #{convnet_forward.1} parent=5 // pred_check
        %p5816 = pneg %p5815
      $region111: #{convnet_forward.1} parent=5 // pred_check_branch
        %5818 = sbr.rel (%p5816) target = $region113
      $region112: #{convnet_forward.1} parent=5 // pred_region
        %s5819 = ssub.s32 %s17, 2
        // Predicated region
        $region114: #{convnet_forward.1} parent=112 // pred_check
          %p5820 = pneg %p282
        $region115: #{convnet_forward.1} parent=112 // pred_check_branch
          %5822 = sbr.rel (%p5820) target = $region117
        $region116: #{convnet_forward.1} parent=112 // pred_region
          %s5823 = smul.u32 4, %s23
          %p5824 = scmp.lt.s32.totalorder %s5823, 7
          %s5825 = scalar_select %p5824, %s5823, 7
          %s5826 = smul.addr %s5825, 8
          %s5827 = scalar_lea.vmem %s11, %s5826
        $region117: #{convnet_forward.1} parent=112 // pred_fallthru
          _
      $region113: #{convnet_forward.1} parent=5 // pred_fallthru
        _
    $region6: #{convnet_forward.1} parent=1 // loop_footer
      %s21 = sadd.s32 1, %s17
    $region7: #{convnet_forward.1} parent=1 // loop_footer_branch
      %16 = sbr.rel target = $region3
    $region8: #{convnet_forward.1} parent=1 // loop_exit
      _

</llo_original>
